<compile_context>
chip_gen: v7x
topology: tpu7x:2x2x1
jax: 0.10.0
libtpu: 0.0.40
codegen_flags: <defaults>
</compile_context>

<pallas_src>
import numpy as np
import jax
import jax.numpy as jnp
from jax.experimental import pallas as pl
from jax.experimental.pallas import tpu as pltpu

CPAD = 8  # all channel dims padded to 8 (one sublane group)


# ----------------------------------------------------------------------------
# Host-side (numpy) geometry helpers — built once at parameter setup
# ----------------------------------------------------------------------------
def _sizes(h, w):
    sizes = [(h, w)]
    for _ in range(4):
        hh, ww = sizes[-1]
        sizes.append(((hh - 1) // 2 + 1, (ww - 1) // 2 + 1))
    return sizes


def _valid_rows(h, w):
    wp = w + 2
    return np.asarray([(y + 1) * wp + (x + 1) for y in range(h) for x in range(w)],
                      dtype=np.int64)


def _interp_1d(n_in, n_out):
    m = np.zeros((n_out, n_in), dtype=np.float32)
    for i in range(n_out):
        if n_in == 1:
            m[i, 0] = 1.0
            continue
        src = i * (n_in - 1) / (n_out - 1)
        i0 = int(np.floor(src))
        i1 = min(i0 + 1, n_in - 1)
        f = src - i0
        m[i, i0] += 1.0 - f
        m[i, i1] += f
    return m


def _stride2_selT(hw):
    """S so that  act[C, R_in] @ S = stride-2 canonical output [C, R_out]."""
    h, w = hw
    ho, wo = (h - 1) // 2 + 1, (w - 1) // 2 + 1
    wpi, wpo = w + 2, wo + 2
    s = np.zeros(((h + 2) * wpi, (ho + 2) * wpo), dtype=np.float32)
    for yo in range(ho):
        for xo in range(wo):
            s[(2 * yo + 1) * wpi + (2 * xo + 1), (yo + 1) * wpo + (xo + 1)] = 1.0
    return s


def _upsample2xT(hw):
    """U so that act[C, R_small] @ U = bilinear(align_corners=True) 2x canonical."""
    h, w = hw
    ho, wo = 2 * h, 2 * w
    dense = np.einsum("ij,kl->ikjl", _interp_1d(h, ho), _interp_1d(w, wo))
    dense = dense.reshape(ho * wo, h * w)
    u = np.zeros(((h + 2) * (w + 2), (ho + 2) * (wo + 2)), dtype=np.float32)
    u[np.ix_(_valid_rows(h, w), _valid_rows(ho, wo))] = dense.T
    return u


# ----------------------------------------------------------------------------
# One-time parameter preparation (weights -> packed fused-K matmul form)
# ----------------------------------------------------------------------------
def prepare_unet(params, enc_nf, dec_nf, H, W, src_feats=1):
    sizes = _sizes(H, W)
    for l in range(4):  # upsample-by-2 must reproduce the skip size (as in torch)
        assert sizes[l][0] == 2 * sizes[l + 1][0] and sizes[l][1] == 2 * sizes[l + 1][1]
    wps = [w + 2 for (_, w) in sizes]
    rs = [(h + 2) * (w + 2) for (h, w) in sizes]
    margs = [wp + 1 for wp in wps]

    conv_defs = [
        ("conv_1",   [2 * src_feats]),
        ("conv_2",   [enc_nf[0]]),
        ("conv_3",   [enc_nf[1]]),
        ("conv_4",   [enc_nf[2]]),
        ("deconv_4", [enc_nf[3]]),
        ("deconv_3", [dec_nf[0], enc_nf[2]]),   # torch.cat((deconv, skip), 1)
        ("deconv_2", [dec_nf[1], enc_nf[1]]),
        ("deconv_1", [dec_nf[2], enc_nf[0]]),
        ("conv_6",   [dec_nf[4]]),
        ("conv_7",   [dec_nf[5]]),
    ]

    wcols, koffs = [], []
    biases = np.zeros((CPAD, len(conv_defs)), np.float32)
    off = 0
    for j, (name, blocks) in enumerate(conv_defs):
        wt, bt = params[name]
        wt = np.asarray(wt, np.float32)            # (Cout, Cin_total, 3, 3)
        bt = np.asarray(bt, np.float32)
        cout = wt.shape[0]
        biases[:cout, j] = bt
        koffs.append(off)
        cstart = 0
        for n in blocks:                           # one 72-wide K block per source
            for ky in range(3):
                for kx in range(3):
                    blk = np.zeros((CPAD, CPAD), np.float32)
                    blk[:cout, :n] = wt[:, cstart:cstart + n, ky, kx]
                    wcols.append(blk)
            cstart += n
            off += 9 * CPAD
    wpack = np.concatenate(wcols, axis=1)          # [8, 72 * total_blocks]

    mask0 = np.zeros((1, rs[0]), np.float32)
    mask0[0, _valid_rows(H, W)] = 1.0

    return dict(
        wpack=jnp.asarray(wpack, jnp.bfloat16),
        bpack=jnp.asarray(biases, jnp.float32),
        mask0=jnp.asarray(mask0, jnp.float32),
        selT=[jnp.asarray(_stride2_selT(sizes[l]), jnp.bfloat16) for l in range(4)],
        upsT=[jnp.asarray(_upsample2xT(sizes[l]), jnp.bfloat16) for l in (4, 3, 2, 1)],
        koffs=koffs,
        sizes=sizes, wps=wps, rs=rs, margs=margs,
        enc_nf=list(enc_nf), dec_nf=list(dec_nf))


# ----------------------------------------------------------------------------
# Fused forward pass: one pallas_call, grid over batch
# ----------------------------------------------------------------------------
def unet_core_forward(prep, src, tgt):
    sizes, wps, rs, margs = prep["sizes"], prep["wps"], prep["rs"], prep["margs"]
    dec = prep["dec_nf"]
    koffs = prep["koffs"]
    B = src.shape[0]
    H, W = sizes[0]
    Hp, Wp = H + 2, W + 2
    R0 = rs[0]
    R0PAD = ((R0 + 127) // 128) * 128              # lane-dense output width
    L = [2 * margs[l] + rs[l] for l in range(5)]   # slab widths (canonical + margins)
    Lc6 = 2 * margs[0] + R0PAD                     # conv_6 slab read with length R0PAD

    def kernel(x_ref, wpk, bpk, msk, st0, st1, st2, st3, ut3, ut2, ut1, ut0,
               out_ref, skip1, skip2, skip3, c4b, up3, up2, up1, up0, c6):
        # Zero all scratch once per step: margins/halos must be exact zeros.
        for s in (skip1, skip2, skip3, c4b, up3, up2, up1, up0, c6):
            s[...] = jnp.zeros_like(s)

        xv = x_ref[0]                               # [8, L0] bf16, halos already zero

        def conv(sources, j, lvl, length=None):
            """3x3 conv + bias + ReLU over the canonical halo grid at level lvl.
            sources: list of (slab, margin); multiple sources == fused channel
            concat.  One MXU dot with K = 72 * len(sources)."""
            wp = wps[lvl]
            r = rs[lvl] if length is None else length
            offs = [di * wp + dj for di in (-1, 0, 1) for dj in (-1, 0, 1)]
            pieces = []
            for slab, m in sources:
                for o in offs:
                    a = m + o
                    pieces.append(slab[:, a:a + r])
            pat = jnp.concatenate(pieces, axis=0) if len(pieces) > 1 else pieces[0]
            k = 9 * CPAD * len(sources)
            wmat = wpk[:, koffs[j]:koffs[j] + k]     # [8, K] bf16
            acc = jnp.dot(wmat, pat, preferred_element_type=jnp.float32)
            return jnp.maximum(acc + bpk[:, j:j + 1], 0.0)   # [8, r] f32

        def resample(val, mat_ref):                  # one-hot select / bilinear 2x
            return jnp.dot(val.astype(jnp.bfloat16), mat_ref[...],
                           preferred_element_type=jnp.float32)

        def park(dst, lvl, val):
            dst[:, margs[lvl]:margs[lvl] + rs[lvl]] = val.astype(dst.dtype)

        # ---- encoder: stride-2 convs (full-grid fused dot, then one-hot select)
        park(skip1, 1, resample(conv([(xv, margs[0])], 0, 0), st0))
        park(skip2, 2, resample(conv([(skip1, margs[1])], 1, 1), st1))
        park(skip3, 3, resample(conv([(skip2, margs[2])], 2, 2), st2))
        park(c4b,  4, resample(conv([(skip3, margs[3])], 3, 3), st3))

        # ---- decoder: stride-1 convs, fused skip-concat, bilinear 2x upsample
        park(up3, 3, resample(conv([(c4b, margs[4])], 4, 4), ut3))
        park(up2, 2, resample(conv([(up3, margs[3]), (skip3, margs[3])], 5, 3), ut2))
        park(up1, 1, resample(conv([(up2, margs[2]), (skip2, margs[2])], 6, 2), ut1))
        park(up0, 0, resample(conv([(up1, margs[1]), (skip1, margs[1])], 7, 1), ut0))

        # ---- full_size head
        y6 = conv([(up0, margs[0])], 8, 0)
        y6 = jnp.where(msk[...] > 0.5, y6, 0.0)     # c6 is re-read as a conv source
        park(c6, 0, y6)
        out_ref[0] = conv([(c6, margs[0])], 9, 0, length=R0PAD).astype(out_ref.dtype)

    consts = ([prep["wpack"], prep["bpack"], prep["mask0"]]
              + list(prep["selT"]) + list(prep["upsT"]))

    def cspec(a):
        return pl.BlockSpec(tuple(int(d) for d in a.shape), lambda i: (0, 0))

    in_specs = ([pl.BlockSpec((1, CPAD, L[0]), lambda i: (i, 0, 0))]
                + [cspec(a) for a in consts])
    out_specs = pl.BlockSpec((1, CPAD, R0PAD), lambda i: (i, 0, 0))

    bf = jnp.bfloat16
    scratch_shapes = [
        pltpu.VMEM((CPAD, L[1]), bf),   # skip1 (conv_1 output)
        pltpu.VMEM((CPAD, L[2]), bf),   # skip2 (conv_2 output)
        pltpu.VMEM((CPAD, L[3]), bf),   # skip3 (conv_3 output)
        pltpu.VMEM((CPAD, L[4]), bf),   # conv_4 output
        pltpu.VMEM((CPAD, L[3]), bf),   # up(deconv_4)
        pltpu.VMEM((CPAD, L[2]), bf),   # up(deconv_3)
        pltpu.VMEM((CPAD, L[1]), bf),   # up(deconv_2)
        pltpu.VMEM((CPAD, L[0]), bf),   # up(deconv_1)
        pltpu.VMEM((CPAD, Lc6), bf),    # conv_6 output
    ]

    # Build the lane-major, channel-padded, halo-padded input slab in the wrapper.
    cin = 2 * src.shape[-1]
    x = jnp.concatenate([src, tgt], axis=-1).astype(jnp.float32)     # NHWC
    x = jnp.transpose(x, (0, 3, 1, 2))                               # [B, cin, H, W]
    x = jnp.pad(x, ((0, 0), (0, CPAD - cin), (1, 1), (1, 1)))        # halo + ch pad
    x = x.reshape(B, CPAD, R0)
    xin = jnp.pad(x, ((0, 0), (0, 0), (margs[0], margs[0]))).astype(jnp.bfloat16)

    out2d = pl.pallas_call(
        kernel,
        out_shape=jax.ShapeDtypeStruct((B, CPAD, R0PAD), jnp.float32),
        grid=(B,),
        in_specs=in_specs,
        out_specs=out_specs,
        scratch_shapes=scratch_shapes,
        compiler_params=pltpu.CompilerParams(
            dimension_semantics=("parallel",),
            vmem_limit_bytes=32 * 1024 * 1024),
    )(xin, *consts)

    out = out2d[:, :dec[6], :R0].reshape(B, dec[6], Hp, Wp)[:, :, 1:1 + H, 1:1 + W]
    return jnp.transpose(out, (0, 2, 3, 1))        # NHWC


# ----------------------------------------------------------------------------
def make_conv_params(key, cin, cout):
    kw, kb = jax.random.split(key)
    w = jax.random.normal(kw, (cout, cin, 3, 3), jnp.float32) * 0.1
    b = jax.random.normal(kb, (cout,), jnp.float32) * 0.1
    return (w, b)


if __name__ == "__main__":
    # Config: ndims=2, src_feats=1, full_size=True, len(dec_nf)==7
    enc_nf = [4, 8, 8, 8]
    dec_nf = [8, 8, 8, 8, 8, 4, 4]
    src_feats = 1
    B, H, W = 2, 16, 16

    key = jax.random.PRNGKey(0)
    keys = jax.random.split(key, 12)

    params = {
        "conv_1":   make_conv_params(keys[0], src_feats * 2, enc_nf[0]),
        "conv_2":   make_conv_params(keys[1], enc_nf[0], enc_nf[1]),
        "conv_3":   make_conv_params(keys[2], enc_nf[1], enc_nf[2]),
        "conv_4":   make_conv_params(keys[3], enc_nf[2], enc_nf[3]),
        "deconv_4": make_conv_params(keys[4], enc_nf[3], dec_nf[0]),
        "deconv_3": make_conv_params(keys[5], dec_nf[0] + enc_nf[2], dec_nf[1]),
        "deconv_2": make_conv_params(keys[6], dec_nf[1] + enc_nf[1], dec_nf[2]),
        "deconv_1": make_conv_params(keys[7], dec_nf[2] + enc_nf[0], dec_nf[3]),
        "conv_6":   make_conv_params(keys[8], dec_nf[4], dec_nf[5]),
        "conv_7":   make_conv_params(keys[9], dec_nf[5], dec_nf[6]),
    }

    prep = prepare_unet(params, enc_nf, dec_nf, H, W, src_feats=src_feats)

    # NHWC inputs (equivalent to torch NCHW [2, 1, 16, 16] src / tgt)
    src = jax.random.normal(keys[10], (B, H, W, src_feats), jnp.float32)
    tgt = jax.random.normal(keys[11], (B, H, W, src_feats), jnp.float32)

    fwd = jax.jit(lambda s, t: unet_core_forward(prep, s, t))
    out = jax.block_until_ready(fwd(src, tgt))

    assert out.shape == (B, H, W, dec_nf[6]), out.shape
    assert bool(jnp.all(jnp.isfinite(out)))
    print("KERNEL_OK")
</pallas_src>

<mosaic_0001>
module attributes {stable_mosaic.version = 11 : i64} {
  func.func @kernel(%arg0: i32, %arg1: memref<1x8x362xbf16, #tpu.memory_space<vmem>>, %arg2: memref<8x936xbf16, #tpu.memory_space<vmem>>, %arg3: memref<8x10xf32, #tpu.memory_space<vmem>>, %arg4: memref<1x324xf32, #tpu.memory_space<vmem>>, %arg5: memref<324x100xbf16, #tpu.memory_space<vmem>>, %arg6: memref<100x36xbf16, #tpu.memory_space<vmem>>, %arg7: memref<36x16xbf16, #tpu.memory_space<vmem>>, %arg8: memref<16x9xbf16, #tpu.memory_space<vmem>>, %arg9: memref<9x16xbf16, #tpu.memory_space<vmem>>, %arg10: memref<16x36xbf16, #tpu.memory_space<vmem>>, %arg11: memref<36x100xbf16, #tpu.memory_space<vmem>>, %arg12: memref<100x324xbf16, #tpu.memory_space<vmem>>, %arg13: memref<1x8x384xf32, #tpu.memory_space<vmem>>, %arg14: memref<8x122xbf16, #tpu.memory_space<vmem>>, %arg15: memref<8x50xbf16, #tpu.memory_space<vmem>>, %arg16: memref<8x26xbf16, #tpu.memory_space<vmem>>, %arg17: memref<8x17xbf16, #tpu.memory_space<vmem>>, %arg18: memref<8x26xbf16, #tpu.memory_space<vmem>>, %arg19: memref<8x50xbf16, #tpu.memory_space<vmem>>, %arg20: memref<8x122xbf16, #tpu.memory_space<vmem>>, %arg21: memref<8x362xbf16, #tpu.memory_space<vmem>>, %arg22: memref<8x422xbf16, #tpu.memory_space<vmem>>) attributes {dimension_semantics = [#tpu.dimension_semantics<parallel>], iteration_bounds = array<i64: 2>, scalar_prefetch = 0 : i64, scratch_operands = 9 : i64, tpu.core_type = #tpu.core_type<tc>, window_params = [{transform_indices = @transform_0, window_bounds = array<i64: 1, 8, 362>}, {pipeline_mode = #tpu.pipeline_mode<synchronous>, transform_indices = @transform_1, window_bounds = array<i64: 8, 936>}, {pipeline_mode = #tpu.pipeline_mode<synchronous>, transform_indices = @transform_2, window_bounds = array<i64: 8, 10>}, {pipeline_mode = #tpu.pipeline_mode<synchronous>, transform_indices = @transform_3, window_bounds = array<i64: 1, 324>}, {pipeline_mode = #tpu.pipeline_mode<synchronous>, transform_indices = @transform_4, window_bounds = array<i64: 324, 100>}, {pipeline_mode = #tpu.pipeline_mode<synchronous>, transform_indices = @transform_5, window_bounds = array<i64: 100, 36>}, {pipeline_mode = #tpu.pipeline_mode<synchronous>, transform_indices = @transform_6, window_bounds = array<i64: 36, 16>}, {pipeline_mode = #tpu.pipeline_mode<synchronous>, transform_indices = @transform_7, window_bounds = array<i64: 16, 9>}, {pipeline_mode = #tpu.pipeline_mode<synchronous>, transform_indices = @transform_8, window_bounds = array<i64: 9, 16>}, {pipeline_mode = #tpu.pipeline_mode<synchronous>, transform_indices = @transform_9, window_bounds = array<i64: 16, 36>}, {pipeline_mode = #tpu.pipeline_mode<synchronous>, transform_indices = @transform_10, window_bounds = array<i64: 36, 100>}, {pipeline_mode = #tpu.pipeline_mode<synchronous>, transform_indices = @transform_11, window_bounds = array<i64: 100, 324>}, {transform_indices = @transform_12, window_bounds = array<i64: 1, 8, 384>}]} {
    %cst = arith.constant 0.000000e+00 : bf16
    %0 = vector.broadcast %cst : bf16 to vector<8x122xbf16>
    %c0 = arith.constant 0 : index
    %c0_0 = arith.constant 0 : index
    %1 = vector.load %arg14[%c0, %c0_0] : memref<8x122xbf16, #tpu.memory_space<vmem>>, vector<8x122xbf16>
    tpu.vector_store %arg14[%c0, %c0_0], %0 {strides = array<i32>} : memref<8x122xbf16, #tpu.memory_space<vmem>>, vector<8x122xbf16>,
    %cst_1 = arith.constant 0.000000e+00 : bf16
    %2 = vector.broadcast %cst_1 : bf16 to vector<8x50xbf16>
    %c0_2 = arith.constant 0 : index
    %c0_3 = arith.constant 0 : index
    %3 = vector.load %arg15[%c0_2, %c0_3] : memref<8x50xbf16, #tpu.memory_space<vmem>>, vector<8x50xbf16>
    tpu.vector_store %arg15[%c0_2, %c0_3], %2 {strides = array<i32>} : memref<8x50xbf16, #tpu.memory_space<vmem>>, vector<8x50xbf16>,
    %cst_4 = arith.constant 0.000000e+00 : bf16
    %4 = vector.broadcast %cst_4 : bf16 to vector<8x26xbf16>
    %c0_5 = arith.constant 0 : index
    %c0_6 = arith.constant 0 : index
    %5 = vector.load %arg16[%c0_5, %c0_6] : memref<8x26xbf16, #tpu.memory_space<vmem>>, vector<8x26xbf16>
    tpu.vector_store %arg16[%c0_5, %c0_6], %4 {strides = array<i32>} : memref<8x26xbf16, #tpu.memory_space<vmem>>, vector<8x26xbf16>,
    %cst_7 = arith.constant 0.000000e+00 : bf16
    %6 = vector.broadcast %cst_7 : bf16 to vector<8x17xbf16>
    %c0_8 = arith.constant 0 : index
    %c0_9 = arith.constant 0 : index
    %7 = vector.load %arg17[%c0_8, %c0_9] : memref<8x17xbf16, #tpu.memory_space<vmem>>, vector<8x17xbf16>
    tpu.vector_store %arg17[%c0_8, %c0_9], %6 {strides = array<i32>} : memref<8x17xbf16, #tpu.memory_space<vmem>>, vector<8x17xbf16>,
    %cst_10 = arith.constant 0.000000e+00 : bf16
    %8 = vector.broadcast %cst_10 : bf16 to vector<8x26xbf16>
    %c0_11 = arith.constant 0 : index
    %c0_12 = arith.constant 0 : index
    %9 = vector.load %arg18[%c0_11, %c0_12] : memref<8x26xbf16, #tpu.memory_space<vmem>>, vector<8x26xbf16>
    tpu.vector_store %arg18[%c0_11, %c0_12], %8 {strides = array<i32>} : memref<8x26xbf16, #tpu.memory_space<vmem>>, vector<8x26xbf16>,
    %cst_13 = arith.constant 0.000000e+00 : bf16
    %10 = vector.broadcast %cst_13 : bf16 to vector<8x50xbf16>
    %c0_14 = arith.constant 0 : index
    %c0_15 = arith.constant 0 : index
    %11 = vector.load %arg19[%c0_14, %c0_15] : memref<8x50xbf16, #tpu.memory_space<vmem>>, vector<8x50xbf16>
    tpu.vector_store %arg19[%c0_14, %c0_15], %10 {strides = array<i32>} : memref<8x50xbf16, #tpu.memory_space<vmem>>, vector<8x50xbf16>,
    %cst_16 = arith.constant 0.000000e+00 : bf16
    %12 = vector.broadcast %cst_16 : bf16 to vector<8x122xbf16>
    %c0_17 = arith.constant 0 : index
    %c0_18 = arith.constant 0 : index
    %13 = vector.load %arg20[%c0_17, %c0_18] : memref<8x122xbf16, #tpu.memory_space<vmem>>, vector<8x122xbf16>
    tpu.vector_store %arg20[%c0_17, %c0_18], %12 {strides = array<i32>} : memref<8x122xbf16, #tpu.memory_space<vmem>>, vector<8x122xbf16>,
    %cst_19 = arith.constant 0.000000e+00 : bf16
    %14 = vector.broadcast %cst_19 : bf16 to vector<8x362xbf16>
    %c0_20 = arith.constant 0 : index
    %c0_21 = arith.constant 0 : index
    %15 = vector.load %arg21[%c0_20, %c0_21] : memref<8x362xbf16, #tpu.memory_space<vmem>>, vector<8x362xbf16>
    tpu.vector_store %arg21[%c0_20, %c0_21], %14 {strides = array<i32>} : memref<8x362xbf16, #tpu.memory_space<vmem>>, vector<8x362xbf16>,
    %cst_22 = arith.constant 0.000000e+00 : bf16
    %16 = vector.broadcast %cst_22 : bf16 to vector<8x422xbf16>
    %c0_23 = arith.constant 0 : index
    %c0_24 = arith.constant 0 : index
    %17 = vector.load %arg22[%c0_23, %c0_24] : memref<8x422xbf16, #tpu.memory_space<vmem>>, vector<8x422xbf16>
    tpu.vector_store %arg22[%c0_23, %c0_24], %16 {strides = array<i32>} : memref<8x422xbf16, #tpu.memory_space<vmem>>, vector<8x422xbf16>,
    %c0_25 = arith.constant 0 : index
    %c0_26 = arith.constant 0 : index
    %c0_27 = arith.constant 0 : index
    %18 = vector.load %arg1[%c0_25, %c0_26, %c0_27] : memref<1x8x362xbf16, #tpu.memory_space<vmem>>, vector<1x8x362xbf16>
    %19 = vector.shape_cast %18 : vector<1x8x362xbf16> to vector<8x362xbf16>
    %20 = vector.extract_strided_slice %19 {offsets = [0, 0], sizes = [8, 324], strides = [1, 1]} : vector<8x362xbf16> to vector<8x324xbf16>
    %21 = vector.extract_strided_slice %19 {offsets = [0, 1], sizes = [8, 324], strides = [1, 1]} : vector<8x362xbf16> to vector<8x324xbf16>
    %22 = vector.extract_strided_slice %19 {offsets = [0, 2], sizes = [8, 324], strides = [1, 1]} : vector<8x362xbf16> to vector<8x324xbf16>
    %23 = vector.extract_strided_slice %19 {offsets = [0, 18], sizes = [8, 324], strides = [1, 1]} : vector<8x362xbf16> to vector<8x324xbf16>
    %24 = vector.extract_strided_slice %19 {offsets = [0, 19], sizes = [8, 324], strides = [1, 1]} : vector<8x362xbf16> to vector<8x324xbf16>
    %25 = vector.extract_strided_slice %19 {offsets = [0, 20], sizes = [8, 324], strides = [1, 1]} : vector<8x362xbf16> to vector<8x324xbf16>
    %26 = vector.extract_strided_slice %19 {offsets = [0, 36], sizes = [8, 324], strides = [1, 1]} : vector<8x362xbf16> to vector<8x324xbf16>
    %27 = vector.extract_strided_slice %19 {offsets = [0, 37], sizes = [8, 324], strides = [1, 1]} : vector<8x362xbf16> to vector<8x324xbf16>
    %28 = vector.extract_strided_slice %19 {offsets = [0, 38], sizes = [8, 324], strides = [1, 1]} : vector<8x362xbf16> to vector<8x324xbf16>
    %29 = tpu.concatenate %20, %21, %22, %23, %24, %25, %26, %27, %28 in 0 : vector<8x324xbf16>, vector<8x324xbf16>, vector<8x324xbf16>, vector<8x324xbf16>, vector<8x324xbf16>, vector<8x324xbf16>, vector<8x324xbf16>, vector<8x324xbf16>, vector<8x324xbf16> -> vector<72x324xbf16>
    %c0_28 = arith.constant 0 : index
    %c0_29 = arith.constant 0 : index
    %30 = vector.load %arg2[%c0_28, %c0_29] : memref<8x936xbf16, #tpu.memory_space<vmem>>, vector<8x72xbf16>
    %cst_30 = arith.constant dense<0.000000e+00> : vector<8x324xf32>
    %31 = tpu.matmul %30, %29, %cst_30 {dimension_numbers = #tpu.dot_dimension_numbers<[1], [0], [0], [1], [0, 0, 1, 1], [], []>} : vector<8x72xbf16>, vector<72x324xbf16>, vector<8x324xf32> -> vector<8x324xf32>
    %c0_31 = arith.constant 0 : index
    %c0_32 = arith.constant 0 : index
    %32 = vector.load %arg3[%c0_31, %c0_32] : memref<8x10xf32, #tpu.memory_space<vmem>>, vector<8x1xf32>
    %33 = vector.broadcast %32 : vector<8x1xf32> to vector<8x324xf32>
    %34 = arith.addf %31, %33 : vector<8x324xf32>
    %cst_33 = arith.constant 0.000000e+00 : f32
    %35 = vector.broadcast %cst_33 : f32 to vector<8x324xf32>
    %36 = arith.maximumf %34, %35 : vector<8x324xf32>
    %37 = arith.truncf %36 : vector<8x324xf32> to vector<8x324xbf16>
    %c0_34 = arith.constant 0 : index
    %c0_35 = arith.constant 0 : index
    %38 = vector.load %arg5[%c0_34, %c0_35] : memref<324x100xbf16, #tpu.memory_space<vmem>>, vector<324x100xbf16>
    %cst_36 = arith.constant dense<0.000000e+00> : vector<8x100xf32>
    %39 = tpu.matmul %37, %38, %cst_36 {dimension_numbers = #tpu.dot_dimension_numbers<[1], [0], [0], [1], [0, 0, 1, 1], [], []>} : vector<8x324xbf16>, vector<324x100xbf16>, vector<8x100xf32> -> vector<8x100xf32>
    %40 = arith.truncf %39 : vector<8x100xf32> to vector<8x100xbf16>
    %c0_37 = arith.constant 0 : index
    %c11 = arith.constant 11 : index
    %41 = vector.load %arg14[%c0_37, %c11] : memref<8x122xbf16, #tpu.memory_space<vmem>>, vector<8x100xbf16>
    tpu.vector_store %arg14[%c0_37, %c11], %40 {strides = array<i32>} : memref<8x122xbf16, #tpu.memory_space<vmem>>, vector<8x100xbf16>,
    %c0_38 = arith.constant 0 : index
    %c0_39 = arith.constant 0 : index
    %42 = vector.load %arg14[%c0_38, %c0_39] : memref<8x122xbf16, #tpu.memory_space<vmem>>, vector<8x100xbf16>
    %c0_40 = arith.constant 0 : index
    %c1 = arith.constant 1 : index
    %43 = vector.load %arg14[%c0_40, %c1] : memref<8x122xbf16, #tpu.memory_space<vmem>>, vector<8x100xbf16>
    %c0_41 = arith.constant 0 : index
    %c2 = arith.constant 2 : index
    %44 = vector.load %arg14[%c0_41, %c2] : memref<8x122xbf16, #tpu.memory_space<vmem>>, vector<8x100xbf16>
    %c0_42 = arith.constant 0 : index
    %c10 = arith.constant 10 : index
    %45 = vector.load %arg14[%c0_42, %c10] : memref<8x122xbf16, #tpu.memory_space<vmem>>, vector<8x100xbf16>
    %c0_43 = arith.constant 0 : index
    %c11_44 = arith.constant 11 : index
    %46 = vector.load %arg14[%c0_43, %c11_44] : memref<8x122xbf16, #tpu.memory_space<vmem>>, vector<8x100xbf16>
    %c0_45 = arith.constant 0 : index
    %c12 = arith.constant 12 : index
    %47 = vector.load %arg14[%c0_45, %c12] : memref<8x122xbf16, #tpu.memory_space<vmem>>, vector<8x100xbf16>
    %c0_46 = arith.constant 0 : index
    %c20 = arith.constant 20 : index
    %48 = vector.load %arg14[%c0_46, %c20] : memref<8x122xbf16, #tpu.memory_space<vmem>>, vector<8x100xbf16>
    %c0_47 = arith.constant 0 : index
    %c21 = arith.constant 21 : index
    %49 = vector.load %arg14[%c0_47, %c21] : memref<8x122xbf16, #tpu.memory_space<vmem>>, vector<8x100xbf16>
    %c0_48 = arith.constant 0 : index
    %c22 = arith.constant 22 : index
    %50 = vector.load %arg14[%c0_48, %c22] : memref<8x122xbf16, #tpu.memory_space<vmem>>, vector<8x100xbf16>
    %51 = tpu.concatenate %42, %43, %44, %45, %46, %47, %48, %49, %50 in 0 : vector<8x100xbf16>, vector<8x100xbf16>, vector<8x100xbf16>, vector<8x100xbf16>, vector<8x100xbf16>, vector<8x100xbf16>, vector<8x100xbf16>, vector<8x100xbf16>, vector<8x100xbf16> -> vector<72x100xbf16>
    %c0_49 = arith.constant 0 : index
    %c72 = arith.constant 72 : index
    %52 = vector.load %arg2[%c0_49, %c72] : memref<8x936xbf16, #tpu.memory_space<vmem>>, vector<8x72xbf16>
    %cst_50 = arith.constant dense<0.000000e+00> : vector<8x100xf32>
    %53 = tpu.matmul %52, %51, %cst_50 {dimension_numbers = #tpu.dot_dimension_numbers<[1], [0], [0], [1], [0, 0, 1, 1], [], []>} : vector<8x72xbf16>, vector<72x100xbf16>, vector<8x100xf32> -> vector<8x100xf32>
    %c0_51 = arith.constant 0 : index
    %c1_52 = arith.constant 1 : index
    %54 = vector.load %arg3[%c0_51, %c1_52] : memref<8x10xf32, #tpu.memory_space<vmem>>, vector<8x1xf32>
    %55 = vector.broadcast %54 : vector<8x1xf32> to vector<8x100xf32>
    %56 = arith.addf %53, %55 : vector<8x100xf32>
    %cst_53 = arith.constant 0.000000e+00 : f32
    %57 = vector.broadcast %cst_53 : f32 to vector<8x100xf32>
    %58 = arith.maximumf %56, %57 : vector<8x100xf32>
    %59 = arith.truncf %58 : vector<8x100xf32> to vector<8x100xbf16>
    %c0_54 = arith.constant 0 : index
    %c0_55 = arith.constant 0 : index
    %60 = vector.load %arg6[%c0_54, %c0_55] : memref<100x36xbf16, #tpu.memory_space<vmem>>, vector<100x36xbf16>
    %cst_56 = arith.constant dense<0.000000e+00> : vector<8x36xf32>
    %61 = tpu.matmul %59, %60, %cst_56 {dimension_numbers = #tpu.dot_dimension_numbers<[1], [0], [0], [1], [0, 0, 1, 1], [], []>} : vector<8x100xbf16>, vector<100x36xbf16>, vector<8x36xf32> -> vector<8x36xf32>
    %62 = arith.truncf %61 : vector<8x36xf32> to vector<8x36xbf16>
    %c0_57 = arith.constant 0 : index
    %c7 = arith.constant 7 : index
    %63 = vector.load %arg15[%c0_57, %c7] : memref<8x50xbf16, #tpu.memory_space<vmem>>, vector<8x36xbf16>
    tpu.vector_store %arg15[%c0_57, %c7], %62 {strides = array<i32>} : memref<8x50xbf16, #tpu.memory_space<vmem>>, vector<8x36xbf16>,
    %c0_58 = arith.constant 0 : index
    %c0_59 = arith.constant 0 : index
    %64 = vector.load %arg15[%c0_58, %c0_59] : memref<8x50xbf16, #tpu.memory_space<vmem>>, vector<8x36xbf16>
    %c0_60 = arith.constant 0 : index
    %c1_61 = arith.constant 1 : index
    %65 = vector.load %arg15[%c0_60, %c1_61] : memref<8x50xbf16, #tpu.memory_space<vmem>>, vector<8x36xbf16>
    %c0_62 = arith.constant 0 : index
    %c2_63 = arith.constant 2 : index
    %66 = vector.load %arg15[%c0_62, %c2_63] : memref<8x50xbf16, #tpu.memory_space<vmem>>, vector<8x36xbf16>
    %c0_64 = arith.constant 0 : index
    %c6 = arith.constant 6 : index
    %67 = vector.load %arg15[%c0_64, %c6] : memref<8x50xbf16, #tpu.memory_space<vmem>>, vector<8x36xbf16>
    %c0_65 = arith.constant 0 : index
    %c7_66 = arith.constant 7 : index
    %68 = vector.load %arg15[%c0_65, %c7_66] : memref<8x50xbf16, #tpu.memory_space<vmem>>, vector<8x36xbf16>
    %c0_67 = arith.constant 0 : index
    %c8 = arith.constant 8 : index
    %69 = vector.load %arg15[%c0_67, %c8] : memref<8x50xbf16, #tpu.memory_space<vmem>>, vector<8x36xbf16>
    %c0_68 = arith.constant 0 : index
    %c12_69 = arith.constant 12 : index
    %70 = vector.load %arg15[%c0_68, %c12_69] : memref<8x50xbf16, #tpu.memory_space<vmem>>, vector<8x36xbf16>
    %c0_70 = arith.constant 0 : index
    %c13 = arith.constant 13 : index
    %71 = vector.load %arg15[%c0_70, %c13] : memref<8x50xbf16, #tpu.memory_space<vmem>>, vector<8x36xbf16>
    %c0_71 = arith.constant 0 : index
    %c14 = arith.constant 14 : index
    %72 = vector.load %arg15[%c0_71, %c14] : memref<8x50xbf16, #tpu.memory_space<vmem>>, vector<8x36xbf16>
    %73 = tpu.concatenate %64, %65, %66, %67, %68, %69, %70, %71, %72 in 0 : vector<8x36xbf16>, vector<8x36xbf16>, vector<8x36xbf16>, vector<8x36xbf16>, vector<8x36xbf16>, vector<8x36xbf16>, vector<8x36xbf16>, vector<8x36xbf16>, vector<8x36xbf16> -> vector<72x36xbf16>
    %c0_72 = arith.constant 0 : index
    %c144 = arith.constant 144 : index
    %74 = vector.load %arg2[%c0_72, %c144] : memref<8x936xbf16, #tpu.memory_space<vmem>>, vector<8x72xbf16>
    %cst_73 = arith.constant dense<0.000000e+00> : vector<8x36xf32>
    %75 = tpu.matmul %74, %73, %cst_73 {dimension_numbers = #tpu.dot_dimension_numbers<[1], [0], [0], [1], [0, 0, 1, 1], [], []>} : vector<8x72xbf16>, vector<72x36xbf16>, vector<8x36xf32> -> vector<8x36xf32>
    %c0_74 = arith.constant 0 : index
    %c2_75 = arith.constant 2 : index
    %76 = vector.load %arg3[%c0_74, %c2_75] : memref<8x10xf32, #tpu.memory_space<vmem>>, vector<8x1xf32>
    %77 = vector.broadcast %76 : vector<8x1xf32> to vector<8x36xf32>
    %78 = arith.addf %75, %77 : vector<8x36xf32>
    %cst_76 = arith.constant 0.000000e+00 : f32
    %79 = vector.broadcast %cst_76 : f32 to vector<8x36xf32>
    %80 = arith.maximumf %78, %79 : vector<8x36xf32>
    %81 = arith.truncf %80 : vector<8x36xf32> to vector<8x36xbf16>
    %c0_77 = arith.constant 0 : index
    %c0_78 = arith.constant 0 : index
    %82 = vector.load %arg7[%c0_77, %c0_78] : memref<36x16xbf16, #tpu.memory_space<vmem>>, vector<36x16xbf16>
    %cst_79 = arith.constant dense<0.000000e+00> : vector<8x16xf32>
    %83 = tpu.matmul %81, %82, %cst_79 {dimension_numbers = #tpu.dot_dimension_numbers<[1], [0], [0], [1], [0, 0, 1, 1], [], []>} : vector<8x36xbf16>, vector<36x16xbf16>, vector<8x16xf32> -> vector<8x16xf32>
    %84 = arith.truncf %83 : vector<8x16xf32> to vector<8x16xbf16>
    %c0_80 = arith.constant 0 : index
    %c5 = arith.constant 5 : index
    %85 = vector.load %arg16[%c0_80, %c5] : memref<8x26xbf16, #tpu.memory_space<vmem>>, vector<8x16xbf16>
    tpu.vector_store %arg16[%c0_80, %c5], %84 {strides = array<i32>} : memref<8x26xbf16, #tpu.memory_space<vmem>>, vector<8x16xbf16>,
    %c0_81 = arith.constant 0 : index
    %c0_82 = arith.constant 0 : index
    %86 = vector.load %arg16[%c0_81, %c0_82] : memref<8x26xbf16, #tpu.memory_space<vmem>>, vector<8x16xbf16>
    %c0_83 = arith.constant 0 : index
    %c1_84 = arith.constant 1 : index
    %87 = vector.load %arg16[%c0_83, %c1_84] : memref<8x26xbf16, #tpu.memory_space<vmem>>, vector<8x16xbf16>
    %c0_85 = arith.constant 0 : index
    %c2_86 = arith.constant 2 : index
    %88 = vector.load %arg16[%c0_85, %c2_86] : memref<8x26xbf16, #tpu.memory_space<vmem>>, vector<8x16xbf16>
    %c0_87 = arith.constant 0 : index
    %c4 = arith.constant 4 : index
    %89 = vector.load %arg16[%c0_87, %c4] : memref<8x26xbf16, #tpu.memory_space<vmem>>, vector<8x16xbf16>
    %c0_88 = arith.constant 0 : index
    %c5_89 = arith.constant 5 : index
    %90 = vector.load %arg16[%c0_88, %c5_89] : memref<8x26xbf16, #tpu.memory_space<vmem>>, vector<8x16xbf16>
    %c0_90 = arith.constant 0 : index
    %c6_91 = arith.constant 6 : index
    %91 = vector.load %arg16[%c0_90, %c6_91] : memref<8x26xbf16, #tpu.memory_space<vmem>>, vector<8x16xbf16>
    %c0_92 = arith.constant 0 : index
    %c8_93 = arith.constant 8 : index
    %92 = vector.load %arg16[%c0_92, %c8_93] : memref<8x26xbf16, #tpu.memory_space<vmem>>, vector<8x16xbf16>
    %c0_94 = arith.constant 0 : index
    %c9 = arith.constant 9 : index
    %93 = vector.load %arg16[%c0_94, %c9] : memref<8x26xbf16, #tpu.memory_space<vmem>>, vector<8x16xbf16>
    %c0_95 = arith.constant 0 : index
    %c10_96 = arith.constant 10 : index
    %94 = vector.load %arg16[%c0_95, %c10_96] : memref<8x26xbf16, #tpu.memory_space<vmem>>, vector<8x16xbf16>
    %95 = tpu.concatenate %86, %87, %88, %89, %90, %91, %92, %93, %94 in 0 : vector<8x16xbf16>, vector<8x16xbf16>, vector<8x16xbf16>, vector<8x16xbf16>, vector<8x16xbf16>, vector<8x16xbf16>, vector<8x16xbf16>, vector<8x16xbf16>, vector<8x16xbf16> -> vector<72x16xbf16>
    %c0_97 = arith.constant 0 : index
    %c216 = arith.constant 216 : index
    %96 = vector.load %arg2[%c0_97, %c216] : memref<8x936xbf16, #tpu.memory_space<vmem>>, vector<8x72xbf16>
    %cst_98 = arith.constant dense<0.000000e+00> : vector<8x16xf32>
    %97 = tpu.matmul %96, %95, %cst_98 {dimension_numbers = #tpu.dot_dimension_numbers<[1], [0], [0], [1], [0, 0, 1, 1], [], []>} : vector<8x72xbf16>, vector<72x16xbf16>, vector<8x16xf32> -> vector<8x16xf32>
    %c0_99 = arith.constant 0 : index
    %c3 = arith.constant 3 : index
    %98 = vector.load %arg3[%c0_99, %c3] : memref<8x10xf32, #tpu.memory_space<vmem>>, vector<8x1xf32>
    %99 = vector.broadcast %98 : vector<8x1xf32> to vector<8x16xf32>
    %100 = arith.addf %97, %99 : vector<8x16xf32>
    %cst_100 = arith.constant 0.000000e+00 : f32
    %101 = vector.broadcast %cst_100 : f32 to vector<8x16xf32>
    %102 = arith.maximumf %100, %101 : vector<8x16xf32>
    %103 = arith.truncf %102 : vector<8x16xf32> to vector<8x16xbf16>
    %c0_101 = arith.constant 0 : index
    %c0_102 = arith.constant 0 : index
    %104 = vector.load %arg8[%c0_101, %c0_102] : memref<16x9xbf16, #tpu.memory_space<vmem>>, vector<16x9xbf16>
    %cst_103 = arith.constant dense<0.000000e+00> : vector<8x9xf32>
    %105 = tpu.matmul %103, %104, %cst_103 {dimension_numbers = #tpu.dot_dimension_numbers<[1], [0], [0], [1], [0, 0, 1, 1], [], []>} : vector<8x16xbf16>, vector<16x9xbf16>, vector<8x9xf32> -> vector<8x9xf32>
    %106 = arith.truncf %105 : vector<8x9xf32> to vector<8x9xbf16>
    %c0_104 = arith.constant 0 : index
    %c4_105 = arith.constant 4 : index
    %107 = vector.load %arg17[%c0_104, %c4_105] : memref<8x17xbf16, #tpu.memory_space<vmem>>, vector<8x9xbf16>
    tpu.vector_store %arg17[%c0_104, %c4_105], %106 {strides = array<i32>} : memref<8x17xbf16, #tpu.memory_space<vmem>>, vector<8x9xbf16>,
    %c0_106 = arith.constant 0 : index
    %c0_107 = arith.constant 0 : index
    %108 = vector.load %arg17[%c0_106, %c0_107] : memref<8x17xbf16, #tpu.memory_space<vmem>>, vector<8x9xbf16>
    %c0_108 = arith.constant 0 : index
    %c1_109 = arith.constant 1 : index
    %109 = vector.load %arg17[%c0_108, %c1_109] : memref<8x17xbf16, #tpu.memory_space<vmem>>, vector<8x9xbf16>
    %c0_110 = arith.constant 0 : index
    %c2_111 = arith.constant 2 : index
    %110 = vector.load %arg17[%c0_110, %c2_111] : memref<8x17xbf16, #tpu.memory_space<vmem>>, vector<8x9xbf16>
    %c0_112 = arith.constant 0 : index
    %c3_113 = arith.constant 3 : index
    %111 = vector.load %arg17[%c0_112, %c3_113] : memref<8x17xbf16, #tpu.memory_space<vmem>>, vector<8x9xbf16>
    %c0_114 = arith.constant 0 : index
    %c4_115 = arith.constant 4 : index
    %112 = vector.load %arg17[%c0_114, %c4_115] : memref<8x17xbf16, #tpu.memory_space<vmem>>, vector<8x9xbf16>
    %c0_116 = arith.constant 0 : index
    %c5_117 = arith.constant 5 : index
    %113 = vector.load %arg17[%c0_116, %c5_117] : memref<8x17xbf16, #tpu.memory_space<vmem>>, vector<8x9xbf16>
    %c0_118 = arith.constant 0 : index
    %c6_119 = arith.constant 6 : index
    %114 = vector.load %arg17[%c0_118, %c6_119] : memref<8x17xbf16, #tpu.memory_space<vmem>>, vector<8x9xbf16>
    %c0_120 = arith.constant 0 : index
    %c7_121 = arith.constant 7 : index
    %115 = vector.load %arg17[%c0_120, %c7_121] : memref<8x17xbf16, #tpu.memory_space<vmem>>, vector<8x9xbf16>
    %c0_122 = arith.constant 0 : index
    %c8_123 = arith.constant 8 : index
    %116 = vector.load %arg17[%c0_122, %c8_123] : memref<8x17xbf16, #tpu.memory_space<vmem>>, vector<8x9xbf16>
    %117 = tpu.concatenate %108, %109, %110, %111, %112, %113, %114, %115, %116 in 0 : vector<8x9xbf16>, vector<8x9xbf16>, vector<8x9xbf16>, vector<8x9xbf16>, vector<8x9xbf16>, vector<8x9xbf16>, vector<8x9xbf16>, vector<8x9xbf16>, vector<8x9xbf16> -> vector<72x9xbf16>
    %c0_124 = arith.constant 0 : index
    %c288 = arith.constant 288 : index
    %118 = vector.load %arg2[%c0_124, %c288] : memref<8x936xbf16, #tpu.memory_space<vmem>>, vector<8x72xbf16>
    %cst_125 = arith.constant dense<0.000000e+00> : vector<8x9xf32>
    %119 = tpu.matmul %118, %117, %cst_125 {dimension_numbers = #tpu.dot_dimension_numbers<[1], [0], [0], [1], [0, 0, 1, 1], [], []>} : vector<8x72xbf16>, vector<72x9xbf16>, vector<8x9xf32> -> vector<8x9xf32>
    %c0_126 = arith.constant 0 : index
    %c4_127 = arith.constant 4 : index
    %120 = vector.load %arg3[%c0_126, %c4_127] : memref<8x10xf32, #tpu.memory_space<vmem>>, vector<8x1xf32>
    %121 = vector.broadcast %120 : vector<8x1xf32> to vector<8x9xf32>
    %122 = arith.addf %119, %121 : vector<8x9xf32>
    %cst_128 = arith.constant 0.000000e+00 : f32
    %123 = vector.broadcast %cst_128 : f32 to vector<8x9xf32>
    %124 = arith.maximumf %122, %123 : vector<8x9xf32>
    %125 = arith.truncf %124 : vector<8x9xf32> to vector<8x9xbf16>
    %c0_129 = arith.constant 0 : index
    %c0_130 = arith.constant 0 : index
    %126 = vector.load %arg9[%c0_129, %c0_130] : memref<9x16xbf16, #tpu.memory_space<vmem>>, vector<9x16xbf16>
    %cst_131 = arith.constant dense<0.000000e+00> : vector<8x16xf32>
    %127 = tpu.matmul %125, %126, %cst_131 {dimension_numbers = #tpu.dot_dimension_numbers<[1], [0], [0], [1], [0, 0, 1, 1], [], []>} : vector<8x9xbf16>, vector<9x16xbf16>, vector<8x16xf32> -> vector<8x16xf32>
    %128 = arith.truncf %127 : vector<8x16xf32> to vector<8x16xbf16>
    %c0_132 = arith.constant 0 : index
    %c5_133 = arith.constant 5 : index
    %129 = vector.load %arg18[%c0_132, %c5_133] : memref<8x26xbf16, #tpu.memory_space<vmem>>, vector<8x16xbf16>
    tpu.vector_store %arg18[%c0_132, %c5_133], %128 {strides = array<i32>} : memref<8x26xbf16, #tpu.memory_space<vmem>>, vector<8x16xbf16>,
    %c0_134 = arith.constant 0 : index
    %c0_135 = arith.constant 0 : index
    %130 = vector.load %arg18[%c0_134, %c0_135] : memref<8x26xbf16, #tpu.memory_space<vmem>>, vector<8x16xbf16>
    %c0_136 = arith.constant 0 : index
    %c1_137 = arith.constant 1 : index
    %131 = vector.load %arg18[%c0_136, %c1_137] : memref<8x26xbf16, #tpu.memory_space<vmem>>, vector<8x16xbf16>
    %c0_138 = arith.constant 0 : index
    %c2_139 = arith.constant 2 : index
    %132 = vector.load %arg18[%c0_138, %c2_139] : memref<8x26xbf16, #tpu.memory_space<vmem>>, vector<8x16xbf16>
    %c0_140 = arith.constant 0 : index
    %c4_141 = arith.constant 4 : index
    %133 = vector.load %arg18[%c0_140, %c4_141] : memref<8x26xbf16, #tpu.memory_space<vmem>>, vector<8x16xbf16>
    %c0_142 = arith.constant 0 : index
    %c5_143 = arith.constant 5 : index
    %134 = vector.load %arg18[%c0_142, %c5_143] : memref<8x26xbf16, #tpu.memory_space<vmem>>, vector<8x16xbf16>
    %c0_144 = arith.constant 0 : index
    %c6_145 = arith.constant 6 : index
    %135 = vector.load %arg18[%c0_144, %c6_145] : memref<8x26xbf16, #tpu.memory_space<vmem>>, vector<8x16xbf16>
    %c0_146 = arith.constant 0 : index
    %c8_147 = arith.constant 8 : index
    %136 = vector.load %arg18[%c0_146, %c8_147] : memref<8x26xbf16, #tpu.memory_space<vmem>>, vector<8x16xbf16>
    %c0_148 = arith.constant 0 : index
    %c9_149 = arith.constant 9 : index
    %137 = vector.load %arg18[%c0_148, %c9_149] : memref<8x26xbf16, #tpu.memory_space<vmem>>, vector<8x16xbf16>
    %c0_150 = arith.constant 0 : index
    %c10_151 = arith.constant 10 : index
    %138 = vector.load %arg18[%c0_150, %c10_151] : memref<8x26xbf16, #tpu.memory_space<vmem>>, vector<8x16xbf16>
    %c0_152 = arith.constant 0 : index
    %c0_153 = arith.constant 0 : index
    %139 = vector.load %arg16[%c0_152, %c0_153] : memref<8x26xbf16, #tpu.memory_space<vmem>>, vector<8x16xbf16>
    %c0_154 = arith.constant 0 : index
    %c1_155 = arith.constant 1 : index
    %140 = vector.load %arg16[%c0_154, %c1_155] : memref<8x26xbf16, #tpu.memory_space<vmem>>, vector<8x16xbf16>
    %c0_156 = arith.constant 0 : index
    %c2_157 = arith.constant 2 : index
    %141 = vector.load %arg16[%c0_156, %c2_157] : memref<8x26xbf16, #tpu.memory_space<vmem>>, vector<8x16xbf16>
    %c0_158 = arith.constant 0 : index
    %c4_159 = arith.constant 4 : index
    %142 = vector.load %arg16[%c0_158, %c4_159] : memref<8x26xbf16, #tpu.memory_space<vmem>>, vector<8x16xbf16>
    %c0_160 = arith.constant 0 : index
    %c5_161 = arith.constant 5 : index
    %143 = vector.load %arg16[%c0_160, %c5_161] : memref<8x26xbf16, #tpu.memory_space<vmem>>, vector<8x16xbf16>
    %c0_162 = arith.constant 0 : index
    %c6_163 = arith.constant 6 : index
    %144 = vector.load %arg16[%c0_162, %c6_163] : memref<8x26xbf16, #tpu.memory_space<vmem>>, vector<8x16xbf16>
    %c0_164 = arith.constant 0 : index
    %c8_165 = arith.constant 8 : index
    %145 = vector.load %arg16[%c0_164, %c8_165] : memref<8x26xbf16, #tpu.memory_space<vmem>>, vector<8x16xbf16>
    %c0_166 = arith.constant 0 : index
    %c9_167 = arith.constant 9 : index
    %146 = vector.load %arg16[%c0_166, %c9_167] : memref<8x26xbf16, #tpu.memory_space<vmem>>, vector<8x16xbf16>
    %c0_168 = arith.constant 0 : index
    %c10_169 = arith.constant 10 : index
    %147 = vector.load %arg16[%c0_168, %c10_169] : memref<8x26xbf16, #tpu.memory_space<vmem>>, vector<8x16xbf16>
    %148 = tpu.concatenate %130, %131, %132, %133, %134, %135, %136, %137, %138, %139, %140, %141, %142, %143, %144, %145 in 0 : vector<8x16xbf16>, vector<8x16xbf16>, vector<8x16xbf16>, vector<8x16xbf16>, vector<8x16xbf16>, vector<8x16xbf16>, vector<8x16xbf16>, vector<8x16xbf16>, vector<8x16xbf16>, vector<8x16xbf16>, vector<8x16xbf16>, vector<8x16xbf16>, vector<8x16xbf16>, vector<8x16xbf16>, vector<8x16xbf16>, vector<8x16xbf16> -> vector<128x16xbf16>
    %149 = tpu.concatenate %146, %147 in 0 : vector<8x16xbf16>, vector<8x16xbf16> -> vector<16x16xbf16>
    %150 = tpu.concatenate %148, %149 in 0 : vector<128x16xbf16>, vector<16x16xbf16> -> vector<144x16xbf16>
    %c0_170 = arith.constant 0 : index
    %c360 = arith.constant 360 : index
    %151 = vector.load %arg2[%c0_170, %c360] : memref<8x936xbf16, #tpu.memory_space<vmem>>, vector<8x144xbf16>
    %cst_171 = arith.constant dense<0.000000e+00> : vector<8x16xf32>
    %152 = tpu.matmul %151, %150, %cst_171 {dimension_numbers = #tpu.dot_dimension_numbers<[1], [0], [0], [1], [0, 0, 1, 1], [], []>} : vector<8x144xbf16>, vector<144x16xbf16>, vector<8x16xf32> -> vector<8x16xf32>
    %c0_172 = arith.constant 0 : index
    %c5_173 = arith.constant 5 : index
    %153 = vector.load %arg3[%c0_172, %c5_173] : memref<8x10xf32, #tpu.memory_space<vmem>>, vector<8x1xf32>
    %154 = vector.broadcast %153 : vector<8x1xf32> to vector<8x16xf32>
    %155 = arith.addf %152, %154 : vector<8x16xf32>
    %cst_174 = arith.constant 0.000000e+00 : f32
    %156 = vector.broadcast %cst_174 : f32 to vector<8x16xf32>
    %157 = arith.maximumf %155, %156 : vector<8x16xf32>
    %158 = arith.truncf %157 : vector<8x16xf32> to vector<8x16xbf16>
    %c0_175 = arith.constant 0 : index
    %c0_176 = arith.constant 0 : index
    %159 = vector.load %arg10[%c0_175, %c0_176] : memref<16x36xbf16, #tpu.memory_space<vmem>>, vector<16x36xbf16>
    %cst_177 = arith.constant dense<0.000000e+00> : vector<8x36xf32>
    %160 = tpu.matmul %158, %159, %cst_177 {dimension_numbers = #tpu.dot_dimension_numbers<[1], [0], [0], [1], [0, 0, 1, 1], [], []>} : vector<8x16xbf16>, vector<16x36xbf16>, vector<8x36xf32> -> vector<8x36xf32>
    %161 = arith.truncf %160 : vector<8x36xf32> to vector<8x36xbf16>
    %c0_178 = arith.constant 0 : index
    %c7_179 = arith.constant 7 : index
    %162 = vector.load %arg19[%c0_178, %c7_179] : memref<8x50xbf16, #tpu.memory_space<vmem>>, vector<8x36xbf16>
    tpu.vector_store %arg19[%c0_178, %c7_179], %161 {strides = array<i32>} : memref<8x50xbf16, #tpu.memory_space<vmem>>, vector<8x36xbf16>,
    %c0_180 = arith.constant 0 : index
    %c0_181 = arith.constant 0 : index
    %163 = vector.load %arg19[%c0_180, %c0_181] : memref<8x50xbf16, #tpu.memory_space<vmem>>, vector<8x36xbf16>
    %c0_182 = arith.constant 0 : index
    %c1_183 = arith.constant 1 : index
    %164 = vector.load %arg19[%c0_182, %c1_183] : memref<8x50xbf16, #tpu.memory_space<vmem>>, vector<8x36xbf16>
    %c0_184 = arith.constant 0 : index
    %c2_185 = arith.constant 2 : index
    %165 = vector.load %arg19[%c0_184, %c2_185] : memref<8x50xbf16, #tpu.memory_space<vmem>>, vector<8x36xbf16>
    %c0_186 = arith.constant 0 : index
    %c6_187 = arith.constant 6 : index
    %166 = vector.load %arg19[%c0_186, %c6_187] : memref<8x50xbf16, #tpu.memory_space<vmem>>, vector<8x36xbf16>
    %c0_188 = arith.constant 0 : index
    %c7_189 = arith.constant 7 : index
    %167 = vector.load %arg19[%c0_188, %c7_189] : memref<8x50xbf16, #tpu.memory_space<vmem>>, vector<8x36xbf16>
    %c0_190 = arith.constant 0 : index
    %c8_191 = arith.constant 8 : index
    %168 = vector.load %arg19[%c0_190, %c8_191] : memref<8x50xbf16, #tpu.memory_space<vmem>>, vector<8x36xbf16>
    %c0_192 = arith.constant 0 : index
    %c12_193 = arith.constant 12 : index
    %169 = vector.load %arg19[%c0_192, %c12_193] : memref<8x50xbf16, #tpu.memory_space<vmem>>, vector<8x36xbf16>
    %c0_194 = arith.constant 0 : index
    %c13_195 = arith.constant 13 : index
    %170 = vector.load %arg19[%c0_194, %c13_195] : memref<8x50xbf16, #tpu.memory_space<vmem>>, vector<8x36xbf16>
    %c0_196 = arith.constant 0 : index
    %c14_197 = arith.constant 14 : index
    %171 = vector.load %arg19[%c0_196, %c14_197] : memref<8x50xbf16, #tpu.memory_space<vmem>>, vector<8x36xbf16>
    %c0_198 = arith.constant 0 : index
    %c0_199 = arith.constant 0 : index
    %172 = vector.load %arg15[%c0_198, %c0_199] : memref<8x50xbf16, #tpu.memory_space<vmem>>, vector<8x36xbf16>
    %c0_200 = arith.constant 0 : index
    %c1_201 = arith.constant 1 : index
    %173 = vector.load %arg15[%c0_200, %c1_201] : memref<8x50xbf16, #tpu.memory_space<vmem>>, vector<8x36xbf16>
    %c0_202 = arith.constant 0 : index
    %c2_203 = arith.constant 2 : index
    %174 = vector.load %arg15[%c0_202, %c2_203] : memref<8x50xbf16, #tpu.memory_space<vmem>>, vector<8x36xbf16>
    %c0_204 = arith.constant 0 : index
    %c6_205 = arith.constant 6 : index
    %175 = vector.load %arg15[%c0_204, %c6_205] : memref<8x50xbf16, #tpu.memory_space<vmem>>, vector<8x36xbf16>
    %c0_206 = arith.constant 0 : index
    %c7_207 = arith.constant 7 : index
    %176 = vector.load %arg15[%c0_206, %c7_207] : memref<8x50xbf16, #tpu.memory_space<vmem>>, vector<8x36xbf16>
    %c0_208 = arith.constant 0 : index
    %c8_209 = arith.constant 8 : index
    %177 = vector.load %arg15[%c0_208, %c8_209] : memref<8x50xbf16, #tpu.memory_space<vmem>>, vector<8x36xbf16>
    %c0_210 = arith.constant 0 : index
    %c12_211 = arith.constant 12 : index
    %178 = vector.load %arg15[%c0_210, %c12_211] : memref<8x50xbf16, #tpu.memory_space<vmem>>, vector<8x36xbf16>
    %c0_212 = arith.constant 0 : index
    %c13_213 = arith.constant 13 : index
    %179 = vector.load %arg15[%c0_212, %c13_213] : memref<8x50xbf16, #tpu.memory_space<vmem>>, vector<8x36xbf16>
    %c0_214 = arith.constant 0 : index
    %c14_215 = arith.constant 14 : index
    %180 = vector.load %arg15[%c0_214, %c14_215] : memref<8x50xbf16, #tpu.memory_space<vmem>>, vector<8x36xbf16>
    %181 = tpu.concatenate %163, %164, %165, %166, %167, %168, %169, %170, %171, %172, %173, %174, %175, %176, %177, %178 in 0 : vector<8x36xbf16>, vector<8x36xbf16>, vector<8x36xbf16>, vector<8x36xbf16>, vector<8x36xbf16>, vector<8x36xbf16>, vector<8x36xbf16>, vector<8x36xbf16>, vector<8x36xbf16>, vector<8x36xbf16>, vector<8x36xbf16>, vector<8x36xbf16>, vector<8x36xbf16>, vector<8x36xbf16>, vector<8x36xbf16>, vector<8x36xbf16> -> vector<128x36xbf16>
    %182 = tpu.concatenate %179, %180 in 0 : vector<8x36xbf16>, vector<8x36xbf16> -> vector<16x36xbf16>
    %183 = tpu.concatenate %181, %182 in 0 : vector<128x36xbf16>, vector<16x36xbf16> -> vector<144x36xbf16>
    %c0_216 = arith.constant 0 : index
    %c504 = arith.constant 504 : index
    %184 = vector.load %arg2[%c0_216, %c504] : memref<8x936xbf16, #tpu.memory_space<vmem>>, vector<8x144xbf16>
    %cst_217 = arith.constant dense<0.000000e+00> : vector<8x36xf32>
    %185 = tpu.matmul %184, %183, %cst_217 {dimension_numbers = #tpu.dot_dimension_numbers<[1], [0], [0], [1], [0, 0, 1, 1], [], []>} : vector<8x144xbf16>, vector<144x36xbf16>, vector<8x36xf32> -> vector<8x36xf32>
    %c0_218 = arith.constant 0 : index
    %c6_219 = arith.constant 6 : index
    %186 = vector.load %arg3[%c0_218, %c6_219] : memref<8x10xf32, #tpu.memory_space<vmem>>, vector<8x1xf32>
    %187 = vector.broadcast %186 : vector<8x1xf32> to vector<8x36xf32>
    %188 = arith.addf %185, %187 : vector<8x36xf32>
    %cst_220 = arith.constant 0.000000e+00 : f32
    %189 = vector.broadcast %cst_220 : f32 to vector<8x36xf32>
    %190 = arith.maximumf %188, %189 : vector<8x36xf32>
    %191 = arith.truncf %190 : vector<8x36xf32> to vector<8x36xbf16>
    %c0_221 = arith.constant 0 : index
    %c0_222 = arith.constant 0 : index
    %192 = vector.load %arg11[%c0_221, %c0_222] : memref<36x100xbf16, #tpu.memory_space<vmem>>, vector<36x100xbf16>
    %cst_223 = arith.constant dense<0.000000e+00> : vector<8x100xf32>
    %193 = tpu.matmul %191, %192, %cst_223 {dimension_numbers = #tpu.dot_dimension_numbers<[1], [0], [0], [1], [0, 0, 1, 1], [], []>} : vector<8x36xbf16>, vector<36x100xbf16>, vector<8x100xf32> -> vector<8x100xf32>
    %194 = arith.truncf %193 : vector<8x100xf32> to vector<8x100xbf16>
    %c0_224 = arith.constant 0 : index
    %c11_225 = arith.constant 11 : index
    %195 = vector.load %arg20[%c0_224, %c11_225] : memref<8x122xbf16, #tpu.memory_space<vmem>>, vector<8x100xbf16>
    tpu.vector_store %arg20[%c0_224, %c11_225], %194 {strides = array<i32>} : memref<8x122xbf16, #tpu.memory_space<vmem>>, vector<8x100xbf16>,
    %c0_226 = arith.constant 0 : index
    %c0_227 = arith.constant 0 : index
    %196 = vector.load %arg20[%c0_226, %c0_227] : memref<8x122xbf16, #tpu.memory_space<vmem>>, vector<8x100xbf16>
    %c0_228 = arith.constant 0 : index
    %c1_229 = arith.constant 1 : index
    %197 = vector.load %arg20[%c0_228, %c1_229] : memref<8x122xbf16, #tpu.memory_space<vmem>>, vector<8x100xbf16>
    %c0_230 = arith.constant 0 : index
    %c2_231 = arith.constant 2 : index
    %198 = vector.load %arg20[%c0_230, %c2_231] : memref<8x122xbf16, #tpu.memory_space<vmem>>, vector<8x100xbf16>
    %c0_232 = arith.constant 0 : index
    %c10_233 = arith.constant 10 : index
    %199 = vector.load %arg20[%c0_232, %c10_233] : memref<8x122xbf16, #tpu.memory_space<vmem>>, vector<8x100xbf16>
    %c0_234 = arith.constant 0 : index
    %c11_235 = arith.constant 11 : index
    %200 = vector.load %arg20[%c0_234, %c11_235] : memref<8x122xbf16, #tpu.memory_space<vmem>>, vector<8x100xbf16>
    %c0_236 = arith.constant 0 : index
    %c12_237 = arith.constant 12 : index
    %201 = vector.load %arg20[%c0_236, %c12_237] : memref<8x122xbf16, #tpu.memory_space<vmem>>, vector<8x100xbf16>
    %c0_238 = arith.constant 0 : index
    %c20_239 = arith.constant 20 : index
    %202 = vector.load %arg20[%c0_238, %c20_239] : memref<8x122xbf16, #tpu.memory_space<vmem>>, vector<8x100xbf16>
    %c0_240 = arith.constant 0 : index
    %c21_241 = arith.constant 21 : index
    %203 = vector.load %arg20[%c0_240, %c21_241] : memref<8x122xbf16, #tpu.memory_space<vmem>>, vector<8x100xbf16>
    %c0_242 = arith.constant 0 : index
    %c22_243 = arith.constant 22 : index
    %204 = vector.load %arg20[%c0_242, %c22_243] : memref<8x122xbf16, #tpu.memory_space<vmem>>, vector<8x100xbf16>
    %c0_244 = arith.constant 0 : index
    %c0_245 = arith.constant 0 : index
    %205 = vector.load %arg14[%c0_244, %c0_245] : memref<8x122xbf16, #tpu.memory_space<vmem>>, vector<8x100xbf16>
    %c0_246 = arith.constant 0 : index
    %c1_247 = arith.constant 1 : index
    %206 = vector.load %arg14[%c0_246, %c1_247] : memref<8x122xbf16, #tpu.memory_space<vmem>>, vector<8x100xbf16>
    %c0_248 = arith.constant 0 : index
    %c2_249 = arith.constant 2 : index
    %207 = vector.load %arg14[%c0_248, %c2_249] : memref<8x122xbf16, #tpu.memory_space<vmem>>, vector<8x100xbf16>
    %c0_250 = arith.constant 0 : index
    %c10_251 = arith.constant 10 : index
    %208 = vector.load %arg14[%c0_250, %c10_251] : memref<8x122xbf16, #tpu.memory_space<vmem>>, vector<8x100xbf16>
    %c0_252 = arith.constant 0 : index
    %c11_253 = arith.constant 11 : index
    %209 = vector.load %arg14[%c0_252, %c11_253] : memref<8x122xbf16, #tpu.memory_space<vmem>>, vector<8x100xbf16>
    %c0_254 = arith.constant 0 : index
    %c12_255 = arith.constant 12 : index
    %210 = vector.load %arg14[%c0_254, %c12_255] : memref<8x122xbf16, #tpu.memory_space<vmem>>, vector<8x100xbf16>
    %c0_256 = arith.constant 0 : index
    %c20_257 = arith.constant 20 : index
    %211 = vector.load %arg14[%c0_256, %c20_257] : memref<8x122xbf16, #tpu.memory_space<vmem>>, vector<8x100xbf16>
    %c0_258 = arith.constant 0 : index
    %c21_259 = arith.constant 21 : index
    %212 = vector.load %arg14[%c0_258, %c21_259] : memref<8x122xbf16, #tpu.memory_space<vmem>>, vector<8x100xbf16>
    %c0_260 = arith.constant 0 : index
    %c22_261 = arith.constant 22 : index
    %213 = vector.load %arg14[%c0_260, %c22_261] : memref<8x122xbf16, #tpu.memory_space<vmem>>, vector<8x100xbf16>
    %214 = tpu.concatenate %196, %197, %198, %199, %200, %201, %202, %203, %204, %205, %206, %207, %208, %209, %210, %211 in 0 : vector<8x100xbf16>, vector<8x100xbf16>, vector<8x100xbf16>, vector<8x100xbf16>, vector<8x100xbf16>, vector<8x100xbf16>, vector<8x100xbf16>, vector<8x100xbf16>, vector<8x100xbf16>, vector<8x100xbf16>, vector<8x100xbf16>, vector<8x100xbf16>, vector<8x100xbf16>, vector<8x100xbf16>, vector<8x100xbf16>, vector<8x100xbf16> -> vector<128x100xbf16>
    %215 = tpu.concatenate %212, %213 in 0 : vector<8x100xbf16>, vector<8x100xbf16> -> vector<16x100xbf16>
    %216 = tpu.concatenate %214, %215 in 0 : vector<128x100xbf16>, vector<16x100xbf16> -> vector<144x100xbf16>
    %c0_262 = arith.constant 0 : index
    %c648 = arith.constant 648 : index
    %217 = vector.load %arg2[%c0_262, %c648] : memref<8x936xbf16, #tpu.memory_space<vmem>>, vector<8x144xbf16>
    %cst_263 = arith.constant dense<0.000000e+00> : vector<8x100xf32>
    %218 = tpu.matmul %217, %216, %cst_263 {dimension_numbers = #tpu.dot_dimension_numbers<[1], [0], [0], [1], [0, 0, 1, 1], [], []>} : vector<8x144xbf16>, vector<144x100xbf16>, vector<8x100xf32> -> vector<8x100xf32>
    %c0_264 = arith.constant 0 : index
    %c7_265 = arith.constant 7 : index
    %219 = vector.load %arg3[%c0_264, %c7_265] : memref<8x10xf32, #tpu.memory_space<vmem>>, vector<8x1xf32>
    %220 = vector.broadcast %219 : vector<8x1xf32> to vector<8x100xf32>
    %221 = arith.addf %218, %220 : vector<8x100xf32>
    %cst_266 = arith.constant 0.000000e+00 : f32
    %222 = vector.broadcast %cst_266 : f32 to vector<8x100xf32>
    %223 = arith.maximumf %221, %222 : vector<8x100xf32>
    %224 = arith.truncf %223 : vector<8x100xf32> to vector<8x100xbf16>
    %c0_267 = arith.constant 0 : index
    %c0_268 = arith.constant 0 : index
    %225 = vector.load %arg12[%c0_267, %c0_268] : memref<100x324xbf16, #tpu.memory_space<vmem>>, vector<100x324xbf16>
    %cst_269 = arith.constant dense<0.000000e+00> : vector<8x324xf32>
    %226 = tpu.matmul %224, %225, %cst_269 {dimension_numbers = #tpu.dot_dimension_numbers<[1], [0], [0], [1], [0, 0, 1, 1], [], []>} : vector<8x100xbf16>, vector<100x324xbf16>, vector<8x324xf32> -> vector<8x324xf32>
    %227 = arith.truncf %226 : vector<8x324xf32> to vector<8x324xbf16>
    %c0_270 = arith.constant 0 : index
    %c19 = arith.constant 19 : index
    %228 = vector.load %arg21[%c0_270, %c19] : memref<8x362xbf16, #tpu.memory_space<vmem>>, vector<8x324xbf16>
    tpu.vector_store %arg21[%c0_270, %c19], %227 {strides = array<i32>} : memref<8x362xbf16, #tpu.memory_space<vmem>>, vector<8x324xbf16>,
    %c0_271 = arith.constant 0 : index
    %c0_272 = arith.constant 0 : index
    %229 = vector.load %arg21[%c0_271, %c0_272] : memref<8x362xbf16, #tpu.memory_space<vmem>>, vector<8x324xbf16>
    %c0_273 = arith.constant 0 : index
    %c1_274 = arith.constant 1 : index
    %230 = vector.load %arg21[%c0_273, %c1_274] : memref<8x362xbf16, #tpu.memory_space<vmem>>, vector<8x324xbf16>
    %c0_275 = arith.constant 0 : index
    %c2_276 = arith.constant 2 : index
    %231 = vector.load %arg21[%c0_275, %c2_276] : memref<8x362xbf16, #tpu.memory_space<vmem>>, vector<8x324xbf16>
    %c0_277 = arith.constant 0 : index
    %c18 = arith.constant 18 : index
    %232 = vector.load %arg21[%c0_277, %c18] : memref<8x362xbf16, #tpu.memory_space<vmem>>, vector<8x324xbf16>
    %c0_278 = arith.constant 0 : index
    %c19_279 = arith.constant 19 : index
    %233 = vector.load %arg21[%c0_278, %c19_279] : memref<8x362xbf16, #tpu.memory_space<vmem>>, vector<8x324xbf16>
    %c0_280 = arith.constant 0 : index
    %c20_281 = arith.constant 20 : index
    %234 = vector.load %arg21[%c0_280, %c20_281] : memref<8x362xbf16, #tpu.memory_space<vmem>>, vector<8x324xbf16>
    %c0_282 = arith.constant 0 : index
    %c36 = arith.constant 36 : index
    %235 = vector.load %arg21[%c0_282, %c36] : memref<8x362xbf16, #tpu.memory_space<vmem>>, vector<8x324xbf16>
    %c0_283 = arith.constant 0 : index
    %c37 = arith.constant 37 : index
    %236 = vector.load %arg21[%c0_283, %c37] : memref<8x362xbf16, #tpu.memory_space<vmem>>, vector<8x324xbf16>
    %c0_284 = arith.constant 0 : index
    %c38 = arith.constant 38 : index
    %237 = vector.load %arg21[%c0_284, %c38] : memref<8x362xbf16, #tpu.memory_space<vmem>>, vector<8x324xbf16>
    %238 = tpu.concatenate %229, %230, %231, %232, %233, %234, %235, %236, %237 in 0 : vector<8x324xbf16>, vector<8x324xbf16>, vector<8x324xbf16>, vector<8x324xbf16>, vector<8x324xbf16>, vector<8x324xbf16>, vector<8x324xbf16>, vector<8x324xbf16>, vector<8x324xbf16> -> vector<72x324xbf16>
    %c0_285 = arith.constant 0 : index
    %c792 = arith.constant 792 : index
    %239 = vector.load %arg2[%c0_285, %c792] : memref<8x936xbf16, #tpu.memory_space<vmem>>, vector<8x72xbf16>
    %cst_286 = arith.constant dense<0.000000e+00> : vector<8x324xf32>
    %240 = tpu.matmul %239, %238, %cst_286 {dimension_numbers = #tpu.dot_dimension_numbers<[1], [0], [0], [1], [0, 0, 1, 1], [], []>} : vector<8x72xbf16>, vector<72x324xbf16>, vector<8x324xf32> -> vector<8x324xf32>
    %c0_287 = arith.constant 0 : index
    %c8_288 = arith.constant 8 : index
    %241 = vector.load %arg3[%c0_287, %c8_288] : memref<8x10xf32, #tpu.memory_space<vmem>>, vector<8x1xf32>
    %242 = vector.broadcast %241 : vector<8x1xf32> to vector<8x324xf32>
    %243 = arith.addf %240, %242 : vector<8x324xf32>
    %cst_289 = arith.constant 0.000000e+00 : f32
    %244 = vector.broadcast %cst_289 : f32 to vector<8x324xf32>
    %245 = arith.maximumf %243, %244 : vector<8x324xf32>
    %c0_290 = arith.constant 0 : index
    %c0_291 = arith.constant 0 : index
    %246 = vector.load %arg4[%c0_290, %c0_291] : memref<1x324xf32, #tpu.memory_space<vmem>>, vector<1x324xf32>
    %cst_292 = arith.constant 5.000000e-01 : f32
    %247 = vector.broadcast %cst_292 : f32 to vector<1x324xf32>
    %248 = arith.cmpf ogt, %246, %247 : vector<1x324xf32>
    %cst_293 = arith.constant 0.000000e+00 : f32
    %249 = vector.shape_cast %248 : vector<1x324xi1> to vector<1x324xi1>
    %250 = vector.broadcast %249 : vector<1x324xi1> to vector<8x324xi1>
    %251 = vector.broadcast %cst_293 : f32 to vector<8x324xf32>
    %252 = arith.select %250, %245, %251 : vector<8x324xi1>, vector<8x324xf32>
    %253 = arith.truncf %252 : vector<8x324xf32> to vector<8x324xbf16>
    %c0_294 = arith.constant 0 : index
    %c19_295 = arith.constant 19 : index
    %254 = vector.load %arg22[%c0_294, %c19_295] : memref<8x422xbf16, #tpu.memory_space<vmem>>, vector<8x324xbf16>
    tpu.vector_store %arg22[%c0_294, %c19_295], %253 {strides = array<i32>} : memref<8x422xbf16, #tpu.memory_space<vmem>>, vector<8x324xbf16>,
    %c0_296 = arith.constant 0 : index
    %c0_297 = arith.constant 0 : index
    %255 = vector.load %arg22[%c0_296, %c0_297] : memref<8x422xbf16, #tpu.memory_space<vmem>>, vector<8x384xbf16>
    %c0_298 = arith.constant 0 : index
    %c1_299 = arith.constant 1 : index
    %256 = vector.load %arg22[%c0_298, %c1_299] : memref<8x422xbf16, #tpu.memory_space<vmem>>, vector<8x384xbf16>
    %c0_300 = arith.constant 0 : index
    %c2_301 = arith.constant 2 : index
    %257 = vector.load %arg22[%c0_300, %c2_301] : memref<8x422xbf16, #tpu.memory_space<vmem>>, vector<8x384xbf16>
    %c0_302 = arith.constant 0 : index
    %c18_303 = arith.constant 18 : index
    %258 = vector.load %arg22[%c0_302, %c18_303] : memref<8x422xbf16, #tpu.memory_space<vmem>>, vector<8x384xbf16>
    %c0_304 = arith.constant 0 : index
    %c19_305 = arith.constant 19 : index
    %259 = vector.load %arg22[%c0_304, %c19_305] : memref<8x422xbf16, #tpu.memory_space<vmem>>, vector<8x384xbf16>
    %c0_306 = arith.constant 0 : index
    %c20_307 = arith.constant 20 : index
    %260 = vector.load %arg22[%c0_306, %c20_307] : memref<8x422xbf16, #tpu.memory_space<vmem>>, vector<8x384xbf16>
    %c0_308 = arith.constant 0 : index
    %c36_309 = arith.constant 36 : index
    %261 = vector.load %arg22[%c0_308, %c36_309] : memref<8x422xbf16, #tpu.memory_space<vmem>>, vector<8x384xbf16>
    %c0_310 = arith.constant 0 : index
    %c37_311 = arith.constant 37 : index
    %262 = vector.load %arg22[%c0_310, %c37_311] : memref<8x422xbf16, #tpu.memory_space<vmem>>, vector<8x384xbf16>
    %c0_312 = arith.constant 0 : index
    %c38_313 = arith.constant 38 : index
    %263 = vector.load %arg22[%c0_312, %c38_313] : memref<8x422xbf16, #tpu.memory_space<vmem>>, vector<8x384xbf16>
    %264 = tpu.concatenate %255, %256, %257, %258, %259, %260, %261, %262, %263 in 0 : vector<8x384xbf16>, vector<8x384xbf16>, vector<8x384xbf16>, vector<8x384xbf16>, vector<8x384xbf16>, vector<8x384xbf16>, vector<8x384xbf16>, vector<8x384xbf16>, vector<8x384xbf16> -> vector<72x384xbf16>
    %c0_314 = arith.constant 0 : index
    %c864 = arith.constant 864 : index
    %265 = vector.load %arg2[%c0_314, %c864] : memref<8x936xbf16, #tpu.memory_space<vmem>>, vector<8x72xbf16>
    %cst_315 = arith.constant dense<0.000000e+00> : vector<8x384xf32>
    %266 = tpu.matmul %265, %264, %cst_315 {dimension_numbers = #tpu.dot_dimension_numbers<[1], [0], [0], [1], [0, 0, 1, 1], [], []>} : vector<8x72xbf16>, vector<72x384xbf16>, vector<8x384xf32> -> vector<8x384xf32>
    %c0_316 = arith.constant 0 : index
    %c9_317 = arith.constant 9 : index
    %267 = vector.load %arg3[%c0_316, %c9_317] : memref<8x10xf32, #tpu.memory_space<vmem>>, vector<8x1xf32>
    %268 = vector.broadcast %267 : vector<8x1xf32> to vector<8x384xf32>
    %269 = arith.addf %266, %268 : vector<8x384xf32>
    %cst_318 = arith.constant 0.000000e+00 : f32
    %270 = vector.broadcast %cst_318 : f32 to vector<8x384xf32>
    %271 = arith.maximumf %269, %270 : vector<8x384xf32>
    %c0_319 = arith.constant 0 : index
    %c0_320 = arith.constant 0 : index
    %c0_321 = arith.constant 0 : index
    %272 = vector.load %arg13[%c0_319, %c0_320, %c0_321] : memref<1x8x384xf32, #tpu.memory_space<vmem>>, vector<1x8x384xf32>
    %273 = vector.shape_cast %272 : vector<1x8x384xf32> to vector<8x384xf32>
    %274 = vector.shape_cast %271 : vector<8x384xf32> to vector<1x8x384xf32>
    tpu.vector_store %arg13[%c0_319, %c0_320, %c0_321], %274 {strides = array<i32>} : memref<1x8x384xf32, #tpu.memory_space<vmem>>, vector<1x8x384xf32>,
    return
  }
  func.func @transform_0(%arg0: i32) -> (i32, i32, i32) {
    %c0_i32 = arith.constant 0 : i32
    %c0_i32_0 = arith.constant 0 : i32
    %c0_i32_1 = arith.constant 0 : i32
    return %arg0, %c0_i32, %c0_i32_0 : i32, i32, i32
  }
  func.func @transform_1(%arg0: i32) -> (i32, i32) {
    %c0_i32 = arith.constant 0 : i32
    %c0_i32_0 = arith.constant 0 : i32
    %c0_i32_1 = arith.constant 0 : i32
    return %c0_i32, %c0_i32_0 : i32, i32
  }
  func.func @transform_2(%arg0: i32) -> (i32, i32) {
    %c0_i32 = arith.constant 0 : i32
    %c0_i32_0 = arith.constant 0 : i32
    %c0_i32_1 = arith.constant 0 : i32
    return %c0_i32, %c0_i32_0 : i32, i32
  }
  func.func @transform_3(%arg0: i32) -> (i32, i32) {
    %c0_i32 = arith.constant 0 : i32
    %c0_i32_0 = arith.constant 0 : i32
    %c0_i32_1 = arith.constant 0 : i32
    return %c0_i32, %c0_i32_0 : i32, i32
  }
  func.func @transform_4(%arg0: i32) -> (i32, i32) {
    %c0_i32 = arith.constant 0 : i32
    %c0_i32_0 = arith.constant 0 : i32
    %c0_i32_1 = arith.constant 0 : i32
    return %c0_i32, %c0_i32_0 : i32, i32
  }
  func.func @transform_5(%arg0: i32) -> (i32, i32) {
    %c0_i32 = arith.constant 0 : i32
    %c0_i32_0 = arith.constant 0 : i32
    %c0_i32_1 = arith.constant 0 : i32
    return %c0_i32, %c0_i32_0 : i32, i32
  }
  func.func @transform_6(%arg0: i32) -> (i32, i32) {
    %c0_i32 = arith.constant 0 : i32
    %c0_i32_0 = arith.constant 0 : i32
    %c0_i32_1 = arith.constant 0 : i32
    return %c0_i32, %c0_i32_0 : i32, i32
  }
  func.func @transform_7(%arg0: i32) -> (i32, i32) {
    %c0_i32 = arith.constant 0 : i32
    %c0_i32_0 = arith.constant 0 : i32
    %c0_i32_1 = arith.constant 0 : i32
    return %c0_i32, %c0_i32_0 : i32, i32
  }
  func.func @transform_8(%arg0: i32) -> (i32, i32) {
    %c0_i32 = arith.constant 0 : i32
    %c0_i32_0 = arith.constant 0 : i32
    %c0_i32_1 = arith.constant 0 : i32
    return %c0_i32, %c0_i32_0 : i32, i32
  }
  func.func @transform_9(%arg0: i32) -> (i32, i32) {
    %c0_i32 = arith.constant 0 : i32
    %c0_i32_0 = arith.constant 0 : i32
    %c0_i32_1 = arith.constant 0 : i32
    return %c0_i32, %c0_i32_0 : i32, i32
  }
  func.func @transform_10(%arg0: i32) -> (i32, i32) {
    %c0_i32 = arith.constant 0 : i32
    %c0_i32_0 = arith.constant 0 : i32
    %c0_i32_1 = arith.constant 0 : i32
    return %c0_i32, %c0_i32_0 : i32, i32
  }
  func.func @transform_11(%arg0: i32) -> (i32, i32) {
    %c0_i32 = arith.constant 0 : i32
    %c0_i32_0 = arith.constant 0 : i32
    %c0_i32_1 = arith.constant 0 : i32
    return %c0_i32, %c0_i32_0 : i32, i32
  }
  func.func @transform_12(%arg0: i32) -> (i32, i32, i32) {
    %c0_i32 = arith.constant 0 : i32
    %c0_i32_0 = arith.constant 0 : i32
    %c0_i32_1 = arith.constant 0 : i32
    return %arg0, %c0_i32, %c0_i32_0 : i32, i32, i32
  }
}

</mosaic_0001>

<llo_original>
// kernel: _lambda_.1
$region0: #{_lambda_.1}
  #allocation0 [shape = 'u32[]', space=smem, size = 0x4, offset = 0x4, fixed_abs, tag = 'smem constant byte address 0x4 - core index']
  #allocation1 [shape = 'u32[144,128]{1,0:T(1,128)}', space=vmem, size = 0x12000, scoped, tag = 'internal scratch']
  #allocation2 [shape = 'bf16[8,122]{1,0:T(8,128)(2,1)}', space=vmem, size = 0x800, scoped, tag = 'scratch operand']
  #allocation3 [shape = 'bf16[8,50]{1,0:T(8,128)(2,1)}', space=vmem, size = 0x800, scoped, tag = 'scratch operand']
  #allocation4 [shape = 'bf16[8,26]{1,0:T(8,128)(2,1)}', space=vmem, size = 0x800, scoped, tag = 'scratch operand']
  #allocation5 [shape = 'bf16[8,17]{1,0:T(8,128)(2,1)}', space=vmem, size = 0x800, scoped, tag = 'scratch operand']
  #allocation6 [shape = 'bf16[8,26]{1,0:T(8,128)(2,1)}', space=vmem, size = 0x800, scoped, tag = 'scratch operand']
  #allocation7 [shape = 'bf16[8,50]{1,0:T(8,128)(2,1)}', space=vmem, size = 0x800, scoped, tag = 'scratch operand']
  #allocation8 [shape = 'bf16[8,122]{1,0:T(8,128)(2,1)}', space=vmem, size = 0x800, scoped, tag = 'scratch operand']
  #allocation9 [shape = 'bf16[8,362]{1,0:T(8,128)(2,1)}', space=vmem, size = 0x1800, scoped, tag = 'scratch operand']
  #allocation10 [shape = 'bf16[8,422]{1,0:T(8,128)(2,1)}', space=vmem, size = 0x2000, scoped, tag = 'scratch operand']
  %s0 = inlined_call_operand.vmem [shape: bf16[2,8,362], index: 0, kind: input, shape index: {}]
  %s1 = inlined_call_operand.vmem [shape: bf16[8,936], index: 1, kind: input, shape index: {}]
  %s2 = inlined_call_operand.vmem [shape: f32[8,10], index: 2, kind: input, shape index: {}]
  %s3 = inlined_call_operand.vmem [shape: f32[1,324], index: 3, kind: input, shape index: {}]
  %s4 = inlined_call_operand.vmem [shape: bf16[324,100], index: 4, kind: input, shape index: {}]
  %s5 = inlined_call_operand.vmem [shape: bf16[100,36], index: 5, kind: input, shape index: {}]
  %s6 = inlined_call_operand.vmem [shape: bf16[36,16], index: 6, kind: input, shape index: {}]
  %s7 = inlined_call_operand.vmem [shape: bf16[16,9], index: 7, kind: input, shape index: {}]
  %s8 = inlined_call_operand.vmem [shape: bf16[9,16], index: 8, kind: input, shape index: {}]
  %s9 = inlined_call_operand.vmem [shape: bf16[16,36], index: 9, kind: input, shape index: {}]
  %s10 = inlined_call_operand.vmem [shape: bf16[36,100], index: 10, kind: input, shape index: {}]
  %s11 = inlined_call_operand.vmem [shape: bf16[100,324], index: 11, kind: input, shape index: {}]
  %s12 = inlined_call_operand.vmem [shape: f32[2,8,384], index: 12, kind: output, shape index: {}]
  %s13 = sld [smem:[#allocation0]]
  $region81: #{_lambda_.1} parent=0
    _
  %s15 = ssub.s32 1, %s13
  %s16 = scalar_select 0, %s15, %s13
  loop: start=0, step=1, limit=4
  $region2: #{_lambda_.1} parent=0 // loop_pre_header
    _
  $region3: #{_lambda_.1} parent=0 // loop_header
    %s18 = sphi 0, %s22
    %p19 = scmp.ge.s32.totalorder %s18, 4
    %s28 = sphi 0, %s30
    %s31 = sphi 0, %s28
    %s32 = sphi 0, %s31
    %s48 = sphi 0, %s32
    %s52 = sphi 0, %s52
    %s54 = sphi 0, %s52
    %s55 = sphi 0, %s54
    %s69 = sphi 0, %s55
    %s73 = sphi 0, %s73
    %s75 = sphi 0, %s73
    %s76 = sphi 0, %s75
    %s90 = sphi 0, %s76
    %s94 = sphi 0, %s94
    %s96 = sphi 0, %s94
    %s97 = sphi 0, %s96
    %s111 = sphi 0, %s97
    %s115 = sphi 0, %s115
    %s117 = sphi 0, %s115
    %s118 = sphi 0, %s117
    %s132 = sphi 0, %s118
    %s136 = sphi 0, %s136
    %s138 = sphi 0, %s136
    %s139 = sphi 0, %s138
    %s153 = sphi 0, %s139
    %s157 = sphi 0, %s157
    %s159 = sphi 0, %s157
    %s160 = sphi 0, %s159
    %s174 = sphi 0, %s160
    %s178 = sphi 0, %s178
    %s180 = sphi 0, %s178
    %s181 = sphi 0, %s180
    %s195 = sphi 0, %s181
    %s199 = sphi 0, %s199
    %s201 = sphi 0, %s199
    %s202 = sphi 0, %s201
    %s216 = sphi 0, %s202
    %s220 = sphi 0, %s220
    %s222 = sphi 0, %s220
    %s223 = sphi 0, %s222
    %s237 = sphi 0, %s223
    %s241 = sphi 0, %s241
    %s243 = sphi 0, %s241
    %s244 = sphi 0, %s243
    %s258 = sphi 0, %s244
    %s262 = sphi 0, %s262
    %s264 = sphi 0, %s262
    %s265 = sphi 0, %s264
    %s279 = sphi 0, %s265
    %s285 = sphi 0, %s287
    %s288 = sphi 0, %s285
    %s289 = sphi 0, %s288
    %s305 = sphi 0, %s289
  $region4: #{_lambda_.1} parent=0 // loop_header_branch
    %21 = sbr.rel (%p19) target = $region8
  $region5: #{_lambda_.1} parent=0 // loop_body
    %s23 = ssub.s32 %s18, 1
    %s24 = ssub.s32 %s18, 2
    %s25 = sadd.s32 %s18, 1
    %s26 = ssub.s32 %s18, %s25
    %p27 = scmp.eq.s32.totalorder %s26, 0
    %s29 = sadd.s32 %s28, 1
    %s30 = scalar_select %p27, %s28, %s29
    %p33 = pneg %p27
    %p34 = scmp.eq.s32.totalorder %s18, 1
    %p35 = por %p33, %p34
    %p36 = scmp.ne.s32.totalorder %s28, %s31
    %p37 = scmp.eq.s32.totalorder %s18, 0
    %p38 = por %p36, %p37
    %p39 = scmp.ne.s32.totalorder %s28, %s31
    %p40 = scmp.eq.s32.totalorder %s23, 1
    %p41 = por %p39, %p40
    %p42 = scmp.ne.s32.totalorder %s31, %s32
    %p43 = scmp.eq.s32.totalorder %s23, 0
    %p44 = por %p42, %p43
    %p45 = scmp.ne.s32.totalorder %s31, %s32
    %p46 = scmp.eq.s32.totalorder %s24, 1
    %p47 = por %p45, %p46
    %p49 = scmp.ne.s32.totalorder %s32, %s48
    %p50 = scmp.eq.s32.totalorder %s24, 0
    %p51 = por %p49, %p50
    %s53 = sadd.s32 %s52, 1
    %p56 = scmp.eq.s32.totalorder %s18, 1
    %p57 = scmp.ne.s32.totalorder %s52, %s54
    %p58 = scmp.eq.s32.totalorder %s18, 0
    %p59 = por %p57, %p58
    %p60 = scmp.ne.s32.totalorder %s52, %s54
    %p61 = scmp.eq.s32.totalorder %s23, 1
    %p62 = por %p60, %p61
    %p63 = scmp.ne.s32.totalorder %s54, %s55
    %p64 = scmp.eq.s32.totalorder %s23, 0
    %p65 = por %p63, %p64
    %p66 = scmp.ne.s32.totalorder %s54, %s55
    %p67 = scmp.eq.s32.totalorder %s24, 1
    %p68 = por %p66, %p67
    %p70 = scmp.ne.s32.totalorder %s55, %s69
    %p71 = scmp.eq.s32.totalorder %s24, 0
    %p72 = por %p70, %p71
    %s74 = sadd.s32 %s73, 1
    %p77 = scmp.eq.s32.totalorder %s18, 1
    %p78 = scmp.ne.s32.totalorder %s73, %s75
    %p79 = scmp.eq.s32.totalorder %s18, 0
    %p80 = por %p78, %p79
    %p81 = scmp.ne.s32.totalorder %s73, %s75
    %p82 = scmp.eq.s32.totalorder %s23, 1
    %p83 = por %p81, %p82
    %p84 = scmp.ne.s32.totalorder %s75, %s76
    %p85 = scmp.eq.s32.totalorder %s23, 0
    %p86 = por %p84, %p85
    %p87 = scmp.ne.s32.totalorder %s75, %s76
    %p88 = scmp.eq.s32.totalorder %s24, 1
    %p89 = por %p87, %p88
    %p91 = scmp.ne.s32.totalorder %s76, %s90
    %p92 = scmp.eq.s32.totalorder %s24, 0
    %p93 = por %p91, %p92
    %s95 = sadd.s32 %s94, 1
    %p98 = scmp.eq.s32.totalorder %s18, 1
    %p99 = scmp.ne.s32.totalorder %s94, %s96
    %p100 = scmp.eq.s32.totalorder %s18, 0
    %p101 = por %p99, %p100
    %p102 = scmp.ne.s32.totalorder %s94, %s96
    %p103 = scmp.eq.s32.totalorder %s23, 1
    %p104 = por %p102, %p103
    %p105 = scmp.ne.s32.totalorder %s96, %s97
    %p106 = scmp.eq.s32.totalorder %s23, 0
    %p107 = por %p105, %p106
    %p108 = scmp.ne.s32.totalorder %s96, %s97
    %p109 = scmp.eq.s32.totalorder %s24, 1
    %p110 = por %p108, %p109
    %p112 = scmp.ne.s32.totalorder %s97, %s111
    %p113 = scmp.eq.s32.totalorder %s24, 0
    %p114 = por %p112, %p113
    %s116 = sadd.s32 %s115, 1
    %p119 = scmp.eq.s32.totalorder %s18, 1
    %p120 = scmp.ne.s32.totalorder %s115, %s117
    %p121 = scmp.eq.s32.totalorder %s18, 0
    %p122 = por %p120, %p121
    %p123 = scmp.ne.s32.totalorder %s115, %s117
    %p124 = scmp.eq.s32.totalorder %s23, 1
    %p125 = por %p123, %p124
    %p126 = scmp.ne.s32.totalorder %s117, %s118
    %p127 = scmp.eq.s32.totalorder %s23, 0
    %p128 = por %p126, %p127
    %p129 = scmp.ne.s32.totalorder %s117, %s118
    %p130 = scmp.eq.s32.totalorder %s24, 1
    %p131 = por %p129, %p130
    %p133 = scmp.ne.s32.totalorder %s118, %s132
    %p134 = scmp.eq.s32.totalorder %s24, 0
    %p135 = por %p133, %p134
    %s137 = sadd.s32 %s136, 1
    %p140 = scmp.eq.s32.totalorder %s18, 1
    %p141 = scmp.ne.s32.totalorder %s136, %s138
    %p142 = scmp.eq.s32.totalorder %s18, 0
    %p143 = por %p141, %p142
    %p144 = scmp.ne.s32.totalorder %s136, %s138
    %p145 = scmp.eq.s32.totalorder %s23, 1
    %p146 = por %p144, %p145
    %p147 = scmp.ne.s32.totalorder %s138, %s139
    %p148 = scmp.eq.s32.totalorder %s23, 0
    %p149 = por %p147, %p148
    %p150 = scmp.ne.s32.totalorder %s138, %s139
    %p151 = scmp.eq.s32.totalorder %s24, 1
    %p152 = por %p150, %p151
    %p154 = scmp.ne.s32.totalorder %s139, %s153
    %p155 = scmp.eq.s32.totalorder %s24, 0
    %p156 = por %p154, %p155
    %s158 = sadd.s32 %s157, 1
    %p161 = scmp.eq.s32.totalorder %s18, 1
    %p162 = scmp.ne.s32.totalorder %s157, %s159
    %p163 = scmp.eq.s32.totalorder %s18, 0
    %p164 = por %p162, %p163
    %p165 = scmp.ne.s32.totalorder %s157, %s159
    %p166 = scmp.eq.s32.totalorder %s23, 1
    %p167 = por %p165, %p166
    %p168 = scmp.ne.s32.totalorder %s159, %s160
    %p169 = scmp.eq.s32.totalorder %s23, 0
    %p170 = por %p168, %p169
    %p171 = scmp.ne.s32.totalorder %s159, %s160
    %p172 = scmp.eq.s32.totalorder %s24, 1
    %p173 = por %p171, %p172
    %p175 = scmp.ne.s32.totalorder %s160, %s174
    %p176 = scmp.eq.s32.totalorder %s24, 0
    %p177 = por %p175, %p176
    %s179 = sadd.s32 %s178, 1
    %p182 = scmp.eq.s32.totalorder %s18, 1
    %p183 = scmp.ne.s32.totalorder %s178, %s180
    %p184 = scmp.eq.s32.totalorder %s18, 0
    %p185 = por %p183, %p184
    %p186 = scmp.ne.s32.totalorder %s178, %s180
    %p187 = scmp.eq.s32.totalorder %s23, 1
    %p188 = por %p186, %p187
    %p189 = scmp.ne.s32.totalorder %s180, %s181
    %p190 = scmp.eq.s32.totalorder %s23, 0
    %p191 = por %p189, %p190
    %p192 = scmp.ne.s32.totalorder %s180, %s181
    %p193 = scmp.eq.s32.totalorder %s24, 1
    %p194 = por %p192, %p193
    %p196 = scmp.ne.s32.totalorder %s181, %s195
    %p197 = scmp.eq.s32.totalorder %s24, 0
    %p198 = por %p196, %p197
    %s200 = sadd.s32 %s199, 1
    %p203 = scmp.eq.s32.totalorder %s18, 1
    %p204 = scmp.ne.s32.totalorder %s199, %s201
    %p205 = scmp.eq.s32.totalorder %s18, 0
    %p206 = por %p204, %p205
    %p207 = scmp.ne.s32.totalorder %s199, %s201
    %p208 = scmp.eq.s32.totalorder %s23, 1
    %p209 = por %p207, %p208
    %p210 = scmp.ne.s32.totalorder %s201, %s202
    %p211 = scmp.eq.s32.totalorder %s23, 0
    %p212 = por %p210, %p211
    %p213 = scmp.ne.s32.totalorder %s201, %s202
    %p214 = scmp.eq.s32.totalorder %s24, 1
    %p215 = por %p213, %p214
    %p217 = scmp.ne.s32.totalorder %s202, %s216
    %p218 = scmp.eq.s32.totalorder %s24, 0
    %p219 = por %p217, %p218
    %s221 = sadd.s32 %s220, 1
    %p224 = scmp.eq.s32.totalorder %s18, 1
    %p225 = scmp.ne.s32.totalorder %s220, %s222
    %p226 = scmp.eq.s32.totalorder %s18, 0
    %p227 = por %p225, %p226
    %p228 = scmp.ne.s32.totalorder %s220, %s222
    %p229 = scmp.eq.s32.totalorder %s23, 1
    %p230 = por %p228, %p229
    %p231 = scmp.ne.s32.totalorder %s222, %s223
    %p232 = scmp.eq.s32.totalorder %s23, 0
    %p233 = por %p231, %p232
    %p234 = scmp.ne.s32.totalorder %s222, %s223
    %p235 = scmp.eq.s32.totalorder %s24, 1
    %p236 = por %p234, %p235
    %p238 = scmp.ne.s32.totalorder %s223, %s237
    %p239 = scmp.eq.s32.totalorder %s24, 0
    %p240 = por %p238, %p239
    %s242 = sadd.s32 %s241, 1
    %p245 = scmp.eq.s32.totalorder %s18, 1
    %p246 = scmp.ne.s32.totalorder %s241, %s243
    %p247 = scmp.eq.s32.totalorder %s18, 0
    %p248 = por %p246, %p247
    %p249 = scmp.ne.s32.totalorder %s241, %s243
    %p250 = scmp.eq.s32.totalorder %s23, 1
    %p251 = por %p249, %p250
    %p252 = scmp.ne.s32.totalorder %s243, %s244
    %p253 = scmp.eq.s32.totalorder %s23, 0
    %p254 = por %p252, %p253
    %p255 = scmp.ne.s32.totalorder %s243, %s244
    %p256 = scmp.eq.s32.totalorder %s24, 1
    %p257 = por %p255, %p256
    %p259 = scmp.ne.s32.totalorder %s244, %s258
    %p260 = scmp.eq.s32.totalorder %s24, 0
    %p261 = por %p259, %p260
    %s263 = sadd.s32 %s262, 1
    %p266 = scmp.eq.s32.totalorder %s18, 1
    %p267 = scmp.ne.s32.totalorder %s262, %s264
    %p268 = scmp.eq.s32.totalorder %s18, 0
    %p269 = por %p267, %p268
    %p270 = scmp.ne.s32.totalorder %s262, %s264
    %p271 = scmp.eq.s32.totalorder %s23, 1
    %p272 = por %p270, %p271
    %p273 = scmp.ne.s32.totalorder %s264, %s265
    %p274 = scmp.eq.s32.totalorder %s23, 0
    %p275 = por %p273, %p274
    %p276 = scmp.ne.s32.totalorder %s264, %s265
    %p277 = scmp.eq.s32.totalorder %s24, 1
    %p278 = por %p276, %p277
    %p280 = scmp.ne.s32.totalorder %s265, %s279
    %p281 = scmp.eq.s32.totalorder %s24, 0
    %p282 = por %p280, %p281
    %s283 = ssub.s32 %s18, %s25
    %p284 = scmp.eq.s32.totalorder %s283, 0
    %s286 = sadd.s32 %s285, 1
    %s287 = scalar_select %p284, %s285, %s286
    %p290 = pneg %p284
    %p291 = scmp.eq.s32.totalorder %s18, 1
    %p292 = por %p290, %p291
    %p293 = scmp.ne.s32.totalorder %s285, %s288
    %p294 = scmp.eq.s32.totalorder %s18, 0
    %p295 = por %p293, %p294
    %p296 = scmp.ne.s32.totalorder %s285, %s288
    %p297 = scmp.eq.s32.totalorder %s23, 1
    %p298 = por %p296, %p297
    %p299 = scmp.ne.s32.totalorder %s288, %s289
    %p300 = scmp.eq.s32.totalorder %s23, 0
    %p301 = por %p299, %p300
    %p302 = scmp.ne.s32.totalorder %s288, %s289
    %p303 = scmp.eq.s32.totalorder %s24, 1
    %p304 = por %p302, %p303
    %p306 = scmp.ne.s32.totalorder %s289, %s305
    %p307 = scmp.eq.s32.totalorder %s24, 0
    %p308 = por %p306, %p307
    %p309 = scmp.le.s32.totalorder 1, %s18
    %p310 = scmp.lt.s32.totalorder %s18, 3
    %p311 = pnand %p309, %p310
    %p312 = pneg %p311
    // Predicated region
    $region9: #{_lambda_.1} parent=5 // pred_check
      _
    $region10: #{_lambda_.1} parent=5 // pred_check_branch
      %314 = sbr.rel (%p311) target = $region12
    $region11: #{_lambda_.1} parent=5 // pred_region
      %s315 = ssub.s32 %s18, 1
      // Predicated region
      $region13: #{_lambda_.1} parent=11 // pred_check
        %p316 = pneg %p65
      $region14: #{_lambda_.1} parent=11 // pred_check_branch
        %318 = sbr.rel (%p316) target = $region16
      $region15: #{_lambda_.1} parent=11 // pred_region
        _
      $region16: #{_lambda_.1} parent=11 // pred_fallthru
        _
      // Predicated region
      $region17: #{_lambda_.1} parent=11 // pred_check
        %p319 = pneg %p86
      $region18: #{_lambda_.1} parent=11 // pred_check_branch
        %321 = sbr.rel (%p319) target = $region20
      $region19: #{_lambda_.1} parent=11 // pred_region
        _
      $region20: #{_lambda_.1} parent=11 // pred_fallthru
        _
      // Predicated region
      $region21: #{_lambda_.1} parent=11 // pred_check
        %p322 = pneg %p107
      $region22: #{_lambda_.1} parent=11 // pred_check_branch
        %324 = sbr.rel (%p322) target = $region24
      $region23: #{_lambda_.1} parent=11 // pred_region
        _
      $region24: #{_lambda_.1} parent=11 // pred_fallthru
        _
      // Predicated region
      $region25: #{_lambda_.1} parent=11 // pred_check
        %p325 = pneg %p128
      $region26: #{_lambda_.1} parent=11 // pred_check_branch
        %327 = sbr.rel (%p325) target = $region28
      $region27: #{_lambda_.1} parent=11 // pred_region
        _
      $region28: #{_lambda_.1} parent=11 // pred_fallthru
        _
      // Predicated region
      $region29: #{_lambda_.1} parent=11 // pred_check
        %p328 = pneg %p149
      $region30: #{_lambda_.1} parent=11 // pred_check_branch
        %330 = sbr.rel (%p328) target = $region32
      $region31: #{_lambda_.1} parent=11 // pred_region
        _
      $region32: #{_lambda_.1} parent=11 // pred_fallthru
        _
      // Predicated region
      $region33: #{_lambda_.1} parent=11 // pred_check
        %p331 = pneg %p170
      $region34: #{_lambda_.1} parent=11 // pred_check_branch
        %333 = sbr.rel (%p331) target = $region36
      $region35: #{_lambda_.1} parent=11 // pred_region
        _
      $region36: #{_lambda_.1} parent=11 // pred_fallthru
        _
      // Predicated region
      $region37: #{_lambda_.1} parent=11 // pred_check
        %p334 = pneg %p191
      $region38: #{_lambda_.1} parent=11 // pred_check_branch
        %336 = sbr.rel (%p334) target = $region40
      $region39: #{_lambda_.1} parent=11 // pred_region
        _
      $region40: #{_lambda_.1} parent=11 // pred_fallthru
        _
      // Predicated region
      $region41: #{_lambda_.1} parent=11 // pred_check
        %p337 = pneg %p212
      $region42: #{_lambda_.1} parent=11 // pred_check_branch
        %339 = sbr.rel (%p337) target = $region44
      $region43: #{_lambda_.1} parent=11 // pred_region
        _
      $region44: #{_lambda_.1} parent=11 // pred_fallthru
        _
      // Predicated region
      $region45: #{_lambda_.1} parent=11 // pred_check
        %p340 = pneg %p233
      $region46: #{_lambda_.1} parent=11 // pred_check_branch
        %342 = sbr.rel (%p340) target = $region48
      $region47: #{_lambda_.1} parent=11 // pred_region
        _
      $region48: #{_lambda_.1} parent=11 // pred_fallthru
        _
      // Predicated region
      $region49: #{_lambda_.1} parent=11 // pred_check
        %p343 = pneg %p254
      $region50: #{_lambda_.1} parent=11 // pred_check_branch
        %345 = sbr.rel (%p343) target = $region52
      $region51: #{_lambda_.1} parent=11 // pred_region
        _
      $region52: #{_lambda_.1} parent=11 // pred_fallthru
        _
      // Predicated region
      $region53: #{_lambda_.1} parent=11 // pred_check
        %p346 = pneg %p275
      $region54: #{_lambda_.1} parent=11 // pred_check_branch
        %348 = sbr.rel (%p346) target = $region56
      $region55: #{_lambda_.1} parent=11 // pred_region
        _
      $region56: #{_lambda_.1} parent=11 // pred_fallthru
        _
    $region12: #{_lambda_.1} parent=5 // pred_fallthru
      _
    %p349 = scmp.lt.s32.totalorder %s18, 2
    // Predicated region
    $region57: #{_lambda_.1} parent=5 // pred_check
      %p350 = pneg %p349
    $region58: #{_lambda_.1} parent=5 // pred_check_branch
      %352 = sbr.rel (%p350) target = $region60
    $region59: #{_lambda_.1} parent=5 // pred_region
      // Predicated region
      $region61: #{_lambda_.1} parent=59 // pred_check
        %p353 = pneg %p38
      $region62: #{_lambda_.1} parent=59 // pred_check_branch
        %355 = sbr.rel (%p353) target = $region64
      $region63: #{_lambda_.1} parent=59 // pred_region
        %p356 = scmp.lt.s32.totalorder %s18, 1
        %s357 = scalar_select %p356, %s18, 1
        %s358 = smul.addr %s357, 3
        %s359 = smul.addr %s358, 4
        %s360 = scalar_lea.vmem %s0, %s359
      $region64: #{_lambda_.1} parent=59 // pred_fallthru
        _
    $region60: #{_lambda_.1} parent=5 // pred_fallthru
      _
    %p361 = scmp.le.s32.totalorder 1, %s18
    %p362 = scmp.lt.s32.totalorder %s18, 3
    %p363 = pnand %p361, %p362
    %p364 = pneg %p363
    // Predicated region
    $region65: #{_lambda_.1} parent=5 // pred_check
      _
    $region66: #{_lambda_.1} parent=5 // pred_check_branch
      %366 = sbr.rel (%p363) target = $region68
    $region67: #{_lambda_.1} parent=5 // pred_region
      %s367 = ssub.s32 %s18, 1
      %p368 = scmp.lt.s32.totalorder %s23, 1
      %s369 = scalar_select %p368, %s23, 1
      %s370 = smul.addr %s369, 3
      %s371 = smul.addr %s370, 4
      %s372 = scalar_lea.vmem %s0, %s371
      %p373 = pneg %p44
      %p374 = pneg %p41
      %p375 = pneg %p65
      %p376 = pneg %p62
      %p377 = pneg %p86
      %p378 = pneg %p83
      %p379 = pneg %p107
      %p380 = pneg %p104
      %p381 = pneg %p128
      %p382 = pneg %p125
      %p383 = pneg %p149
      %p384 = pneg %p146
      %p385 = pneg %p170
      %p386 = pneg %p167
      %p387 = pneg %p191
      %p388 = pneg %p188
      %p389 = pneg %p212
      %p390 = pneg %p209
      %p391 = pneg %p233
      %p392 = pneg %p230
      %p393 = pneg %p254
      %p394 = pneg %p251
      %p395 = pneg %p275
      %p396 = pneg %p272
      %p397 = pneg %p301
      %p398 = pneg %p298
      %p399 = scmp.lt.s32.totalorder %s23, 1
      %s400 = scalar_select %p399, %s23, 1
      %s401 = smul.addr %s400, 3
      %s402 = smul.addr %s401, 8
      %s403 = scalar_lea.vmem %s12, %s402
      %p404 = scmp.lt.s32.totalorder %s23, 1
      %s405 = scalar_select %p404, %s23, 1
      %s406 = smul.addr %s405, 3
      %s407 = smul.addr %s406, 4
      %s408 = scalar_lea.vmem %s0, %s407
      %p409 = scmp.lt.s32.totalorder %s23, 1
      %s410 = scalar_select %p409, %s23, 1
      %s411 = smul.addr %s410, 3
      %s412 = smul.addr %s411, 8
      %s413 = scalar_lea.vmem %s12, %s412
      %vm415 = vcmask 994304
      %416 = vst.msk [vmem:[#allocation2] sm:$0xf] %vm415, 0
      %vm417 = vcmask 404480
      %418 = vst.msk [vmem:[#allocation3] sm:$0xf] %vm417, 0
      %vm419 = vcmask 207872
      %420 = vst.msk [vmem:[#allocation4] sm:$0xf] %vm419, 0
      %vm421 = vcmask 134144
      %422 = vst.msk [vmem:[#allocation5] sm:$0xf] %vm421, 0
      %423 = vst.msk [vmem:[#allocation6] sm:$0xf] %vm419, 0
      %424 = vst.msk [vmem:[#allocation7] sm:$0xf] %vm417, 0
      %425 = vst.msk [vmem:[#allocation8] sm:$0xf] %vm415, 0
      %426 = vst [vmem:[#allocation9] sm:$0xff] 0
      %vm427 = vcmask 863232
      %428 = vst.msk [vmem:[#allocation9 + $0x8] sm:$0xf] %vm427, 0
      %429 = vst [vmem:[#allocation10] sm:$0xff] 0
      %vm430 = vcmask 1043456
      %vm431 = vcmask 310276
      %vm432 = vmor %vm431, %vm430
      %433 = vst.msk [vmem:[#allocation10 + $0x8] sm:$0xff] %vm432, 0
      %v434 = vld [vmem:[%s408] sm:$0xff]
      %v435 = vld [vmem:[%s408 + $0x8] sm:$0xf]
      %v438 = vunpack.c.l.b16 %v434
      %v439 = vunpack.c.h.b16 %v434
      %v440 = vunpack.c.l.b16 %v435
      %v441 = vpack.c.b16 %v438, %v438
      %v442 = vpack.c.b16 %v439, %v439
      %v443 = vpack.c.b16 %v440, %v440
      %444 = vrot.lane.b32.xlu0 %v441, 127
      %v445 = vpop.permute.xlu0 %444
      %446 = vrot.lane.b32.xlu0 %v442, 127
      %v447 = vpop.permute.xlu0 %446
      %448 = vrot.lane.b32.xlu0 %v443, 127
      %v449 = vpop.permute.xlu0 %448
      %vm450 = vcmask 1039360
      %v451 = vsel %vm450, %v445, %v447
      %v452 = vsel %vm450, %v447, %v449
      %453 = vrot.lane.b32.xlu0 %v441, 126
      %v454 = vpop.permute.xlu0 %453
      %455 = vrot.lane.b32.xlu0 %v442, 126
      %v456 = vpop.permute.xlu0 %455
      %457 = vrot.lane.b32.xlu0 %v443, 126
      %v458 = vpop.permute.xlu0 %457
      %vm459 = vcmask 1031168
      %v460 = vsel %vm459, %v454, %v456
      %v461 = vsel %vm459, %v456, %v458
      %462 = vrot.lane.b32.xlu0 %v441, 110
      %v463 = vpop.permute.xlu0 %462
      %464 = vrot.lane.b32.xlu0 %v442, 110
      %v465 = vpop.permute.xlu0 %464
      %466 = vrot.lane.b32.xlu0 %v443, 110
      %v467 = vpop.permute.xlu0 %466
      %vm468 = vcmask 900096
      %v469 = vsel %vm468, %v463, %v465
      %v470 = vsel %vm468, %v465, %v467
      %471 = vrot.lane.b32.xlu0 %v441, 109
      %v472 = vpop.permute.xlu0 %471
      %473 = vrot.lane.b32.xlu0 %v442, 109
      %v474 = vpop.permute.xlu0 %473
      %475 = vrot.lane.b32.xlu0 %v443, 109
      %v476 = vpop.permute.xlu0 %475
      %vm477 = vcmask 891904
      %v478 = vsel %vm477, %v472, %v474
      %v479 = vsel %vm477, %v474, %v476
      %480 = vrot.lane.b32.xlu0 %v441, 108
      %v481 = vpop.permute.xlu0 %480
      %482 = vrot.lane.b32.xlu0 %v442, 108
      %v483 = vpop.permute.xlu0 %482
      %484 = vrot.lane.b32.xlu0 %v443, 108
      %v485 = vpop.permute.xlu0 %484
      %vm486 = vcmask 883712
      %v487 = vsel %vm486, %v481, %v483
      %v488 = vsel %vm486, %v483, %v485
      %489 = vrot.lane.b32.xlu0 %v441, 92
      %v490 = vpop.permute.xlu0 %489
      %491 = vrot.lane.b32.xlu0 %v442, 92
      %v492 = vpop.permute.xlu0 %491
      %493 = vrot.lane.b32.xlu0 %v443, 92
      %v494 = vpop.permute.xlu0 %493
      %vm495 = vcmask 752640
      %v496 = vsel %vm495, %v490, %v492
      %v497 = vsel %vm495, %v492, %v494
      %498 = vrot.lane.b32.xlu0 %v441, 91
      %v499 = vpop.permute.xlu0 %498
      %500 = vrot.lane.b32.xlu0 %v442, 91
      %v501 = vpop.permute.xlu0 %500
      %502 = vrot.lane.b32.xlu0 %v443, 91
      %v503 = vpop.permute.xlu0 %502
      %vm504 = vcmask 744448
      %v505 = vsel %vm504, %v499, %v501
      %v506 = vsel %vm504, %v501, %v503
      %507 = vrot.lane.b32.xlu0 %v441, 90
      %v508 = vpop.permute.xlu0 %507
      %509 = vrot.lane.b32.xlu0 %v442, 90
      %v510 = vpop.permute.xlu0 %509
      %511 = vrot.lane.b32.xlu0 %v443, 90
      %v512 = vpop.permute.xlu0 %511
      %vm513 = vcmask 736256
      %v514 = vsel %vm513, %v508, %v510
      %v515 = vsel %vm513, %v510, %v512
      %v518 = vsel %vm430, %v441, %v451
      %v522 = vsel %vm430, %v442, %v452
      %v526 = vsel %vm430, %v443, %v449
      %v530 = vsel %vm430, %v460, %v469
      %v534 = vsel %vm430, %v461, %v470
      %v538 = vsel %vm430, %v458, %v467
      %v542 = vsel %vm430, %v478, %v487
      %v546 = vsel %vm430, %v479, %v488
      %v550 = vsel %vm430, %v476, %v485
      %v554 = vsel %vm430, %v496, %v505
      %v558 = vsel %vm430, %v497, %v506
      %v562 = vsel %vm430, %v494, %v503
      %v564 = vld [vmem:[%s1] sm:$0xf]
      %v565 = vld [vmem:[%s2] sm:$0xff]
      %567 = vset.pattern.permute.xlu0 0
      %568 = vperm.xlu0 %567, %v565
      %v569 = vpop.permute.xlu0 %568
      %vm571 = vcmask 588800
      %v573 = vsel %vm571, %v564, 0
      %v576 = vsel %vm430, %v514, 0
      %v579 = vsel %vm430, %v515, 0
      %v582 = vsel %vm430, %v512, 0
      %584 = vmatprep.subr.bf16.mxu0 %v522
      %585 = vmatpush1.bf16.msra.mxu0 %v518
      %586 = vmatprep.subr.bf16.mxu0 %v534
      %587 = vmatpush1.bf16.msra.mxu0 %v530
      %588 = vmatprep.subr.bf16.mxu0 %v546
      %589 = vmatpush1.bf16.msra.mxu0 %v542
      %590 = vmatprep.subr.bf16.mxu0 %v558
      %591 = vmatpush1.bf16.msra.mxu0 %v554
      %592 = vmatprep.subr.bf16.mxu0 %v579
      %593 = vmatpush1.bf16.msra.mxu0 %v576
      %594 = vmatprep.subr.bf16.mxu0 0
      %595 = vmatpush1.bf16.msra.mxu0 0
      %596 = vmatprep.subr.bf16.mxu0 0
      %597 = vmatpush1.bf16.msra.mxu0 0
      %598 = vmatprep.subr.bf16.mxu0 0
      %599 = vmatpush1.bf16.msra.mxu0 0
      %600 = vmatprep.subr.bf16.mxu0 0
      %601 = vmatpush1.bf16.msra.mxu0 0
      %602 = vmatprep.subr.bf16.mxu0 0
      %603 = vmatpush1.bf16.msra.mxu0 0
      %604 = vmatprep.subr.bf16.mxu0 0
      %605 = vmatpush1.bf16.msra.mxu0 0
      %606 = vmatprep.subr.bf16.mxu0 0
      %607 = vmatpush1.bf16.msra.mxu0 0
      %608 = vmatprep.subr.bf16.mxu0 0
      %609 = vmatpush1.bf16.msra.mxu0 0
      %610 = vmatprep.subr.bf16.mxu0 0
      %611 = vmatpush1.bf16.msra.mxu0 0
      %612 = vmatprep.subr.bf16.mxu0 0
      %613 = vmatpush1.bf16.msra.mxu0 0
      %614 = vmatprep.subr.bf16.mxu0 0
      %615 = vmatpush1.bf16.msra.mxu0 0
      %616 = vmatprep.mubr.bf16.mxu0 0
      %617 = vmatmul.mubr.bf16.gmra.mrb[0].mxu0 %v573
      %v618 = vpop.f32.mrb[0].mxu0
      %v619 = vadd.f32 %v569, %v618
      %v620 = vpop.f32.mrb[0].mxu0
      %v621 = vadd.f32 %v569, %v620
      %v622 = vpop.f32.mrb[0].mxu0
      %v623 = vpop.f32.mrb[0].mxu0
      %624 = vdwg.mxu0
      %625 = vmatprep.subr.bf16.mxu0 0
      %626 = vmatpush1.bf16.msra.mxu0 %v526
      %627 = vmatprep.subr.bf16.mxu0 0
      %628 = vmatpush1.bf16.msra.mxu0 %v538
      %629 = vmatprep.subr.bf16.mxu0 0
      %630 = vmatpush1.bf16.msra.mxu0 %v550
      %631 = vmatprep.subr.bf16.mxu0 0
      %632 = vmatpush1.bf16.msra.mxu0 %v562
      %633 = vmatprep.subr.bf16.mxu0 0
      %634 = vmatpush1.bf16.msra.mxu0 %v582
      %635 = vmatprep.subr.bf16.mxu0 0
      %636 = vmatpush1.bf16.msra.mxu0 0
      %637 = vmatprep.subr.bf16.mxu0 0
      %638 = vmatpush1.bf16.msra.mxu0 0
      %639 = vmatprep.subr.bf16.mxu0 0
      %640 = vmatpush1.bf16.msra.mxu0 0
      %641 = vmatprep.subr.bf16.mxu0 0
      %642 = vmatpush1.bf16.msra.mxu0 0
      %643 = vmatprep.subr.bf16.mxu0 0
      %644 = vmatpush1.bf16.msra.mxu0 0
      %645 = vmatprep.subr.bf16.mxu0 0
      %646 = vmatpush1.bf16.msra.mxu0 0
      %647 = vmatprep.subr.bf16.mxu0 0
      %648 = vmatpush1.bf16.msra.mxu0 0
      %649 = vmatprep.subr.bf16.mxu0 0
      %650 = vmatpush1.bf16.msra.mxu0 0
      %651 = vmatprep.subr.bf16.mxu0 0
      %652 = vmatpush1.bf16.msra.mxu0 0
      %653 = vmatprep.subr.bf16.mxu0 0
      %654 = vmatpush1.bf16.msra.mxu0 0
      %655 = vmatprep.subr.bf16.mxu0 0
      %656 = vmatpush1.bf16.msra.mxu0 0
      %657 = vmatprep.mubr.bf16.mxu0 0
      %658 = vmatmul.mubr.bf16.gmra.mrb[0].mxu0 %v573
      %v659 = vpop.f32.mrb[0].mxu0
      %v660 = vadd.f32 %v569, %v659
      %v661 = vpop.f32.mrb[0].mxu0
      %v662 = vpop.f32.mrb[0].mxu0
      %v663 = vpop.f32.mrb[0].mxu0
      %664 = vdwg.mxu0
      %v665 = vmax.f32 %v619, 0.0
      %v666 = vmax.f32 %v621, 0.0
      %v667 = vmax.f32 %v660, 0.0
      %v668 = vpack.c.bf16 %v665, %v665
      %v669 = vpack.c.bf16 %v666, %v666
      %v670 = vpack.c.bf16 %v667, %v667
      %v671 = vld [vmem:[%s4] sm:$0xf]
      %v672 = vld [vmem:[%s4 + $0x4] sm:$0xf]
      %v673 = vld [vmem:[%s4 + $0x8] sm:$0xf]
      %v674 = vld [vmem:[%s4 + $0xc] sm:$0xf]
      %v675 = vld [vmem:[%s4 + $0x10] sm:$0xf]
      %v676 = vld [vmem:[%s4 + $0x14] sm:$0xf]
      %v677 = vld [vmem:[%s4 + $0x18] sm:$0xf]
      %v678 = vld [vmem:[%s4 + $0x1c] sm:$0xf]
      %v679 = vld [vmem:[%s4 + $0x20] sm:$0xf]
      %v680 = vld [vmem:[%s4 + $0x24] sm:$0xf]
      %v681 = vld [vmem:[%s4 + $0x28] sm:$0xf]
      %v682 = vld [vmem:[%s4 + $0x2c] sm:$0xf]
      %v683 = vld [vmem:[%s4 + $0x30] sm:$0xf]
      %v684 = vld [vmem:[%s4 + $0x34] sm:$0xf]
      %v685 = vld [vmem:[%s4 + $0x38] sm:$0xf]
      %v686 = vld [vmem:[%s4 + $0x3c] sm:$0xf]
      %v687 = vld [vmem:[%s4 + $0x40] sm:$0xf]
      %v688 = vld [vmem:[%s4 + $0x44] sm:$0xf]
      %v689 = vld [vmem:[%s4 + $0x48] sm:$0xf]
      %v690 = vld [vmem:[%s4 + $0x4c] sm:$0xf]
      %v691 = vld [vmem:[%s4 + $0x50] sm:$0xf]
      %v692 = vld [vmem:[%s4 + $0x54] sm:$0xf]
      %v693 = vld [vmem:[%s4 + $0x58] sm:$0xf]
      %v694 = vld [vmem:[%s4 + $0x5c] sm:$0xf]
      %v695 = vld [vmem:[%s4 + $0x60] sm:$0xf]
      %v696 = vld [vmem:[%s4 + $0x64] sm:$0xf]
      %v697 = vld [vmem:[%s4 + $0x68] sm:$0xf]
      %v698 = vld [vmem:[%s4 + $0x6c] sm:$0xf]
      %v699 = vld [vmem:[%s4 + $0x70] sm:$0xf]
      %v700 = vld [vmem:[%s4 + $0x74] sm:$0xf]
      %v701 = vld [vmem:[%s4 + $0x78] sm:$0xf]
      %v702 = vld [vmem:[%s4 + $0x7c] sm:$0xf]
      %v703 = vld [vmem:[%s4 + $0x80] sm:$0xf]
      %v704 = vld [vmem:[%s4 + $0x84] sm:$0xf]
      %v705 = vld [vmem:[%s4 + $0x88] sm:$0xf]
      %v706 = vld [vmem:[%s4 + $0x8c] sm:$0xf]
      %v707 = vld [vmem:[%s4 + $0x90] sm:$0xf]
      %v708 = vld [vmem:[%s4 + $0x94] sm:$0xf]
      %v709 = vld [vmem:[%s4 + $0x98] sm:$0xf]
      %v710 = vld [vmem:[%s4 + $0x9c] sm:$0xf]
      %v711 = vld [vmem:[%s4 + $0xa0] sm:$0x3]
      %v753 = vunpack.c.l.b16 %v671
      %v754 = vunpack.c.l.b16 %v672
      %v755 = vunpack.c.l.b16 %v673
      %v756 = vunpack.c.l.b16 %v674
      %v757 = vunpack.c.l.b16 %v675
      %v758 = vunpack.c.l.b16 %v676
      %v759 = vunpack.c.l.b16 %v677
      %v760 = vunpack.c.l.b16 %v678
      %v761 = vunpack.c.l.b16 %v679
      %v762 = vunpack.c.l.b16 %v680
      %v763 = vunpack.c.l.b16 %v681
      %v764 = vunpack.c.l.b16 %v682
      %v765 = vunpack.c.l.b16 %v683
      %v766 = vunpack.c.l.b16 %v684
      %v767 = vunpack.c.l.b16 %v685
      %v768 = vunpack.c.l.b16 %v686
      %v769 = vunpack.c.l.b16 %v687
      %v770 = vunpack.c.l.b16 %v688
      %v771 = vunpack.c.l.b16 %v689
      %v772 = vunpack.c.l.b16 %v690
      %v773 = vunpack.c.l.b16 %v691
      %v774 = vunpack.c.l.b16 %v692
      %v775 = vunpack.c.l.b16 %v693
      %v776 = vunpack.c.l.b16 %v694
      %v777 = vunpack.c.l.b16 %v695
      %v778 = vunpack.c.l.b16 %v696
      %v779 = vunpack.c.l.b16 %v697
      %v780 = vunpack.c.l.b16 %v698
      %v781 = vunpack.c.l.b16 %v699
      %v782 = vunpack.c.l.b16 %v700
      %v783 = vunpack.c.l.b16 %v701
      %v784 = vunpack.c.l.b16 %v702
      %v785 = vunpack.c.l.b16 %v703
      %v786 = vunpack.c.l.b16 %v704
      %v787 = vunpack.c.l.b16 %v705
      %v788 = vunpack.c.l.b16 %v706
      %v789 = vunpack.c.l.b16 %v707
      %v790 = vunpack.c.l.b16 %v708
      %v791 = vunpack.c.l.b16 %v709
      %v792 = vunpack.c.l.b16 %v710
      %v793 = vunpack.c.l.b16 %v711
      %v794 = vpack.c.b16 %v754, %v753
      %v795 = vpack.c.b16 %v756, %v755
      %v796 = vpack.c.b16 %v758, %v757
      %v797 = vpack.c.b16 %v760, %v759
      %v798 = vpack.c.b16 %v762, %v761
      %v799 = vpack.c.b16 %v764, %v763
      %v800 = vpack.c.b16 %v766, %v765
      %v801 = vpack.c.b16 %v768, %v767
      %v802 = vpack.c.b16 %v770, %v769
      %v803 = vpack.c.b16 %v772, %v771
      %v804 = vpack.c.b16 %v774, %v773
      %v805 = vpack.c.b16 %v776, %v775
      %v806 = vpack.c.b16 %v778, %v777
      %v807 = vpack.c.b16 %v780, %v779
      %v808 = vpack.c.b16 %v782, %v781
      %v809 = vpack.c.b16 %v784, %v783
      %v810 = vpack.c.b16 %v786, %v785
      %v811 = vpack.c.b16 %v788, %v787
      %v812 = vpack.c.b16 %v790, %v789
      %v813 = vpack.c.b16 %v792, %v791
      %v814 = vpack.c.b16 %v793, %v793
      %vm835 = vcmask 556032
      %v837 = vsel %vm835, %v670, 0
      %vm839 = vcmask 1041408
      %v841 = vsel %vm839, %v814, 0
      %843 = vmatprep.subr.bf16.mxu0 0
      %844 = vmatpush1.bf16.msra.mxu0 %v794
      %845 = vmatprep.subr.bf16.mxu0 0
      %846 = vmatpush1.bf16.msra.mxu0 %v795
      %847 = vmatprep.subr.bf16.mxu0 0
      %848 = vmatpush1.bf16.msra.mxu0 %v796
      %849 = vmatprep.subr.bf16.mxu0 0
      %850 = vmatpush1.bf16.msra.mxu0 %v797
      %851 = vmatprep.subr.bf16.mxu0 0
      %852 = vmatpush1.bf16.msra.mxu0 %v798
      %853 = vmatprep.subr.bf16.mxu0 0
      %854 = vmatpush1.bf16.msra.mxu0 %v799
      %855 = vmatprep.subr.bf16.mxu0 0
      %856 = vmatpush1.bf16.msra.mxu0 %v800
      %857 = vmatprep.subr.bf16.mxu0 0
      %858 = vmatpush1.bf16.msra.mxu0 %v801
      %859 = vmatprep.subr.bf16.mxu0 0
      %860 = vmatpush1.bf16.msra.mxu0 %v802
      %861 = vmatprep.subr.bf16.mxu0 0
      %862 = vmatpush1.bf16.msra.mxu0 %v803
      %863 = vmatprep.subr.bf16.mxu0 0
      %864 = vmatpush1.bf16.msra.mxu0 %v804
      %865 = vmatprep.subr.bf16.mxu0 0
      %866 = vmatpush1.bf16.msra.mxu0 %v805
      %867 = vmatprep.subr.bf16.mxu0 0
      %868 = vmatpush1.bf16.msra.mxu0 %v806
      %869 = vmatprep.subr.bf16.mxu0 0
      %870 = vmatpush1.bf16.msra.mxu0 %v807
      %871 = vmatprep.subr.bf16.mxu0 0
      %872 = vmatpush1.bf16.msra.mxu0 %v808
      %873 = vmatprep.subr.bf16.mxu0 0
      %874 = vmatpush1.bf16.msra.mxu0 %v809
      %875 = vmatprep.mubr.bf16.mxu0 %v669
      %876 = vmatmul.mubr.bf16.gmra.mrb[0].mxu0 %v668
      %v877 = vpop.f32.mrb[0].mxu0
      %v878 = vadd.f32 0.0, %v877
      %v879 = vpop.f32.mrb[0].mxu0
      %v880 = vpop.f32.mrb[0].mxu0
      %v881 = vpop.f32.mrb[0].mxu0
      %882 = vdwg.mxu0
      %883 = vmatprep.subr.bf16.mxu0 0
      %884 = vmatpush1.bf16.msra.mxu0 %v810
      %885 = vmatprep.subr.bf16.mxu0 0
      %886 = vmatpush1.bf16.msra.mxu0 %v811
      %887 = vmatprep.subr.bf16.mxu0 0
      %888 = vmatpush1.bf16.msra.mxu0 %v812
      %889 = vmatprep.subr.bf16.mxu0 0
      %890 = vmatpush1.bf16.msra.mxu0 %v813
      %891 = vmatprep.subr.bf16.mxu0 0
      %892 = vmatpush1.bf16.msra.mxu0 %v841
      %893 = vmatprep.subr.bf16.mxu0 0
      %894 = vmatpush1.bf16.msra.mxu0 0
      %895 = vmatprep.subr.bf16.mxu0 0
      %896 = vmatpush1.bf16.msra.mxu0 0
      %897 = vmatprep.subr.bf16.mxu0 0
      %898 = vmatpush1.bf16.msra.mxu0 0
      %899 = vmatprep.subr.bf16.mxu0 0
      %900 = vmatpush1.bf16.msra.mxu0 0
      %901 = vmatprep.subr.bf16.mxu0 0
      %902 = vmatpush1.bf16.msra.mxu0 0
      %903 = vmatprep.subr.bf16.mxu0 0
      %904 = vmatpush1.bf16.msra.mxu0 0
      %905 = vmatprep.subr.bf16.mxu0 0
      %906 = vmatpush1.bf16.msra.mxu0 0
      %907 = vmatprep.subr.bf16.mxu0 0
      %908 = vmatpush1.bf16.msra.mxu0 0
      %909 = vmatprep.subr.bf16.mxu0 0
      %910 = vmatpush1.bf16.msra.mxu0 0
      %911 = vmatprep.subr.bf16.mxu0 0
      %912 = vmatpush1.bf16.msra.mxu0 0
      %913 = vmatprep.subr.bf16.mxu0 0
      %914 = vmatpush1.bf16.msra.mxu0 0
      %915 = vmatprep.mubr.bf16.mxu0 0
      %916 = vmatmul.mubr.bf16.gmra.mrb[0].mxu0 %v837
      %v917 = vpop.f32.mrb[0].mxu0
      %v918 = vadd.f32 %v878, %v917
      %v919 = vpop.f32.mrb[0].mxu0
      %v920 = vpop.f32.mrb[0].mxu0
      %v921 = vpop.f32.mrb[0].mxu0
      %922 = vdwg.mxu0
      %v923 = vpack.c.bf16 %v918, %v918
      %v925 = vunpack.c.l.b16 %v923
      %v926 = vpack.c.b16 %v925, %v925
      %927 = vrot.lane.b32.xlu0 %v926, 11
      %v928 = vpop.permute.xlu0 %927
      %vm930 = vcmask 904280
      %931 = vst.msk [vmem:[#allocation2] sm:$0xf] %vm930, %v928
      %v932 = vld [vmem:[#allocation2] sm:$0xf]
      %v934 = vunpack.c.l.b16 %v932
      %v935 = vpack.c.b16 %v934, %v934
      %936 = vrot.lane.b32.xlu0 %v935, 127
      %v937 = vpop.permute.xlu0 %936
      %938 = vrot.lane.b32.xlu0 %v935, 126
      %v939 = vpop.permute.xlu0 %938
      %940 = vrot.lane.b32.xlu0 %v935, 118
      %v941 = vpop.permute.xlu0 %940
      %942 = vrot.lane.b32.xlu0 %v935, 117
      %v943 = vpop.permute.xlu0 %942
      %944 = vrot.lane.b32.xlu0 %v935, 116
      %v945 = vpop.permute.xlu0 %944
      %946 = vrot.lane.b32.xlu0 %v935, 108
      %v947 = vpop.permute.xlu0 %946
      %948 = vrot.lane.b32.xlu0 %v935, 107
      %v949 = vpop.permute.xlu0 %948
      %950 = vrot.lane.b32.xlu0 %v935, 106
      %v951 = vpop.permute.xlu0 %950
      %v954 = vsel %vm430, %v932, %v937
      %v958 = vsel %vm430, %v939, %v941
      %v962 = vsel %vm430, %v943, %v945
      %v966 = vsel %vm430, %v947, %v949
      %v968 = vld [vmem:[%s1] sm:$0xff]
      %v969 = vld [vmem:[%s2] sm:$0xff]
      %971 = vset.pattern.permute.xlu0 1
      %972 = vperm.xlu0 %971, %v969
      %v973 = vpop.permute.xlu0 %972
      %v976 = vunpack.c.l.b16 %v968
      %v977 = vunpack.c.h.b16 %v968
      %v978 = vpack.c.b16 %v976, %v976
      %v979 = vpack.c.b16 %v977, %v977
      %980 = vrot.lane.b32.xlu0 %v978, 56
      %v981 = vpop.permute.xlu0 %980
      %982 = vrot.lane.b32.xlu0 %v979, 56
      %v983 = vpop.permute.xlu0 %982
      %vm984 = vcmask 457728
      %v985 = vsel %vm984, %v981, %v983
      %v987 = vsel %vm571, %v985, 0
      %v990 = vsel %vm430, %v951, 0
      %992 = vmatprep.subr.bf16.mxu0 0
      %993 = vmatpush1.bf16.msra.mxu0 %v954
      %994 = vmatprep.subr.bf16.mxu0 0
      %995 = vmatpush1.bf16.msra.mxu0 %v958
      %996 = vmatprep.subr.bf16.mxu0 0
      %997 = vmatpush1.bf16.msra.mxu0 %v962
      %998 = vmatprep.subr.bf16.mxu0 0
      %999 = vmatpush1.bf16.msra.mxu0 %v966
      %1000 = vmatprep.subr.bf16.mxu0 0
      %1001 = vmatpush1.bf16.msra.mxu0 %v990
      %1002 = vmatprep.subr.bf16.mxu0 0
      %1003 = vmatpush1.bf16.msra.mxu0 0
      %1004 = vmatprep.subr.bf16.mxu0 0
      %1005 = vmatpush1.bf16.msra.mxu0 0
      %1006 = vmatprep.subr.bf16.mxu0 0
      %1007 = vmatpush1.bf16.msra.mxu0 0
      %1008 = vmatprep.subr.bf16.mxu0 0
      %1009 = vmatpush1.bf16.msra.mxu0 0
      %1010 = vmatprep.subr.bf16.mxu0 0
      %1011 = vmatpush1.bf16.msra.mxu0 0
      %1012 = vmatprep.subr.bf16.mxu0 0
      %1013 = vmatpush1.bf16.msra.mxu0 0
      %1014 = vmatprep.subr.bf16.mxu0 0
      %1015 = vmatpush1.bf16.msra.mxu0 0
      %1016 = vmatprep.subr.bf16.mxu0 0
      %1017 = vmatpush1.bf16.msra.mxu0 0
      %1018 = vmatprep.subr.bf16.mxu0 0
      %1019 = vmatpush1.bf16.msra.mxu0 0
      %1020 = vmatprep.subr.bf16.mxu0 0
      %1021 = vmatpush1.bf16.msra.mxu0 0
      %1022 = vmatprep.subr.bf16.mxu0 0
      %1023 = vmatpush1.bf16.msra.mxu0 0
      %1024 = vmatprep.mubr.bf16.mxu0 0
      %1025 = vmatmul.mubr.bf16.gmra.mrb[0].mxu0 %v987
      %v1026 = vpop.f32.mrb[0].mxu0
      %v1027 = vadd.f32 %v973, %v1026
      %v1028 = vpop.f32.mrb[0].mxu0
      %v1029 = vpop.f32.mrb[0].mxu0
      %v1030 = vpop.f32.mrb[0].mxu0
      %1031 = vdwg.mxu0
      %v1032 = vmax.f32 %v1027, 0.0
      %v1033 = vpack.c.bf16 %v1032, %v1032
      %v1034 = vld [vmem:[%s5] sm:$0xf]
      %v1035 = vld [vmem:[%s5 + $0x4] sm:$0xf]
      %v1036 = vld [vmem:[%s5 + $0x8] sm:$0xf]
      %v1037 = vld [vmem:[%s5 + $0xc] sm:$0xf]
      %v1038 = vld [vmem:[%s5 + $0x10] sm:$0xf]
      %v1039 = vld [vmem:[%s5 + $0x14] sm:$0xf]
      %v1040 = vld [vmem:[%s5 + $0x18] sm:$0xf]
      %v1041 = vld [vmem:[%s5 + $0x1c] sm:$0xf]
      %v1042 = vld [vmem:[%s5 + $0x20] sm:$0xf]
      %v1043 = vld [vmem:[%s5 + $0x24] sm:$0xf]
      %v1044 = vld [vmem:[%s5 + $0x28] sm:$0xf]
      %v1045 = vld [vmem:[%s5 + $0x2c] sm:$0xf]
      %v1046 = vld [vmem:[%s5 + $0x30] sm:$0x3]
      %v1060 = vunpack.c.l.b16 %v1034
      %v1061 = vunpack.c.l.b16 %v1035
      %v1062 = vunpack.c.l.b16 %v1036
      %v1063 = vunpack.c.l.b16 %v1037
      %v1064 = vunpack.c.l.b16 %v1038
      %v1065 = vunpack.c.l.b16 %v1039
      %v1066 = vunpack.c.l.b16 %v1040
      %v1067 = vunpack.c.l.b16 %v1041
      %v1068 = vunpack.c.l.b16 %v1042
      %v1069 = vunpack.c.l.b16 %v1043
      %v1070 = vunpack.c.l.b16 %v1044
      %v1071 = vunpack.c.l.b16 %v1045
      %v1072 = vunpack.c.l.b16 %v1046
      %v1073 = vpack.c.b16 %v1061, %v1060
      %v1074 = vpack.c.b16 %v1063, %v1062
      %v1075 = vpack.c.b16 %v1065, %v1064
      %v1076 = vpack.c.b16 %v1067, %v1066
      %v1077 = vpack.c.b16 %v1069, %v1068
      %v1078 = vpack.c.b16 %v1071, %v1070
      %v1079 = vpack.c.b16 %v1072, %v1072
      %vm1086 = vcmask 818176
      %v1088 = vsel %vm1086, %v1033, 0
      %v1091 = vsel %vm839, %v1079, 0
      %1093 = vmatprep.subr.bf16.mxu0 0
      %1094 = vmatpush1.bf16.msra.mxu0 %v1073
      %1095 = vmatprep.subr.bf16.mxu0 0
      %1096 = vmatpush1.bf16.msra.mxu0 %v1074
      %1097 = vmatprep.subr.bf16.mxu0 0
      %1098 = vmatpush1.bf16.msra.mxu0 %v1075
      %1099 = vmatprep.subr.bf16.mxu0 0
      %1100 = vmatpush1.bf16.msra.mxu0 %v1076
      %1101 = vmatprep.subr.bf16.mxu0 0
      %1102 = vmatpush1.bf16.msra.mxu0 %v1077
      %1103 = vmatprep.subr.bf16.mxu0 0
      %1104 = vmatpush1.bf16.msra.mxu0 %v1078
      %1105 = vmatprep.subr.bf16.mxu0 0
      %1106 = vmatpush1.bf16.msra.mxu0 %v1091
      %1107 = vmatprep.subr.bf16.mxu0 0
      %1108 = vmatpush1.bf16.msra.mxu0 0
      %1109 = vmatprep.subr.bf16.mxu0 0
      %1110 = vmatpush1.bf16.msra.mxu0 0
      %1111 = vmatprep.subr.bf16.mxu0 0
      %1112 = vmatpush1.bf16.msra.mxu0 0
      %1113 = vmatprep.subr.bf16.mxu0 0
      %1114 = vmatpush1.bf16.msra.mxu0 0
      %1115 = vmatprep.subr.bf16.mxu0 0
      %1116 = vmatpush1.bf16.msra.mxu0 0
      %1117 = vmatprep.subr.bf16.mxu0 0
      %1118 = vmatpush1.bf16.msra.mxu0 0
      %1119 = vmatprep.subr.bf16.mxu0 0
      %1120 = vmatpush1.bf16.msra.mxu0 0
      %1121 = vmatprep.subr.bf16.mxu0 0
      %1122 = vmatpush1.bf16.msra.mxu0 0
      %1123 = vmatprep.subr.bf16.mxu0 0
      %1124 = vmatpush1.bf16.msra.mxu0 0
      %1125 = vmatprep.mubr.bf16.mxu0 0
      %1126 = vmatmul.mubr.bf16.gmra.mrb[0].mxu0 %v1088
      %v1127 = vpop.f32.mrb[0].mxu0
      %v1128 = vadd.f32 0.0, %v1127
      %v1129 = vpop.f32.mrb[0].mxu0
      %v1130 = vpop.f32.mrb[0].mxu0
      %v1131 = vpop.f32.mrb[0].mxu0
      %1132 = vdwg.mxu0
      %v1133 = vpack.c.bf16 %v1128, %v1128
      %v1135 = vunpack.c.l.b16 %v1133
      %v1136 = vpack.c.b16 %v1135, %v1135
      %1137 = vrot.lane.b32.xlu0 %v1136, 7
      %v1138 = vpop.permute.xlu0 %1137
      %vm1140 = vcmask 347192
      %1141 = vst.msk [vmem:[#allocation3] sm:$0xf] %vm1140, %v1138
      %v1142 = vld [vmem:[#allocation3] sm:$0xf]
      %v1144 = vunpack.c.l.b16 %v1142
      %v1145 = vpack.c.b16 %v1144, %v1144
      %1146 = vrot.lane.b32.xlu0 %v1145, 127
      %v1147 = vpop.permute.xlu0 %1146
      %1148 = vrot.lane.b32.xlu0 %v1145, 126
      %v1149 = vpop.permute.xlu0 %1148
      %1150 = vrot.lane.b32.xlu0 %v1145, 122
      %v1151 = vpop.permute.xlu0 %1150
      %1152 = vrot.lane.b32.xlu0 %v1145, 121
      %v1153 = vpop.permute.xlu0 %1152
      %1154 = vrot.lane.b32.xlu0 %v1145, 120
      %v1155 = vpop.permute.xlu0 %1154
      %1156 = vrot.lane.b32.xlu0 %v1145, 116
      %v1157 = vpop.permute.xlu0 %1156
      %1158 = vrot.lane.b32.xlu0 %v1145, 115
      %v1159 = vpop.permute.xlu0 %1158
      %1160 = vrot.lane.b32.xlu0 %v1145, 114
      %v1161 = vpop.permute.xlu0 %1160
      %v1164 = vsel %vm430, %v1142, %v1147
      %v1168 = vsel %vm430, %v1149, %v1151
      %v1172 = vsel %vm430, %v1153, %v1155
      %v1176 = vsel %vm430, %v1157, %v1159
      %v1178 = vld [vmem:[%s1 + $0x4] sm:$0xf]
      %v1179 = vld [vmem:[%s2] sm:$0xff]
      %1181 = vset.pattern.permute.xlu0 2
      %1182 = vperm.xlu0 %1181, %v1179
      %v1183 = vpop.permute.xlu0 %1182
      %v1186 = vunpack.c.l.b16 %v1178
      %v1187 = vpack.c.b16 %v1186, %v1186
      %1188 = vrot.lane.b32.xlu0 %v1187, 112
      %v1189 = vpop.permute.xlu0 %1188
      %v1191 = vsel %vm571, %v1189, 0
      %v1194 = vsel %vm430, %v1161, 0
      %1196 = vmatprep.subr.bf16.mxu0 0
      %1197 = vmatpush1.bf16.msra.mxu0 %v1164
      %1198 = vmatprep.subr.bf16.mxu0 0
      %1199 = vmatpush1.bf16.msra.mxu0 %v1168
      %1200 = vmatprep.subr.bf16.mxu0 0
      %1201 = vmatpush1.bf16.msra.mxu0 %v1172
      %1202 = vmatprep.subr.bf16.mxu0 0
      %1203 = vmatpush1.bf16.msra.mxu0 %v1176
      %1204 = vmatprep.subr.bf16.mxu0 0
      %1205 = vmatpush1.bf16.msra.mxu0 %v1194
      %1206 = vmatprep.subr.bf16.mxu0 0
      %1207 = vmatpush1.bf16.msra.mxu0 0
      %1208 = vmatprep.subr.bf16.mxu0 0
      %1209 = vmatpush1.bf16.msra.mxu0 0
      %1210 = vmatprep.subr.bf16.mxu0 0
      %1211 = vmatpush1.bf16.msra.mxu0 0
      %1212 = vmatprep.subr.bf16.mxu0 0
      %1213 = vmatpush1.bf16.msra.mxu0 0
      %1214 = vmatprep.subr.bf16.mxu0 0
      %1215 = vmatpush1.bf16.msra.mxu0 0
      %1216 = vmatprep.subr.bf16.mxu0 0
      %1217 = vmatpush1.bf16.msra.mxu0 0
      %1218 = vmatprep.subr.bf16.mxu0 0
      %1219 = vmatpush1.bf16.msra.mxu0 0
      %1220 = vmatprep.subr.bf16.mxu0 0
      %1221 = vmatpush1.bf16.msra.mxu0 0
      %1222 = vmatprep.subr.bf16.mxu0 0
      %1223 = vmatpush1.bf16.msra.mxu0 0
      %1224 = vmatprep.subr.bf16.mxu0 0
      %1225 = vmatpush1.bf16.msra.mxu0 0
      %1226 = vmatprep.subr.bf16.mxu0 0
      %1227 = vmatpush1.bf16.msra.mxu0 0
      %1228 = vmatprep.mubr.bf16.mxu0 0
      %1229 = vmatmul.mubr.bf16.gmra.mrb[0].mxu0 %v1191
      %v1230 = vpop.f32.mrb[0].mxu0
      %v1231 = vadd.f32 %v1183, %v1230
      %v1232 = vpop.f32.mrb[0].mxu0
      %v1233 = vpop.f32.mrb[0].mxu0
      %v1234 = vpop.f32.mrb[0].mxu0
      %1235 = vdwg.mxu0
      %v1236 = vmax.f32 %v1231, 0.0
      %v1237 = vpack.c.bf16 %v1236, %v1236
      %v1238 = vld [vmem:[%s6] sm:$0xf]
      %v1239 = vld [vmem:[%s6 + $0x4] sm:$0xf]
      %v1240 = vld [vmem:[%s6 + $0x8] sm:$0xf]
      %v1241 = vld [vmem:[%s6 + $0xc] sm:$0xf]
      %v1242 = vld [vmem:[%s6 + $0x10] sm:$0x3]
      %v1248 = vunpack.c.l.b16 %v1238
      %v1249 = vunpack.c.l.b16 %v1239
      %v1250 = vunpack.c.l.b16 %v1240
      %v1251 = vunpack.c.l.b16 %v1241
      %v1252 = vunpack.c.l.b16 %v1242
      %v1253 = vpack.c.b16 %v1249, %v1248
      %v1254 = vpack.c.b16 %v1251, %v1250
      %v1255 = vpack.c.b16 %v1252, %v1252
      %vm1258 = vcmask 293888
      %v1260 = vsel %vm1258, %v1237, 0
      %v1263 = vsel %vm839, %v1255, 0
      %1265 = vmatprep.subr.bf16.mxu0 0
      %1266 = vmatpush1.bf16.msra.mxu0 %v1253
      %1267 = vmatprep.subr.bf16.mxu0 0
      %1268 = vmatpush1.bf16.msra.mxu0 %v1254
      %1269 = vmatprep.subr.bf16.mxu0 0
      %1270 = vmatpush1.bf16.msra.mxu0 %v1263
      %1271 = vmatprep.subr.bf16.mxu0 0
      %1272 = vmatpush1.bf16.msra.mxu0 0
      %1273 = vmatprep.subr.bf16.mxu0 0
      %1274 = vmatpush1.bf16.msra.mxu0 0
      %1275 = vmatprep.subr.bf16.mxu0 0
      %1276 = vmatpush1.bf16.msra.mxu0 0
      %1277 = vmatprep.subr.bf16.mxu0 0
      %1278 = vmatpush1.bf16.msra.mxu0 0
      %1279 = vmatprep.subr.bf16.mxu0 0
      %1280 = vmatpush1.bf16.msra.mxu0 0
      %1281 = vmatprep.subr.bf16.mxu0 0
      %1282 = vmatpush1.bf16.msra.mxu0 0
      %1283 = vmatprep.subr.bf16.mxu0 0
      %1284 = vmatpush1.bf16.msra.mxu0 0
      %1285 = vmatprep.subr.bf16.mxu0 0
      %1286 = vmatpush1.bf16.msra.mxu0 0
      %1287 = vmatprep.subr.bf16.mxu0 0
      %1288 = vmatpush1.bf16.msra.mxu0 0
      %1289 = vmatprep.subr.bf16.mxu0 0
      %1290 = vmatpush1.bf16.msra.mxu0 0
      %1291 = vmatprep.subr.bf16.mxu0 0
      %1292 = vmatpush1.bf16.msra.mxu0 0
      %1293 = vmatprep.subr.bf16.mxu0 0
      %1294 = vmatpush1.bf16.msra.mxu0 0
      %1295 = vmatprep.subr.bf16.mxu0 0
      %1296 = vmatpush1.bf16.msra.mxu0 0
      %1297 = vmatprep.mubr.bf16.mxu0 0
      %1298 = vmatmul.mubr.bf16.gmra.mrb[0].mxu0 %v1260
      %v1299 = vpop.f32.mrb[0].mxu0
      %v1300 = vadd.f32 0.0, %v1299
      %v1301 = vpop.f32.mrb[0].mxu0
      %v1302 = vpop.f32.mrb[0].mxu0
      %v1303 = vpop.f32.mrb[0].mxu0
      %1304 = vdwg.mxu0
      %v1305 = vpack.c.bf16 %v1300, %v1300
      %v1307 = vunpack.c.l.b16 %v1305
      %v1308 = vpack.c.b16 %v1307, %v1307
      %1309 = vrot.lane.b32.xlu0 %v1308, 5
      %v1310 = vpop.permute.xlu0 %1309
      %vm1312 = vcmask 166952
      %1313 = vst.msk [vmem:[#allocation4] sm:$0xf] %vm1312, %v1310
      %v1314 = vld [vmem:[#allocation4] sm:$0xf]
      %v1316 = vunpack.c.l.b16 %v1314
      %v1317 = vpack.c.b16 %v1316, %v1316
      %1318 = vrot.lane.b32.xlu0 %v1317, 127
      %v1319 = vpop.permute.xlu0 %1318
      %1320 = vrot.lane.b32.xlu0 %v1317, 126
      %v1321 = vpop.permute.xlu0 %1320
      %1322 = vrot.lane.b32.xlu0 %v1317, 124
      %v1323 = vpop.permute.xlu0 %1322
      %1324 = vrot.lane.b32.xlu0 %v1317, 123
      %v1325 = vpop.permute.xlu0 %1324
      %1326 = vrot.lane.b32.xlu0 %v1317, 122
      %v1327 = vpop.permute.xlu0 %1326
      %1328 = vrot.lane.b32.xlu0 %v1317, 120
      %v1329 = vpop.permute.xlu0 %1328
      %1330 = vrot.lane.b32.xlu0 %v1317, 119
      %v1331 = vpop.permute.xlu0 %1330
      %1332 = vrot.lane.b32.xlu0 %v1317, 118
      %v1333 = vpop.permute.xlu0 %1332
      %v1336 = vsel %vm430, %v1314, %v1319
      %v1340 = vsel %vm430, %v1321, %v1323
      %v1344 = vsel %vm430, %v1325, %v1327
      %v1348 = vsel %vm430, %v1329, %v1331
      %v1350 = vld [vmem:[%s1 + $0x4] sm:$0xff]
      %v1351 = vld [vmem:[%s2] sm:$0xff]
      %1353 = vset.pattern.permute.xlu0 3
      %1354 = vperm.xlu0 %1353, %v1351
      %v1355 = vpop.permute.xlu0 %1354
      %v1358 = vunpack.c.l.b16 %v1350
      %v1359 = vunpack.c.h.b16 %v1350
      %v1360 = vpack.c.b16 %v1358, %v1358
      %v1361 = vpack.c.b16 %v1359, %v1359
      %1362 = vrot.lane.b32.xlu0 %v1360, 40
      %v1363 = vpop.permute.xlu0 %1362
      %1364 = vrot.lane.b32.xlu0 %v1361, 40
      %v1365 = vpop.permute.xlu0 %1364
      %vm1366 = vcmask 326656
      %v1367 = vsel %vm1366, %v1363, %v1365
      %v1369 = vsel %vm571, %v1367, 0
      %v1372 = vsel %vm430, %v1333, 0
      %1374 = vmatprep.subr.bf16.mxu0 0
      %1375 = vmatpush1.bf16.msra.mxu0 %v1336
      %1376 = vmatprep.subr.bf16.mxu0 0
      %1377 = vmatpush1.bf16.msra.mxu0 %v1340
      %1378 = vmatprep.subr.bf16.mxu0 0
      %1379 = vmatpush1.bf16.msra.mxu0 %v1344
      %1380 = vmatprep.subr.bf16.mxu0 0
      %1381 = vmatpush1.bf16.msra.mxu0 %v1348
      %1382 = vmatprep.subr.bf16.mxu0 0
      %1383 = vmatpush1.bf16.msra.mxu0 %v1372
      %1384 = vmatprep.subr.bf16.mxu0 0
      %1385 = vmatpush1.bf16.msra.mxu0 0
      %1386 = vmatprep.subr.bf16.mxu0 0
      %1387 = vmatpush1.bf16.msra.mxu0 0
      %1388 = vmatprep.subr.bf16.mxu0 0
      %1389 = vmatpush1.bf16.msra.mxu0 0
      %1390 = vmatprep.subr.bf16.mxu0 0
      %1391 = vmatpush1.bf16.msra.mxu0 0
      %1392 = vmatprep.subr.bf16.mxu0 0
      %1393 = vmatpush1.bf16.msra.mxu0 0
      %1394 = vmatprep.subr.bf16.mxu0 0
      %1395 = vmatpush1.bf16.msra.mxu0 0
      %1396 = vmatprep.subr.bf16.mxu0 0
      %1397 = vmatpush1.bf16.msra.mxu0 0
      %1398 = vmatprep.subr.bf16.mxu0 0
      %1399 = vmatpush1.bf16.msra.mxu0 0
      %1400 = vmatprep.subr.bf16.mxu0 0
      %1401 = vmatpush1.bf16.msra.mxu0 0
      %1402 = vmatprep.subr.bf16.mxu0 0
      %1403 = vmatpush1.bf16.msra.mxu0 0
      %1404 = vmatprep.subr.bf16.mxu0 0
      %1405 = vmatpush1.bf16.msra.mxu0 0
      %1406 = vmatprep.mubr.bf16.mxu0 0
      %1407 = vmatmul.mubr.bf16.gmra.mrb[0].mxu0 %v1369
      %v1408 = vpop.f32.mrb[0].mxu0
      %v1409 = vadd.f32 %v1355, %v1408
      %v1410 = vpop.f32.mrb[0].mxu0
      %v1411 = vpop.f32.mrb[0].mxu0
      %v1412 = vpop.f32.mrb[0].mxu0
      %1413 = vdwg.mxu0
      %v1414 = vmax.f32 %v1409, 0.0
      %v1415 = vpack.c.bf16 %v1414, %v1414
      %v1416 = vld [vmem:[%s7] sm:$0xf]
      %v1417 = vld [vmem:[%s7 + $0x4] sm:$0xf]
      %v1420 = vunpack.c.l.b16 %v1416
      %v1421 = vunpack.c.l.b16 %v1417
      %v1422 = vpack.c.b16 %v1421, %v1420
      %vm1424 = vcmask 130048
      %v1426 = vsel %vm1424, %v1415, 0
      %1428 = vmatprep.subr.bf16.mxu0 0
      %1429 = vmatpush1.bf16.msra.mxu0 %v1422
      %1430 = vmatprep.subr.bf16.mxu0 0
      %1431 = vmatpush1.bf16.msra.mxu0 0
      %1432 = vmatprep.subr.bf16.mxu0 0
      %1433 = vmatpush1.bf16.msra.mxu0 0
      %1434 = vmatprep.subr.bf16.mxu0 0
      %1435 = vmatpush1.bf16.msra.mxu0 0
      %1436 = vmatprep.subr.bf16.mxu0 0
      %1437 = vmatpush1.bf16.msra.mxu0 0
      %1438 = vmatprep.subr.bf16.mxu0 0
      %1439 = vmatpush1.bf16.msra.mxu0 0
      %1440 = vmatprep.subr.bf16.mxu0 0
      %1441 = vmatpush1.bf16.msra.mxu0 0
      %1442 = vmatprep.subr.bf16.mxu0 0
      %1443 = vmatpush1.bf16.msra.mxu0 0
      %1444 = vmatprep.subr.bf16.mxu0 0
      %1445 = vmatpush1.bf16.msra.mxu0 0
      %1446 = vmatprep.subr.bf16.mxu0 0
      %1447 = vmatpush1.bf16.msra.mxu0 0
      %1448 = vmatprep.subr.bf16.mxu0 0
      %1449 = vmatpush1.bf16.msra.mxu0 0
      %1450 = vmatprep.subr.bf16.mxu0 0
      %1451 = vmatpush1.bf16.msra.mxu0 0
      %1452 = vmatprep.subr.bf16.mxu0 0
      %1453 = vmatpush1.bf16.msra.mxu0 0
      %1454 = vmatprep.subr.bf16.mxu0 0
      %1455 = vmatpush1.bf16.msra.mxu0 0
      %1456 = vmatprep.subr.bf16.mxu0 0
      %1457 = vmatpush1.bf16.msra.mxu0 0
      %1458 = vmatprep.subr.bf16.mxu0 0
      %1459 = vmatpush1.bf16.msra.mxu0 0
      %1460 = vmatprep.mubr.bf16.mxu0 0
      %1461 = vmatmul.mubr.bf16.gmra.mrb[0].mxu0 %v1426
      %v1462 = vpop.f32.mrb[0].mxu0
      %v1463 = vadd.f32 0.0, %v1462
      %v1464 = vpop.f32.mrb[0].mxu0
      %v1465 = vpop.f32.mrb[0].mxu0
      %v1466 = vpop.f32.mrb[0].mxu0
      %1467 = vdwg.mxu0
      %v1468 = vpack.c.bf16 %v1463, %v1463
      %v1470 = vunpack.c.l.b16 %v1468
      %v1471 = vpack.c.b16 %v1470, %v1470
      %1472 = vrot.lane.b32.xlu0 %v1471, 4
      %v1473 = vpop.permute.xlu0 %1472
      %vm1475 = vcmask 101408
      %1476 = vst.msk [vmem:[#allocation5] sm:$0xf] %vm1475, %v1473
      %v1477 = vld [vmem:[#allocation5] sm:$0xf]
      %v1479 = vunpack.c.l.b16 %v1477
      %v1480 = vpack.c.b16 %v1479, %v1479
      %1481 = vrot.lane.b32.xlu0 %v1480, 127
      %v1482 = vpop.permute.xlu0 %1481
      %1483 = vrot.lane.b32.xlu0 %v1480, 126
      %v1484 = vpop.permute.xlu0 %1483
      %1485 = vrot.lane.b32.xlu0 %v1480, 125
      %v1486 = vpop.permute.xlu0 %1485
      %1487 = vrot.lane.b32.xlu0 %v1480, 124
      %v1488 = vpop.permute.xlu0 %1487
      %1489 = vrot.lane.b32.xlu0 %v1480, 123
      %v1490 = vpop.permute.xlu0 %1489
      %1491 = vrot.lane.b32.xlu0 %v1480, 122
      %v1492 = vpop.permute.xlu0 %1491
      %1493 = vrot.lane.b32.xlu0 %v1480, 121
      %v1494 = vpop.permute.xlu0 %1493
      %1495 = vrot.lane.b32.xlu0 %v1480, 120
      %v1496 = vpop.permute.xlu0 %1495
      %v1499 = vsel %vm430, %v1477, %v1482
      %v1503 = vsel %vm430, %v1484, %v1486
      %v1507 = vsel %vm430, %v1488, %v1490
      %v1511 = vsel %vm430, %v1492, %v1494
      %v1513 = vld [vmem:[%s1 + $0x8] sm:$0xf]
      %v1514 = vld [vmem:[%s2] sm:$0xff]
      %1516 = vset.pattern.permute.xlu0 4
      %1517 = vperm.xlu0 %1516, %v1514
      %v1518 = vpop.permute.xlu0 %1517
      %v1521 = vunpack.c.l.b16 %v1513
      %v1522 = vpack.c.b16 %v1521, %v1521
      %1523 = vrot.lane.b32.xlu0 %v1522, 96
      %v1524 = vpop.permute.xlu0 %1523
      %v1526 = vsel %vm571, %v1524, 0
      %v1529 = vsel %vm430, %v1496, 0
      %1531 = vmatprep.subr.bf16.mxu0 0
      %1532 = vmatpush1.bf16.msra.mxu0 %v1499
      %1533 = vmatprep.subr.bf16.mxu0 0
      %1534 = vmatpush1.bf16.msra.mxu0 %v1503
      %1535 = vmatprep.subr.bf16.mxu0 0
      %1536 = vmatpush1.bf16.msra.mxu0 %v1507
      %1537 = vmatprep.subr.bf16.mxu0 0
      %1538 = vmatpush1.bf16.msra.mxu0 %v1511
      %1539 = vmatprep.subr.bf16.mxu0 0
      %1540 = vmatpush1.bf16.msra.mxu0 %v1529
      %1541 = vmatprep.subr.bf16.mxu0 0
      %1542 = vmatpush1.bf16.msra.mxu0 0
      %1543 = vmatprep.subr.bf16.mxu0 0
      %1544 = vmatpush1.bf16.msra.mxu0 0
      %1545 = vmatprep.subr.bf16.mxu0 0
      %1546 = vmatpush1.bf16.msra.mxu0 0
      %1547 = vmatprep.subr.bf16.mxu0 0
      %1548 = vmatpush1.bf16.msra.mxu0 0
      %1549 = vmatprep.subr.bf16.mxu0 0
      %1550 = vmatpush1.bf16.msra.mxu0 0
      %1551 = vmatprep.subr.bf16.mxu0 0
      %1552 = vmatpush1.bf16.msra.mxu0 0
      %1553 = vmatprep.subr.bf16.mxu0 0
      %1554 = vmatpush1.bf16.msra.mxu0 0
      %1555 = vmatprep.subr.bf16.mxu0 0
      %1556 = vmatpush1.bf16.msra.mxu0 0
      %1557 = vmatprep.subr.bf16.mxu0 0
      %1558 = vmatpush1.bf16.msra.mxu0 0
      %1559 = vmatprep.subr.bf16.mxu0 0
      %1560 = vmatpush1.bf16.msra.mxu0 0
      %1561 = vmatprep.subr.bf16.mxu0 0
      %1562 = vmatpush1.bf16.msra.mxu0 0
      %1563 = vmatprep.mubr.bf16.mxu0 0
      %1564 = vmatmul.mubr.bf16.gmra.mrb[0].mxu0 %v1526
      %v1565 = vpop.f32.mrb[0].mxu0
      %v1566 = vadd.f32 %v1518, %v1565
      %v1567 = vpop.f32.mrb[0].mxu0
      %v1568 = vpop.f32.mrb[0].mxu0
      %v1569 = vpop.f32.mrb[0].mxu0
      %1570 = vdwg.mxu0
      %v1571 = vmax.f32 %v1566, 0.0
      %v1572 = vpack.c.bf16 %v1571, %v1571
      %v1573 = vld [vmem:[%s8] sm:$0xf]
      %v1574 = vld [vmem:[%s8 + $0x4] sm:$0x1]
      %v1577 = vunpack.c.l.b16 %v1573
      %v1578 = vunpack.c.l.b16 %v1574
      %v1579 = vpack.c.b16 %v1578, %v1577
      %vm1580 = vcmask 72704
      %v1582 = vsel %vm1580, %v1572, 0
      %vm1584 = vcmask 1044480
      %v1585 = vsel %vm430, 4294967295, 65535
      %v1586 = vsel %vm1584, %v1585, 0
      %v1588 = vand.u32 %v1579, %v1586
      %1590 = vmatprep.subr.bf16.mxu0 0
      %1591 = vmatpush1.bf16.msra.mxu0 %v1588
      %1592 = vmatprep.subr.bf16.mxu0 0
      %1593 = vmatpush1.bf16.msra.mxu0 0
      %1594 = vmatprep.subr.bf16.mxu0 0
      %1595 = vmatpush1.bf16.msra.mxu0 0
      %1596 = vmatprep.subr.bf16.mxu0 0
      %1597 = vmatpush1.bf16.msra.mxu0 0
      %1598 = vmatprep.subr.bf16.mxu0 0
      %1599 = vmatpush1.bf16.msra.mxu0 0
      %1600 = vmatprep.subr.bf16.mxu0 0
      %1601 = vmatpush1.bf16.msra.mxu0 0
      %1602 = vmatprep.subr.bf16.mxu0 0
      %1603 = vmatpush1.bf16.msra.mxu0 0
      %1604 = vmatprep.subr.bf16.mxu0 0
      %1605 = vmatpush1.bf16.msra.mxu0 0
      %1606 = vmatprep.subr.bf16.mxu0 0
      %1607 = vmatpush1.bf16.msra.mxu0 0
      %1608 = vmatprep.subr.bf16.mxu0 0
      %1609 = vmatpush1.bf16.msra.mxu0 0
      %1610 = vmatprep.subr.bf16.mxu0 0
      %1611 = vmatpush1.bf16.msra.mxu0 0
      %1612 = vmatprep.subr.bf16.mxu0 0
      %1613 = vmatpush1.bf16.msra.mxu0 0
      %1614 = vmatprep.subr.bf16.mxu0 0
      %1615 = vmatpush1.bf16.msra.mxu0 0
      %1616 = vmatprep.subr.bf16.mxu0 0
      %1617 = vmatpush1.bf16.msra.mxu0 0
      %1618 = vmatprep.subr.bf16.mxu0 0
      %1619 = vmatpush1.bf16.msra.mxu0 0
      %1620 = vmatprep.subr.bf16.mxu0 0
      %1621 = vmatpush1.bf16.msra.mxu0 0
      %1622 = vmatprep.mubr.bf16.mxu0 0
      %1623 = vmatmul.mubr.bf16.gmra.mrb[0].mxu0 %v1582
      %v1624 = vpop.f32.mrb[0].mxu0
      %v1625 = vadd.f32 0.0, %v1624
      %v1626 = vpop.f32.mrb[0].mxu0
      %v1627 = vpop.f32.mrb[0].mxu0
      %v1628 = vpop.f32.mrb[0].mxu0
      %1629 = vdwg.mxu0
      %v1630 = vpack.c.bf16 %v1625, %v1625
      %v1632 = vunpack.c.l.b16 %v1630
      %v1633 = vpack.c.b16 %v1632, %v1632
      %1634 = vrot.lane.b32.xlu0 %v1633, 5
      %v1635 = vpop.permute.xlu0 %1634
      %1637 = vst.msk [vmem:[#allocation6] sm:$0xf] %vm1312, %v1635
      %v1638 = vld [vmem:[#allocation6] sm:$0xf]
      %v1639 = vld [vmem:[#allocation4] sm:$0xf]
      %v1641 = vunpack.c.l.b16 %v1638
      %v1642 = vpack.c.b16 %v1641, %v1641
      %1643 = vrot.lane.b32.xlu0 %v1642, 127
      %v1644 = vpop.permute.xlu0 %1643
      %1645 = vrot.lane.b32.xlu0 %v1642, 126
      %v1646 = vpop.permute.xlu0 %1645
      %1647 = vrot.lane.b32.xlu0 %v1642, 124
      %v1648 = vpop.permute.xlu0 %1647
      %1649 = vrot.lane.b32.xlu0 %v1642, 123
      %v1650 = vpop.permute.xlu0 %1649
      %1651 = vrot.lane.b32.xlu0 %v1642, 122
      %v1652 = vpop.permute.xlu0 %1651
      %1653 = vrot.lane.b32.xlu0 %v1642, 120
      %v1654 = vpop.permute.xlu0 %1653
      %1655 = vrot.lane.b32.xlu0 %v1642, 119
      %v1656 = vpop.permute.xlu0 %1655
      %1657 = vrot.lane.b32.xlu0 %v1642, 118
      %v1658 = vpop.permute.xlu0 %1657
      %v1660 = vunpack.c.l.b16 %v1639
      %v1661 = vpack.c.b16 %v1660, %v1660
      %1662 = vrot.lane.b32.xlu0 %v1661, 127
      %v1663 = vpop.permute.xlu0 %1662
      %1664 = vrot.lane.b32.xlu0 %v1661, 126
      %v1665 = vpop.permute.xlu0 %1664
      %1666 = vrot.lane.b32.xlu0 %v1661, 124
      %v1667 = vpop.permute.xlu0 %1666
      %1668 = vrot.lane.b32.xlu0 %v1661, 123
      %v1669 = vpop.permute.xlu0 %1668
      %1670 = vrot.lane.b32.xlu0 %v1661, 122
      %v1671 = vpop.permute.xlu0 %1670
      %1672 = vrot.lane.b32.xlu0 %v1661, 120
      %v1673 = vpop.permute.xlu0 %1672
      %v1676 = vsel %vm430, %v1638, %v1644
      %v1680 = vsel %vm430, %v1646, %v1648
      %v1684 = vsel %vm430, %v1650, %v1652
      %v1688 = vsel %vm430, %v1654, %v1656
      %v1692 = vsel %vm430, %v1658, %v1661
      %v1696 = vsel %vm430, %v1663, %v1665
      %v1700 = vsel %vm430, %v1667, %v1669
      %v1704 = vsel %vm430, %v1671, %v1673
      %v1707 = vsel %vm430, %v1639, %v1663
      %1709 = vrot.lane.b32.xlu0 %v1707, 119
      %v1710 = vpop.permute.xlu0 %1709
      %v1712 = vld [vmem:[%s1 + $0x8] sm:$0xff]
      %v1713 = vld [vmem:[%s2] sm:$0xff]
      %1715 = vset.pattern.permute.xlu0 5
      %1716 = vperm.xlu0 %1715, %v1713
      %v1717 = vpop.permute.xlu0 %1716
      %v1720 = vunpack.c.l.b16 %v1712
      %v1721 = vunpack.c.h.b16 %v1712
      %v1722 = vpack.c.b16 %v1720, %v1720
      %v1723 = vpack.c.b16 %v1721, %v1721
      %1724 = vrot.lane.b32.xlu0 %v1722, 24
      %v1725 = vpop.permute.xlu0 %1724
      %1726 = vrot.lane.b32.xlu0 %v1723, 24
      %v1727 = vpop.permute.xlu0 %1726
      %vm1728 = vcmask 195584
      %v1729 = vsel %vm1728, %v1725, %v1727
      %v1732 = vsel %vm1424, %v1727, 0
      %1734 = vmatprep.subr.bf16.mxu0 0
      %1735 = vmatpush1.bf16.msra.mxu0 %v1676
      %1736 = vmatprep.subr.bf16.mxu0 0
      %1737 = vmatpush1.bf16.msra.mxu0 %v1680
      %1738 = vmatprep.subr.bf16.mxu0 0
      %1739 = vmatpush1.bf16.msra.mxu0 %v1684
      %1740 = vmatprep.subr.bf16.mxu0 0
      %1741 = vmatpush1.bf16.msra.mxu0 %v1688
      %1742 = vmatprep.subr.bf16.mxu0 0
      %1743 = vmatpush1.bf16.msra.mxu0 %v1692
      %1744 = vmatprep.subr.bf16.mxu0 0
      %1745 = vmatpush1.bf16.msra.mxu0 %v1696
      %1746 = vmatprep.subr.bf16.mxu0 0
      %1747 = vmatpush1.bf16.msra.mxu0 %v1700
      %1748 = vmatprep.subr.bf16.mxu0 0
      %1749 = vmatpush1.bf16.msra.mxu0 %v1704
      %1750 = vmatprep.subr.bf16.mxu0 0
      %1751 = vmatpush1.bf16.msra.mxu0 %v1710
      %1752 = vmatprep.subr.bf16.mxu0 0
      %1753 = vmatpush1.bf16.msra.mxu0 0
      %1754 = vmatprep.subr.bf16.mxu0 0
      %1755 = vmatpush1.bf16.msra.mxu0 0
      %1756 = vmatprep.subr.bf16.mxu0 0
      %1757 = vmatpush1.bf16.msra.mxu0 0
      %1758 = vmatprep.subr.bf16.mxu0 0
      %1759 = vmatpush1.bf16.msra.mxu0 0
      %1760 = vmatprep.subr.bf16.mxu0 0
      %1761 = vmatpush1.bf16.msra.mxu0 0
      %1762 = vmatprep.subr.bf16.mxu0 0
      %1763 = vmatpush1.bf16.msra.mxu0 0
      %1764 = vmatprep.subr.bf16.mxu0 0
      %1765 = vmatpush1.bf16.msra.mxu0 0
      %1766 = vmatprep.mubr.bf16.mxu0 %v1732
      %1767 = vmatmul.mubr.bf16.gmra.mrb[0].mxu0 %v1729
      %v1768 = vpop.f32.mrb[0].mxu0
      %v1769 = vadd.f32 %v1717, %v1768
      %v1770 = vpop.f32.mrb[0].mxu0
      %v1771 = vpop.f32.mrb[0].mxu0
      %v1772 = vpop.f32.mrb[0].mxu0
      %1773 = vdwg.mxu0
      %v1774 = vmax.f32 %v1769, 0.0
      %v1775 = vpack.c.bf16 %v1774, %v1774
      %v1776 = vld [vmem:[%s9] sm:$0xf]
      %v1777 = vld [vmem:[%s9 + $0x4] sm:$0xf]
      %v1780 = vunpack.c.l.b16 %v1776
      %v1781 = vunpack.c.l.b16 %v1777
      %v1782 = vpack.c.b16 %v1781, %v1780
      %v1785 = vsel %vm1424, %v1775, 0
      %1787 = vmatprep.subr.bf16.mxu0 0
      %1788 = vmatpush1.bf16.msra.mxu0 %v1782
      %1789 = vmatprep.subr.bf16.mxu0 0
      %1790 = vmatpush1.bf16.msra.mxu0 0
      %1791 = vmatprep.subr.bf16.mxu0 0
      %1792 = vmatpush1.bf16.msra.mxu0 0
      %1793 = vmatprep.subr.bf16.mxu0 0
      %1794 = vmatpush1.bf16.msra.mxu0 0
      %1795 = vmatprep.subr.bf16.mxu0 0
      %1796 = vmatpush1.bf16.msra.mxu0 0
      %1797 = vmatprep.subr.bf16.mxu0 0
      %1798 = vmatpush1.bf16.msra.mxu0 0
      %1799 = vmatprep.subr.bf16.mxu0 0
      %1800 = vmatpush1.bf16.msra.mxu0 0
      %1801 = vmatprep.subr.bf16.mxu0 0
      %1802 = vmatpush1.bf16.msra.mxu0 0
      %1803 = vmatprep.subr.bf16.mxu0 0
      %1804 = vmatpush1.bf16.msra.mxu0 0
      %1805 = vmatprep.subr.bf16.mxu0 0
      %1806 = vmatpush1.bf16.msra.mxu0 0
      %1807 = vmatprep.subr.bf16.mxu0 0
      %1808 = vmatpush1.bf16.msra.mxu0 0
      %1809 = vmatprep.subr.bf16.mxu0 0
      %1810 = vmatpush1.bf16.msra.mxu0 0
      %1811 = vmatprep.subr.bf16.mxu0 0
      %1812 = vmatpush1.bf16.msra.mxu0 0
      %1813 = vmatprep.subr.bf16.mxu0 0
      %1814 = vmatpush1.bf16.msra.mxu0 0
      %1815 = vmatprep.subr.bf16.mxu0 0
      %1816 = vmatpush1.bf16.msra.mxu0 0
      %1817 = vmatprep.subr.bf16.mxu0 0
      %1818 = vmatpush1.bf16.msra.mxu0 0
      %1819 = vmatprep.mubr.bf16.mxu0 0
      %1820 = vmatmul.mubr.bf16.gmra.mrb[0].mxu0 %v1785
      %v1821 = vpop.f32.mrb[0].mxu0
      %v1822 = vadd.f32 0.0, %v1821
      %v1823 = vpop.f32.mrb[0].mxu0
      %v1824 = vpop.f32.mrb[0].mxu0
      %v1825 = vpop.f32.mrb[0].mxu0
      %1826 = vdwg.mxu0
      %v1827 = vpack.c.bf16 %v1822, %v1822
      %v1829 = vunpack.c.l.b16 %v1827
      %v1830 = vpack.c.b16 %v1829, %v1829
      %1831 = vrot.lane.b32.xlu0 %v1830, 7
      %v1832 = vpop.permute.xlu0 %1831
      %1834 = vst.msk [vmem:[#allocation7] sm:$0xf] %vm1140, %v1832
      %v1835 = vld [vmem:[#allocation7] sm:$0xf]
      %v1836 = vld [vmem:[#allocation3] sm:$0xf]
      %v1838 = vunpack.c.l.b16 %v1835
      %v1839 = vpack.c.b16 %v1838, %v1838
      %1840 = vrot.lane.b32.xlu0 %v1839, 127
      %v1841 = vpop.permute.xlu0 %1840
      %1842 = vrot.lane.b32.xlu0 %v1839, 126
      %v1843 = vpop.permute.xlu0 %1842
      %1844 = vrot.lane.b32.xlu0 %v1839, 122
      %v1845 = vpop.permute.xlu0 %1844
      %1846 = vrot.lane.b32.xlu0 %v1839, 121
      %v1847 = vpop.permute.xlu0 %1846
      %1848 = vrot.lane.b32.xlu0 %v1839, 120
      %v1849 = vpop.permute.xlu0 %1848
      %1850 = vrot.lane.b32.xlu0 %v1839, 116
      %v1851 = vpop.permute.xlu0 %1850
      %1852 = vrot.lane.b32.xlu0 %v1839, 115
      %v1853 = vpop.permute.xlu0 %1852
      %1854 = vrot.lane.b32.xlu0 %v1839, 114
      %v1855 = vpop.permute.xlu0 %1854
      %v1857 = vunpack.c.l.b16 %v1836
      %v1858 = vpack.c.b16 %v1857, %v1857
      %1859 = vrot.lane.b32.xlu0 %v1858, 127
      %v1860 = vpop.permute.xlu0 %1859
      %1861 = vrot.lane.b32.xlu0 %v1858, 126
      %v1862 = vpop.permute.xlu0 %1861
      %1863 = vrot.lane.b32.xlu0 %v1858, 122
      %v1864 = vpop.permute.xlu0 %1863
      %1865 = vrot.lane.b32.xlu0 %v1858, 121
      %v1866 = vpop.permute.xlu0 %1865
      %1867 = vrot.lane.b32.xlu0 %v1858, 120
      %v1868 = vpop.permute.xlu0 %1867
      %1869 = vrot.lane.b32.xlu0 %v1858, 116
      %v1870 = vpop.permute.xlu0 %1869
      %v1873 = vsel %vm430, %v1835, %v1841
      %v1877 = vsel %vm430, %v1843, %v1845
      %v1881 = vsel %vm430, %v1847, %v1849
      %v1885 = vsel %vm430, %v1851, %v1853
      %v1889 = vsel %vm430, %v1855, %v1858
      %v1893 = vsel %vm430, %v1860, %v1862
      %v1897 = vsel %vm430, %v1864, %v1866
      %v1901 = vsel %vm430, %v1868, %v1870
      %v1904 = vsel %vm430, %v1836, %v1860
      %1906 = vrot.lane.b32.xlu0 %v1904, 115
      %v1907 = vpop.permute.xlu0 %1906
      %v1909 = vld [vmem:[%s1 + $0xc] sm:$0xff]
      %v1910 = vld [vmem:[%s1 + $0x14] sm:$0xf]
      %v1911 = vld [vmem:[%s2] sm:$0xff]
      %1913 = vset.pattern.permute.xlu0 6
      %1914 = vperm.xlu0 %1913, %v1911
      %v1915 = vpop.permute.xlu0 %1914
      %v1919 = vunpack.c.l.b16 %v1909
      %v1920 = vunpack.c.h.b16 %v1909
      %v1921 = vunpack.c.l.b16 %v1910
      %v1922 = vpack.c.b16 %v1919, %v1919
      %v1923 = vpack.c.b16 %v1920, %v1920
      %v1924 = vpack.c.b16 %v1921, %v1921
      %1925 = vrot.lane.b32.xlu0 %v1922, 8
      %v1926 = vpop.permute.xlu0 %1925
      %1927 = vrot.lane.b32.xlu0 %v1923, 8
      %v1928 = vpop.permute.xlu0 %1927
      %1929 = vrot.lane.b32.xlu0 %v1924, 8
      %v1930 = vpop.permute.xlu0 %1929
      %vm1931 = vcmask 64512
      %v1932 = vsel %vm1931, %v1926, %v1928
      %v1933 = vsel %vm1931, %v1928, %v1930
      %v1936 = vsel %vm1424, %v1933, 0
      %1938 = vmatprep.subr.bf16.mxu0 0
      %1939 = vmatpush1.bf16.msra.mxu0 %v1873
      %1940 = vmatprep.subr.bf16.mxu0 0
      %1941 = vmatpush1.bf16.msra.mxu0 %v1877
      %1942 = vmatprep.subr.bf16.mxu0 0
      %1943 = vmatpush1.bf16.msra.mxu0 %v1881
      %1944 = vmatprep.subr.bf16.mxu0 0
      %1945 = vmatpush1.bf16.msra.mxu0 %v1885
      %1946 = vmatprep.subr.bf16.mxu0 0
      %1947 = vmatpush1.bf16.msra.mxu0 %v1889
      %1948 = vmatprep.subr.bf16.mxu0 0
      %1949 = vmatpush1.bf16.msra.mxu0 %v1893
      %1950 = vmatprep.subr.bf16.mxu0 0
      %1951 = vmatpush1.bf16.msra.mxu0 %v1897
      %1952 = vmatprep.subr.bf16.mxu0 0
      %1953 = vmatpush1.bf16.msra.mxu0 %v1901
      %1954 = vmatprep.subr.bf16.mxu0 0
      %1955 = vmatpush1.bf16.msra.mxu0 %v1907
      %1956 = vmatprep.subr.bf16.mxu0 0
      %1957 = vmatpush1.bf16.msra.mxu0 0
      %1958 = vmatprep.subr.bf16.mxu0 0
      %1959 = vmatpush1.bf16.msra.mxu0 0
      %1960 = vmatprep.subr.bf16.mxu0 0
      %1961 = vmatpush1.bf16.msra.mxu0 0
      %1962 = vmatprep.subr.bf16.mxu0 0
      %1963 = vmatpush1.bf16.msra.mxu0 0
      %1964 = vmatprep.subr.bf16.mxu0 0
      %1965 = vmatpush1.bf16.msra.mxu0 0
      %1966 = vmatprep.subr.bf16.mxu0 0
      %1967 = vmatpush1.bf16.msra.mxu0 0
      %1968 = vmatprep.subr.bf16.mxu0 0
      %1969 = vmatpush1.bf16.msra.mxu0 0
      %1970 = vmatprep.mubr.bf16.mxu0 %v1936
      %1971 = vmatmul.mubr.bf16.gmra.mrb[0].mxu0 %v1932
      %v1972 = vpop.f32.mrb[0].mxu0
      %v1973 = vadd.f32 %v1915, %v1972
      %v1974 = vpop.f32.mrb[0].mxu0
      %v1975 = vpop.f32.mrb[0].mxu0
      %v1976 = vpop.f32.mrb[0].mxu0
      %1977 = vdwg.mxu0
      %v1978 = vmax.f32 %v1973, 0.0
      %v1979 = vpack.c.bf16 %v1978, %v1978
      %v1980 = vld [vmem:[%s10] sm:$0xf]
      %v1981 = vld [vmem:[%s10 + $0x4] sm:$0xf]
      %v1982 = vld [vmem:[%s10 + $0x8] sm:$0xf]
      %v1983 = vld [vmem:[%s10 + $0xc] sm:$0xf]
      %v1984 = vld [vmem:[%s10 + $0x10] sm:$0x3]
      %v1990 = vunpack.c.l.b16 %v1980
      %v1991 = vunpack.c.l.b16 %v1981
      %v1992 = vunpack.c.l.b16 %v1982
      %v1993 = vunpack.c.l.b16 %v1983
      %v1994 = vunpack.c.l.b16 %v1984
      %v1995 = vpack.c.b16 %v1991, %v1990
      %v1996 = vpack.c.b16 %v1993, %v1992
      %v1997 = vpack.c.b16 %v1994, %v1994
      %v2001 = vsel %vm1258, %v1979, 0
      %v2004 = vsel %vm839, %v1997, 0
      %2006 = vmatprep.subr.bf16.mxu0 0
      %2007 = vmatpush1.bf16.msra.mxu0 %v1995
      %2008 = vmatprep.subr.bf16.mxu0 0
      %2009 = vmatpush1.bf16.msra.mxu0 %v1996
      %2010 = vmatprep.subr.bf16.mxu0 0
      %2011 = vmatpush1.bf16.msra.mxu0 %v2004
      %2012 = vmatprep.subr.bf16.mxu0 0
      %2013 = vmatpush1.bf16.msra.mxu0 0
      %2014 = vmatprep.subr.bf16.mxu0 0
      %2015 = vmatpush1.bf16.msra.mxu0 0
      %2016 = vmatprep.subr.bf16.mxu0 0
      %2017 = vmatpush1.bf16.msra.mxu0 0
      %2018 = vmatprep.subr.bf16.mxu0 0
      %2019 = vmatpush1.bf16.msra.mxu0 0
      %2020 = vmatprep.subr.bf16.mxu0 0
      %2021 = vmatpush1.bf16.msra.mxu0 0
      %2022 = vmatprep.subr.bf16.mxu0 0
      %2023 = vmatpush1.bf16.msra.mxu0 0
      %2024 = vmatprep.subr.bf16.mxu0 0
      %2025 = vmatpush1.bf16.msra.mxu0 0
      %2026 = vmatprep.subr.bf16.mxu0 0
      %2027 = vmatpush1.bf16.msra.mxu0 0
      %2028 = vmatprep.subr.bf16.mxu0 0
      %2029 = vmatpush1.bf16.msra.mxu0 0
      %2030 = vmatprep.subr.bf16.mxu0 0
      %2031 = vmatpush1.bf16.msra.mxu0 0
      %2032 = vmatprep.subr.bf16.mxu0 0
      %2033 = vmatpush1.bf16.msra.mxu0 0
      %2034 = vmatprep.subr.bf16.mxu0 0
      %2035 = vmatpush1.bf16.msra.mxu0 0
      %2036 = vmatprep.subr.bf16.mxu0 0
      %2037 = vmatpush1.bf16.msra.mxu0 0
      %2038 = vmatprep.mubr.bf16.mxu0 0
      %2039 = vmatmul.mubr.bf16.gmra.mrb[0].mxu0 %v2001
      %v2040 = vpop.f32.mrb[0].mxu0
      %v2041 = vadd.f32 0.0, %v2040
      %v2042 = vpop.f32.mrb[0].mxu0
      %v2043 = vpop.f32.mrb[0].mxu0
      %v2044 = vpop.f32.mrb[0].mxu0
      %2045 = vdwg.mxu0
      %v2046 = vpack.c.bf16 %v2041, %v2041
      %v2048 = vunpack.c.l.b16 %v2046
      %v2049 = vpack.c.b16 %v2048, %v2048
      %2050 = vrot.lane.b32.xlu0 %v2049, 11
      %v2051 = vpop.permute.xlu0 %2050
      %2053 = vst.msk [vmem:[#allocation8] sm:$0xf] %vm930, %v2051
      %v2054 = vld [vmem:[#allocation8] sm:$0xf]
      %v2055 = vld [vmem:[#allocation2] sm:$0xf]
      %v2057 = vunpack.c.l.b16 %v2054
      %v2058 = vpack.c.b16 %v2057, %v2057
      %2059 = vrot.lane.b32.xlu0 %v2058, 127
      %v2060 = vpop.permute.xlu0 %2059
      %2061 = vrot.lane.b32.xlu0 %v2058, 126
      %v2062 = vpop.permute.xlu0 %2061
      %2063 = vrot.lane.b32.xlu0 %v2058, 118
      %v2064 = vpop.permute.xlu0 %2063
      %2065 = vrot.lane.b32.xlu0 %v2058, 117
      %v2066 = vpop.permute.xlu0 %2065
      %2067 = vrot.lane.b32.xlu0 %v2058, 116
      %v2068 = vpop.permute.xlu0 %2067
      %2069 = vrot.lane.b32.xlu0 %v2058, 108
      %v2070 = vpop.permute.xlu0 %2069
      %2071 = vrot.lane.b32.xlu0 %v2058, 107
      %v2072 = vpop.permute.xlu0 %2071
      %2073 = vrot.lane.b32.xlu0 %v2058, 106
      %v2074 = vpop.permute.xlu0 %2073
      %v2076 = vunpack.c.l.b16 %v2055
      %v2077 = vpack.c.b16 %v2076, %v2076
      %2078 = vrot.lane.b32.xlu0 %v2077, 127
      %v2079 = vpop.permute.xlu0 %2078
      %2080 = vrot.lane.b32.xlu0 %v2077, 126
      %v2081 = vpop.permute.xlu0 %2080
      %2082 = vrot.lane.b32.xlu0 %v2077, 118
      %v2083 = vpop.permute.xlu0 %2082
      %2084 = vrot.lane.b32.xlu0 %v2077, 117
      %v2085 = vpop.permute.xlu0 %2084
      %2086 = vrot.lane.b32.xlu0 %v2077, 116
      %v2087 = vpop.permute.xlu0 %2086
      %2088 = vrot.lane.b32.xlu0 %v2077, 108
      %v2089 = vpop.permute.xlu0 %2088
      %v2092 = vsel %vm430, %v2054, %v2060
      %v2096 = vsel %vm430, %v2062, %v2064
      %v2100 = vsel %vm430, %v2066, %v2068
      %v2104 = vsel %vm430, %v2070, %v2072
      %v2108 = vsel %vm430, %v2074, %v2077
      %v2112 = vsel %vm430, %v2079, %v2081
      %v2116 = vsel %vm430, %v2083, %v2085
      %v2120 = vsel %vm430, %v2087, %v2089
      %v2123 = vsel %vm430, %v2055, %v2079
      %2125 = vrot.lane.b32.xlu0 %v2123, 107
      %v2126 = vpop.permute.xlu0 %2125
      %v2128 = vld [vmem:[%s1 + $0x14] sm:$0xff]
      %v2129 = vld [vmem:[%s2] sm:$0xff]
      %2131 = vset.pattern.permute.xlu0 7
      %2132 = vperm.xlu0 %2131, %v2129
      %v2133 = vpop.permute.xlu0 %2132
      %v2136 = vunpack.c.l.b16 %v2128
      %v2137 = vunpack.c.h.b16 %v2128
      %v2138 = vpack.c.b16 %v2136, %v2136
      %v2139 = vpack.c.b16 %v2137, %v2137
      %2140 = vrot.lane.b32.xlu0 %v2138, 120
      %v2141 = vpop.permute.xlu0 %2140
      %2142 = vrot.lane.b32.xlu0 %v2139, 120
      %v2143 = vpop.permute.xlu0 %2142
      %vm2144 = vcmask 982016
      %v2145 = vsel %vm2144, %v2141, %v2143
      %v2148 = vsel %vm1424, %v2143, 0
      %2150 = vmatprep.subr.bf16.mxu0 0
      %2151 = vmatpush1.bf16.msra.mxu0 %v2092
      %2152 = vmatprep.subr.bf16.mxu0 0
      %2153 = vmatpush1.bf16.msra.mxu0 %v2096
      %2154 = vmatprep.subr.bf16.mxu0 0
      %2155 = vmatpush1.bf16.msra.mxu0 %v2100
      %2156 = vmatprep.subr.bf16.mxu0 0
      %2157 = vmatpush1.bf16.msra.mxu0 %v2104
      %2158 = vmatprep.subr.bf16.mxu0 0
      %2159 = vmatpush1.bf16.msra.mxu0 %v2108
      %2160 = vmatprep.subr.bf16.mxu0 0
      %2161 = vmatpush1.bf16.msra.mxu0 %v2112
      %2162 = vmatprep.subr.bf16.mxu0 0
      %2163 = vmatpush1.bf16.msra.mxu0 %v2116
      %2164 = vmatprep.subr.bf16.mxu0 0
      %2165 = vmatpush1.bf16.msra.mxu0 %v2120
      %2166 = vmatprep.subr.bf16.mxu0 0
      %2167 = vmatpush1.bf16.msra.mxu0 %v2126
      %2168 = vmatprep.subr.bf16.mxu0 0
      %2169 = vmatpush1.bf16.msra.mxu0 0
      %2170 = vmatprep.subr.bf16.mxu0 0
      %2171 = vmatpush1.bf16.msra.mxu0 0
      %2172 = vmatprep.subr.bf16.mxu0 0
      %2173 = vmatpush1.bf16.msra.mxu0 0
      %2174 = vmatprep.subr.bf16.mxu0 0
      %2175 = vmatpush1.bf16.msra.mxu0 0
      %2176 = vmatprep.subr.bf16.mxu0 0
      %2177 = vmatpush1.bf16.msra.mxu0 0
      %2178 = vmatprep.subr.bf16.mxu0 0
      %2179 = vmatpush1.bf16.msra.mxu0 0
      %2180 = vmatprep.subr.bf16.mxu0 0
      %2181 = vmatpush1.bf16.msra.mxu0 0
      %2182 = vmatprep.mubr.bf16.mxu0 %v2148
      %2183 = vmatmul.mubr.bf16.gmra.mrb[0].mxu0 %v2145
      %v2184 = vpop.f32.mrb[0].mxu0
      %v2185 = vadd.f32 %v2133, %v2184
      %v2186 = vpop.f32.mrb[0].mxu0
      %v2187 = vpop.f32.mrb[0].mxu0
      %v2188 = vpop.f32.mrb[0].mxu0
      %2189 = vdwg.mxu0
      %v2190 = vmax.f32 %v2185, 0.0
      %v2191 = vpack.c.bf16 %v2190, %v2190
      %v2192 = vld [vmem:[%s11] sm:$0xff]
      %v2193 = vld [vmem:[%s11 + $0x8] sm:$0xf]
      %v2194 = vld [vmem:[%s11 + $0xc] sm:$0xff]
      %v2195 = vld [vmem:[%s11 + $0x14] sm:$0xf]
      %v2196 = vld [vmem:[%s11 + $0x18] sm:$0xff]
      %v2197 = vld [vmem:[%s11 + $0x20] sm:$0xf]
      %v2198 = vld [vmem:[%s11 + $0x24] sm:$0xff]
      %v2199 = vld [vmem:[%s11 + $0x2c] sm:$0xf]
      %v2200 = vld [vmem:[%s11 + $0x30] sm:$0xff]
      %v2201 = vld [vmem:[%s11 + $0x38] sm:$0xf]
      %v2202 = vld [vmem:[%s11 + $0x3c] sm:$0xff]
      %v2203 = vld [vmem:[%s11 + $0x44] sm:$0xf]
      %v2204 = vld [vmem:[%s11 + $0x48] sm:$0xff]
      %v2205 = vld [vmem:[%s11 + $0x50] sm:$0xf]
      %v2206 = vld [vmem:[%s11 + $0x54] sm:$0xff]
      %v2207 = vld [vmem:[%s11 + $0x5c] sm:$0xf]
      %v2208 = vld [vmem:[%s11 + $0x60] sm:$0xff]
      %v2209 = vld [vmem:[%s11 + $0x68] sm:$0xf]
      %v2210 = vld [vmem:[%s11 + $0x6c] sm:$0xff]
      %v2211 = vld [vmem:[%s11 + $0x74] sm:$0xf]
      %v2212 = vld [vmem:[%s11 + $0x78] sm:$0xff]
      %v2213 = vld [vmem:[%s11 + $0x80] sm:$0xf]
      %v2214 = vld [vmem:[%s11 + $0x84] sm:$0xff]
      %v2215 = vld [vmem:[%s11 + $0x8c] sm:$0xf]
      %v2216 = vld [vmem:[%s11 + $0x90] sm:$0x33]
      %v2217 = vld [vmem:[%s11 + $0x98] sm:$0x3]
      %v2244 = vunpack.c.l.b16 %v2192
      %v2245 = vunpack.c.h.b16 %v2192
      %v2246 = vunpack.c.l.b16 %v2193
      %v2247 = vunpack.c.l.b16 %v2194
      %v2248 = vunpack.c.h.b16 %v2194
      %v2249 = vunpack.c.l.b16 %v2195
      %v2250 = vunpack.c.l.b16 %v2196
      %v2251 = vunpack.c.h.b16 %v2196
      %v2252 = vunpack.c.l.b16 %v2197
      %v2253 = vunpack.c.l.b16 %v2198
      %v2254 = vunpack.c.h.b16 %v2198
      %v2255 = vunpack.c.l.b16 %v2199
      %v2256 = vunpack.c.l.b16 %v2200
      %v2257 = vunpack.c.h.b16 %v2200
      %v2258 = vunpack.c.l.b16 %v2201
      %v2259 = vunpack.c.l.b16 %v2202
      %v2260 = vunpack.c.h.b16 %v2202
      %v2261 = vunpack.c.l.b16 %v2203
      %v2262 = vunpack.c.l.b16 %v2204
      %v2263 = vunpack.c.h.b16 %v2204
      %v2264 = vunpack.c.l.b16 %v2205
      %v2265 = vunpack.c.l.b16 %v2206
      %v2266 = vunpack.c.h.b16 %v2206
      %v2267 = vunpack.c.l.b16 %v2207
      %v2268 = vunpack.c.l.b16 %v2208
      %v2269 = vunpack.c.h.b16 %v2208
      %v2270 = vunpack.c.l.b16 %v2209
      %v2271 = vunpack.c.l.b16 %v2210
      %v2272 = vunpack.c.h.b16 %v2210
      %v2273 = vunpack.c.l.b16 %v2211
      %v2274 = vunpack.c.l.b16 %v2212
      %v2275 = vunpack.c.h.b16 %v2212
      %v2276 = vunpack.c.l.b16 %v2213
      %v2277 = vunpack.c.l.b16 %v2214
      %v2278 = vunpack.c.h.b16 %v2214
      %v2279 = vunpack.c.l.b16 %v2215
      %v2280 = vunpack.c.l.b16 %v2216
      %v2281 = vunpack.c.h.b16 %v2216
      %v2282 = vunpack.c.l.b16 %v2217
      %v2283 = vpack.c.b16 %v2247, %v2244
      %v2284 = vpack.c.b16 %v2248, %v2245
      %v2285 = vpack.c.b16 %v2249, %v2246
      %v2286 = vpack.c.b16 %v2253, %v2250
      %v2287 = vpack.c.b16 %v2254, %v2251
      %v2288 = vpack.c.b16 %v2255, %v2252
      %v2289 = vpack.c.b16 %v2259, %v2256
      %v2290 = vpack.c.b16 %v2260, %v2257
      %v2291 = vpack.c.b16 %v2261, %v2258
      %v2292 = vpack.c.b16 %v2265, %v2262
      %v2293 = vpack.c.b16 %v2266, %v2263
      %v2294 = vpack.c.b16 %v2267, %v2264
      %v2295 = vpack.c.b16 %v2271, %v2268
      %v2296 = vpack.c.b16 %v2272, %v2269
      %v2297 = vpack.c.b16 %v2273, %v2270
      %v2298 = vpack.c.b16 %v2277, %v2274
      %v2299 = vpack.c.b16 %v2278, %v2275
      %v2300 = vpack.c.b16 %v2279, %v2276
      %v2301 = vpack.c.b16 %v2280, %v2280
      %v2302 = vpack.c.b16 %v2281, %v2281
      %v2303 = vpack.c.b16 %v2282, %v2282
      %v2323 = vsel %vm1086, %v2191, 0
      %v2326 = vsel %vm839, %v2301, 0
      %v2329 = vsel %vm839, %v2302, 0
      %v2332 = vsel %vm839, %v2303, 0
      %2334 = vmatprep.subr.bf16.mxu0 %v2284
      %2335 = vmatpush1.bf16.msra.mxu0 %v2283
      %2336 = vmatprep.subr.bf16.mxu0 %v2287
      %2337 = vmatpush1.bf16.msra.mxu0 %v2286
      %2338 = vmatprep.subr.bf16.mxu0 %v2290
      %2339 = vmatpush1.bf16.msra.mxu0 %v2289
      %2340 = vmatprep.subr.bf16.mxu0 %v2293
      %2341 = vmatpush1.bf16.msra.mxu0 %v2292
      %2342 = vmatprep.subr.bf16.mxu0 %v2296
      %2343 = vmatpush1.bf16.msra.mxu0 %v2295
      %2344 = vmatprep.subr.bf16.mxu0 %v2299
      %2345 = vmatpush1.bf16.msra.mxu0 %v2298
      %2346 = vmatprep.subr.bf16.mxu0 %v2329
      %2347 = vmatpush1.bf16.msra.mxu0 %v2326
      %2348 = vmatprep.subr.bf16.mxu0 0
      %2349 = vmatpush1.bf16.msra.mxu0 0
      %2350 = vmatprep.subr.bf16.mxu0 0
      %2351 = vmatpush1.bf16.msra.mxu0 0
      %2352 = vmatprep.subr.bf16.mxu0 0
      %2353 = vmatpush1.bf16.msra.mxu0 0
      %2354 = vmatprep.subr.bf16.mxu0 0
      %2355 = vmatpush1.bf16.msra.mxu0 0
      %2356 = vmatprep.subr.bf16.mxu0 0
      %2357 = vmatpush1.bf16.msra.mxu0 0
      %2358 = vmatprep.subr.bf16.mxu0 0
      %2359 = vmatpush1.bf16.msra.mxu0 0
      %2360 = vmatprep.subr.bf16.mxu0 0
      %2361 = vmatpush1.bf16.msra.mxu0 0
      %2362 = vmatprep.subr.bf16.mxu0 0
      %2363 = vmatpush1.bf16.msra.mxu0 0
      %2364 = vmatprep.subr.bf16.mxu0 0
      %2365 = vmatpush1.bf16.msra.mxu0 0
      %2366 = vmatprep.mubr.bf16.mxu0 0
      %2367 = vmatmul.mubr.bf16.gmra.mrb[0].mxu0 %v2323
      %v2368 = vpop.f32.mrb[0].mxu0
      %v2369 = vadd.f32 0.0, %v2368
      %v2370 = vpop.f32.mrb[0].mxu0
      %v2371 = vadd.f32 0.0, %v2370
      %v2372 = vpop.f32.mrb[0].mxu0
      %v2373 = vpop.f32.mrb[0].mxu0
      %2374 = vdwg.mxu0
      %2375 = vmatprep.subr.bf16.mxu0 0
      %2376 = vmatpush1.bf16.msra.mxu0 %v2285
      %2377 = vmatprep.subr.bf16.mxu0 0
      %2378 = vmatpush1.bf16.msra.mxu0 %v2288
      %2379 = vmatprep.subr.bf16.mxu0 0
      %2380 = vmatpush1.bf16.msra.mxu0 %v2291
      %2381 = vmatprep.subr.bf16.mxu0 0
      %2382 = vmatpush1.bf16.msra.mxu0 %v2294
      %2383 = vmatprep.subr.bf16.mxu0 0
      %2384 = vmatpush1.bf16.msra.mxu0 %v2297
      %2385 = vmatprep.subr.bf16.mxu0 0
      %2386 = vmatpush1.bf16.msra.mxu0 %v2300
      %2387 = vmatprep.subr.bf16.mxu0 0
      %2388 = vmatpush1.bf16.msra.mxu0 %v2332
      %2389 = vmatprep.subr.bf16.mxu0 0
      %2390 = vmatpush1.bf16.msra.mxu0 0
      %2391 = vmatprep.subr.bf16.mxu0 0
      %2392 = vmatpush1.bf16.msra.mxu0 0
      %2393 = vmatprep.subr.bf16.mxu0 0
      %2394 = vmatpush1.bf16.msra.mxu0 0
      %2395 = vmatprep.subr.bf16.mxu0 0
      %2396 = vmatpush1.bf16.msra.mxu0 0
      %2397 = vmatprep.subr.bf16.mxu0 0
      %2398 = vmatpush1.bf16.msra.mxu0 0
      %2399 = vmatprep.subr.bf16.mxu0 0
      %2400 = vmatpush1.bf16.msra.mxu0 0
      %2401 = vmatprep.subr.bf16.mxu0 0
      %2402 = vmatpush1.bf16.msra.mxu0 0
      %2403 = vmatprep.subr.bf16.mxu0 0
      %2404 = vmatpush1.bf16.msra.mxu0 0
      %2405 = vmatprep.subr.bf16.mxu0 0
      %2406 = vmatpush1.bf16.msra.mxu0 0
      %2407 = vmatprep.mubr.bf16.mxu0 0
      %2408 = vmatmul.mubr.bf16.gmra.mrb[0].mxu0 %v2323
      %v2409 = vpop.f32.mrb[0].mxu0
      %v2410 = vadd.f32 0.0, %v2409
      %v2411 = vpop.f32.mrb[0].mxu0
      %v2412 = vpop.f32.mrb[0].mxu0
      %v2413 = vpop.f32.mrb[0].mxu0
      %2414 = vdwg.mxu0
      %v2415 = vpack.c.bf16 %v2369, %v2369
      %v2416 = vpack.c.bf16 %v2371, %v2371
      %v2417 = vpack.c.bf16 %v2410, %v2410
      %v2421 = vunpack.c.l.b16 %v2415
      %v2422 = vunpack.c.l.b16 %v2416
      %v2423 = vunpack.c.l.b16 %v2417
      %v2424 = vpack.c.b16 %v2422, %v2421
      %v2425 = vpack.c.b16 %v2423, %v2423
      %2426 = vrot.lane.b32.xlu0 %v2424, 19
      %v2427 = vpop.permute.xlu0 %2426
      %2428 = vrot.lane.b32.xlu0 %v2425, 19
      %v2429 = vpop.permute.xlu0 %2428
      %v2430 = vrot.slane %v2427, 4
      %vm2431 = vcmask 154624
      %v2432 = vsel %vm2431, %v2430, %v2427
      %v2433 = vsel %vm2431, %v2430, %v2429
      %vm2436 = vcmask 1043608
      %vm2437 = vcmask 1047556
      %vm2438 = vmor %vm2437, %vm2436
      %2439 = vst.msk [vmem:[#allocation9] sm:$0xff] %vm2438, %v2432
      %vm2440 = vcmask 707584
      %2441 = vst.msk [vmem:[#allocation9 + $0x8] sm:$0xf] %vm2440, %v2433
      %v2442 = vld [vmem:[#allocation9] sm:$0xff]
      %v2443 = vld [vmem:[#allocation9 + $0x8] sm:$0xf]
      %v2446 = vunpack.c.l.b16 %v2442
      %v2447 = vunpack.c.h.b16 %v2442
      %v2448 = vunpack.c.l.b16 %v2443
      %v2449 = vpack.c.b16 %v2446, %v2446
      %v2450 = vpack.c.b16 %v2447, %v2447
      %v2451 = vpack.c.b16 %v2448, %v2448
      %2452 = vrot.lane.b32.xlu0 %v2449, 127
      %v2453 = vpop.permute.xlu0 %2452
      %2454 = vrot.lane.b32.xlu0 %v2450, 127
      %v2455 = vpop.permute.xlu0 %2454
      %2456 = vrot.lane.b32.xlu0 %v2451, 127
      %v2457 = vpop.permute.xlu0 %2456
      %v2458 = vsel %vm450, %v2453, %v2455
      %v2459 = vsel %vm450, %v2455, %v2457
      %2460 = vrot.lane.b32.xlu0 %v2449, 126
      %v2461 = vpop.permute.xlu0 %2460
      %2462 = vrot.lane.b32.xlu0 %v2450, 126
      %v2463 = vpop.permute.xlu0 %2462
      %2464 = vrot.lane.b32.xlu0 %v2451, 126
      %v2465 = vpop.permute.xlu0 %2464
      %v2466 = vsel %vm459, %v2461, %v2463
      %v2467 = vsel %vm459, %v2463, %v2465
      %2468 = vrot.lane.b32.xlu0 %v2449, 110
      %v2469 = vpop.permute.xlu0 %2468
      %2470 = vrot.lane.b32.xlu0 %v2450, 110
      %v2471 = vpop.permute.xlu0 %2470
      %2472 = vrot.lane.b32.xlu0 %v2451, 110
      %v2473 = vpop.permute.xlu0 %2472
      %v2474 = vsel %vm468, %v2469, %v2471
      %v2475 = vsel %vm468, %v2471, %v2473
      %2476 = vrot.lane.b32.xlu0 %v2449, 109
      %v2477 = vpop.permute.xlu0 %2476
      %2478 = vrot.lane.b32.xlu0 %v2450, 109
      %v2479 = vpop.permute.xlu0 %2478
      %2480 = vrot.lane.b32.xlu0 %v2451, 109
      %v2481 = vpop.permute.xlu0 %2480
      %v2482 = vsel %vm477, %v2477, %v2479
      %v2483 = vsel %vm477, %v2479, %v2481
      %2484 = vrot.lane.b32.xlu0 %v2449, 108
      %v2485 = vpop.permute.xlu0 %2484
      %2486 = vrot.lane.b32.xlu0 %v2450, 108
      %v2487 = vpop.permute.xlu0 %2486
      %2488 = vrot.lane.b32.xlu0 %v2451, 108
      %v2489 = vpop.permute.xlu0 %2488
      %v2490 = vsel %vm486, %v2485, %v2487
      %v2491 = vsel %vm486, %v2487, %v2489
      %2492 = vrot.lane.b32.xlu0 %v2449, 92
      %v2493 = vpop.permute.xlu0 %2492
      %2494 = vrot.lane.b32.xlu0 %v2450, 92
      %v2495 = vpop.permute.xlu0 %2494
      %2496 = vrot.lane.b32.xlu0 %v2451, 92
      %v2497 = vpop.permute.xlu0 %2496
      %v2498 = vsel %vm495, %v2493, %v2495
      %v2499 = vsel %vm495, %v2495, %v2497
      %2500 = vrot.lane.b32.xlu0 %v2449, 91
      %v2501 = vpop.permute.xlu0 %2500
      %2502 = vrot.lane.b32.xlu0 %v2450, 91
      %v2503 = vpop.permute.xlu0 %2502
      %2504 = vrot.lane.b32.xlu0 %v2451, 91
      %v2505 = vpop.permute.xlu0 %2504
      %v2506 = vsel %vm504, %v2501, %v2503
      %v2507 = vsel %vm504, %v2503, %v2505
      %2508 = vrot.lane.b32.xlu0 %v2449, 90
      %v2509 = vpop.permute.xlu0 %2508
      %2510 = vrot.lane.b32.xlu0 %v2450, 90
      %v2511 = vpop.permute.xlu0 %2510
      %2512 = vrot.lane.b32.xlu0 %v2451, 90
      %v2513 = vpop.permute.xlu0 %2512
      %v2514 = vsel %vm513, %v2509, %v2511
      %v2515 = vsel %vm513, %v2511, %v2513
      %v2518 = vsel %vm430, %v2449, %v2458
      %v2522 = vsel %vm430, %v2450, %v2459
      %v2526 = vsel %vm430, %v2451, %v2457
      %v2530 = vsel %vm430, %v2466, %v2474
      %v2534 = vsel %vm430, %v2467, %v2475
      %v2538 = vsel %vm430, %v2465, %v2473
      %v2542 = vsel %vm430, %v2482, %v2490
      %v2546 = vsel %vm430, %v2483, %v2491
      %v2550 = vsel %vm430, %v2481, %v2489
      %v2554 = vsel %vm430, %v2498, %v2506
      %v2558 = vsel %vm430, %v2499, %v2507
      %v2562 = vsel %vm430, %v2497, %v2505
      %v2564 = vld [vmem:[%s1 + $0x18] sm:$0xf]
      %v2565 = vld [vmem:[%s2] sm:$0xff]
      %2567 = vset.pattern.permute.xlu0 8
      %2568 = vperm.xlu0 %2567, %v2565
      %v2569 = vpop.permute.xlu0 %2568
      %v2572 = vunpack.c.l.b16 %v2564
      %v2573 = vpack.c.b16 %v2572, %v2572
      %2574 = vrot.lane.b32.xlu0 %v2573, 104
      %v2575 = vpop.permute.xlu0 %2574
      %v2577 = vsel %vm571, %v2575, 0
      %v2580 = vsel %vm430, %v2514, 0
      %v2583 = vsel %vm430, %v2515, 0
      %v2586 = vsel %vm430, %v2513, 0
      %2588 = vmatprep.subr.bf16.mxu0 %v2522
      %2589 = vmatpush1.bf16.msra.mxu0 %v2518
      %2590 = vmatprep.subr.bf16.mxu0 %v2534
      %2591 = vmatpush1.bf16.msra.mxu0 %v2530
      %2592 = vmatprep.subr.bf16.mxu0 %v2546
      %2593 = vmatpush1.bf16.msra.mxu0 %v2542
      %2594 = vmatprep.subr.bf16.mxu0 %v2558
      %2595 = vmatpush1.bf16.msra.mxu0 %v2554
      %2596 = vmatprep.subr.bf16.mxu0 %v2583
      %2597 = vmatpush1.bf16.msra.mxu0 %v2580
      %2598 = vmatprep.subr.bf16.mxu0 0
      %2599 = vmatpush1.bf16.msra.mxu0 0
      %2600 = vmatprep.subr.bf16.mxu0 0
      %2601 = vmatpush1.bf16.msra.mxu0 0
      %2602 = vmatprep.subr.bf16.mxu0 0
      %2603 = vmatpush1.bf16.msra.mxu0 0
      %2604 = vmatprep.subr.bf16.mxu0 0
      %2605 = vmatpush1.bf16.msra.mxu0 0
      %2606 = vmatprep.subr.bf16.mxu0 0
      %2607 = vmatpush1.bf16.msra.mxu0 0
      %2608 = vmatprep.subr.bf16.mxu0 0
      %2609 = vmatpush1.bf16.msra.mxu0 0
      %2610 = vmatprep.subr.bf16.mxu0 0
      %2611 = vmatpush1.bf16.msra.mxu0 0
      %2612 = vmatprep.subr.bf16.mxu0 0
      %2613 = vmatpush1.bf16.msra.mxu0 0
      %2614 = vmatprep.subr.bf16.mxu0 0
      %2615 = vmatpush1.bf16.msra.mxu0 0
      %2616 = vmatprep.subr.bf16.mxu0 0
      %2617 = vmatpush1.bf16.msra.mxu0 0
      %2618 = vmatprep.subr.bf16.mxu0 0
      %2619 = vmatpush1.bf16.msra.mxu0 0
      %2620 = vmatprep.mubr.bf16.mxu0 0
      %2621 = vmatmul.mubr.bf16.gmra.mrb[0].mxu0 %v2577
      %v2622 = vpop.f32.mrb[0].mxu0
      %v2623 = vadd.f32 %v2569, %v2622
      %v2624 = vpop.f32.mrb[0].mxu0
      %v2625 = vadd.f32 %v2569, %v2624
      %v2626 = vpop.f32.mrb[0].mxu0
      %v2627 = vpop.f32.mrb[0].mxu0
      %2628 = vdwg.mxu0
      %2629 = vmatprep.subr.bf16.mxu0 0
      %2630 = vmatpush1.bf16.msra.mxu0 %v2526
      %2631 = vmatprep.subr.bf16.mxu0 0
      %2632 = vmatpush1.bf16.msra.mxu0 %v2538
      %2633 = vmatprep.subr.bf16.mxu0 0
      %2634 = vmatpush1.bf16.msra.mxu0 %v2550
      %2635 = vmatprep.subr.bf16.mxu0 0
      %2636 = vmatpush1.bf16.msra.mxu0 %v2562
      %2637 = vmatprep.subr.bf16.mxu0 0
      %2638 = vmatpush1.bf16.msra.mxu0 %v2586
      %2639 = vmatprep.subr.bf16.mxu0 0
      %2640 = vmatpush1.bf16.msra.mxu0 0
      %2641 = vmatprep.subr.bf16.mxu0 0
      %2642 = vmatpush1.bf16.msra.mxu0 0
      %2643 = vmatprep.subr.bf16.mxu0 0
      %2644 = vmatpush1.bf16.msra.mxu0 0
      %2645 = vmatprep.subr.bf16.mxu0 0
      %2646 = vmatpush1.bf16.msra.mxu0 0
      %2647 = vmatprep.subr.bf16.mxu0 0
      %2648 = vmatpush1.bf16.msra.mxu0 0
      %2649 = vmatprep.subr.bf16.mxu0 0
      %2650 = vmatpush1.bf16.msra.mxu0 0
      %2651 = vmatprep.subr.bf16.mxu0 0
      %2652 = vmatpush1.bf16.msra.mxu0 0
      %2653 = vmatprep.subr.bf16.mxu0 0
      %2654 = vmatpush1.bf16.msra.mxu0 0
      %2655 = vmatprep.subr.bf16.mxu0 0
      %2656 = vmatpush1.bf16.msra.mxu0 0
      %2657 = vmatprep.subr.bf16.mxu0 0
      %2658 = vmatpush1.bf16.msra.mxu0 0
      %2659 = vmatprep.subr.bf16.mxu0 0
      %2660 = vmatpush1.bf16.msra.mxu0 0
      %2661 = vmatprep.mubr.bf16.mxu0 0
      %2662 = vmatmul.mubr.bf16.gmra.mrb[0].mxu0 %v2577
      %v2663 = vpop.f32.mrb[0].mxu0
      %v2664 = vadd.f32 %v2569, %v2663
      %v2665 = vpop.f32.mrb[0].mxu0
      %v2666 = vpop.f32.mrb[0].mxu0
      %v2667 = vpop.f32.mrb[0].mxu0
      %2668 = vdwg.mxu0
      %v2669 = vmax.f32 %v2623, 0.0
      %v2670 = vmax.f32 %v2625, 0.0
      %v2671 = vmax.f32 %v2664, 0.0
      %v2672 = vld [vmem:[%s3] sm:$0x7]
      %vm2673 = vcmp.gt.f32.partialorder %v2672, 0.5
      %v2674 = vsel %vm2673, 1, 0
      %v2675 = vlaneseq
      %v2676 = vshrl.u32 %v2675, 7
      %v2677 = vsub.s32 0, %v2676
      %v2678 = vrot.slane %v2674, %v2677
      %v2679 = vlaneseq
      %v2680 = vshrl.u32 %v2679, 7
      %v2681 = vsub.s32 1, %v2680
      %v2682 = vrot.slane %v2674, %v2681
      %v2683 = vlaneseq
      %v2684 = vshrl.u32 %v2683, 7
      %v2685 = vsub.s32 2, %v2684
      %v2686 = vrot.slane %v2674, %v2685
      %vm2687 = vcmp.eq.s32.totalorder %v2678, 1
      %vm2688 = vcmp.eq.s32.totalorder %v2682, 1
      %vm2689 = vcmp.eq.s32.totalorder %v2686, 1
      %v2690 = vsel %vm2687, %v2669, 0.0
      %v2691 = vsel %vm2688, %v2670, 0.0
      %v2692 = vsel %vm2689, %v2671, 0.0
      %v2693 = vpack.c.bf16 %v2690, %v2690
      %v2694 = vpack.c.bf16 %v2691, %v2691
      %v2695 = vpack.c.bf16 %v2692, %v2692
      %v2699 = vunpack.c.l.b16 %v2693
      %v2700 = vunpack.c.l.b16 %v2694
      %v2701 = vunpack.c.l.b16 %v2695
      %v2702 = vpack.c.b16 %v2700, %v2699
      %v2703 = vpack.c.b16 %v2701, %v2701
      %2704 = vrot.lane.b32.xlu0 %v2702, 19
      %v2705 = vpop.permute.xlu0 %2704
      %2706 = vrot.lane.b32.xlu0 %v2703, 19
      %v2707 = vpop.permute.xlu0 %2706
      %v2708 = vrot.slane %v2705, 4
      %v2709 = vsel %vm2431, %v2708, %v2705
      %v2710 = vsel %vm2431, %v2708, %v2707
      %2713 = vst.msk [vmem:[#allocation10] sm:$0xff] %vm2438, %v2709
      %2714 = vst.msk [vmem:[#allocation10 + $0x8] sm:$0xf] %vm2440, %v2710
      %v2715 = vld [vmem:[#allocation10] sm:$0xff]
      %v2716 = vld [vmem:[#allocation10 + $0x8] sm:$0xf]
      %v2717 = vld [vmem:[#allocation10 + $0x8] sm:$0xff]
      %v2720 = vunpack.c.l.b16 %v2715
      %v2721 = vunpack.c.h.b16 %v2715
      %v2722 = vunpack.c.l.b16 %v2716
      %v2723 = vpack.c.b16 %v2720, %v2720
      %v2724 = vpack.c.b16 %v2721, %v2721
      %v2725 = vpack.c.b16 %v2722, %v2722
      %v2727 = vunpack.c.l.b16 %v2717
      %v2728 = vunpack.c.h.b16 %v2717
      %v2729 = vpack.c.b16 %v2727, %v2727
      %v2730 = vpack.c.b16 %v2728, %v2728
      %2731 = vrot.lane.b32.xlu0 %v2723, 127
      %v2732 = vpop.permute.xlu0 %2731
      %2733 = vrot.lane.b32.xlu0 %v2724, 127
      %v2734 = vpop.permute.xlu0 %2733
      %2735 = vrot.lane.b32.xlu0 %v2729, 127
      %v2736 = vpop.permute.xlu0 %2735
      %2737 = vrot.lane.b32.xlu0 %v2730, 127
      %v2738 = vpop.permute.xlu0 %2737
      %v2739 = vsel %vm450, %v2732, %v2734
      %v2740 = vsel %vm450, %v2734, %v2736
      %v2741 = vsel %vm450, %v2736, %v2738
      %2742 = vrot.lane.b32.xlu0 %v2723, 126
      %v2743 = vpop.permute.xlu0 %2742
      %2744 = vrot.lane.b32.xlu0 %v2724, 126
      %v2745 = vpop.permute.xlu0 %2744
      %2746 = vrot.lane.b32.xlu0 %v2729, 126
      %v2747 = vpop.permute.xlu0 %2746
      %2748 = vrot.lane.b32.xlu0 %v2730, 126
      %v2749 = vpop.permute.xlu0 %2748
      %v2750 = vsel %vm459, %v2743, %v2745
      %v2751 = vsel %vm459, %v2745, %v2747
      %v2752 = vsel %vm459, %v2747, %v2749
      %2753 = vrot.lane.b32.xlu0 %v2723, 110
      %v2754 = vpop.permute.xlu0 %2753
      %2755 = vrot.lane.b32.xlu0 %v2724, 110
      %v2756 = vpop.permute.xlu0 %2755
      %2757 = vrot.lane.b32.xlu0 %v2729, 110
      %v2758 = vpop.permute.xlu0 %2757
      %2759 = vrot.lane.b32.xlu0 %v2730, 110
      %v2760 = vpop.permute.xlu0 %2759
      %v2761 = vsel %vm468, %v2754, %v2756
      %v2762 = vsel %vm468, %v2756, %v2758
      %v2763 = vsel %vm468, %v2758, %v2760
      %2764 = vrot.lane.b32.xlu0 %v2723, 109
      %v2765 = vpop.permute.xlu0 %2764
      %2766 = vrot.lane.b32.xlu0 %v2724, 109
      %v2767 = vpop.permute.xlu0 %2766
      %2768 = vrot.lane.b32.xlu0 %v2729, 109
      %v2769 = vpop.permute.xlu0 %2768
      %2770 = vrot.lane.b32.xlu0 %v2730, 109
      %v2771 = vpop.permute.xlu0 %2770
      %v2772 = vsel %vm477, %v2765, %v2767
      %v2773 = vsel %vm477, %v2767, %v2769
      %v2774 = vsel %vm477, %v2769, %v2771
      %2775 = vrot.lane.b32.xlu0 %v2723, 108
      %v2776 = vpop.permute.xlu0 %2775
      %2777 = vrot.lane.b32.xlu0 %v2724, 108
      %v2778 = vpop.permute.xlu0 %2777
      %2779 = vrot.lane.b32.xlu0 %v2729, 108
      %v2780 = vpop.permute.xlu0 %2779
      %2781 = vrot.lane.b32.xlu0 %v2730, 108
      %v2782 = vpop.permute.xlu0 %2781
      %v2783 = vsel %vm486, %v2776, %v2778
      %v2784 = vsel %vm486, %v2778, %v2780
      %v2785 = vsel %vm486, %v2780, %v2782
      %2786 = vrot.lane.b32.xlu0 %v2723, 92
      %v2787 = vpop.permute.xlu0 %2786
      %2788 = vrot.lane.b32.xlu0 %v2724, 92
      %v2789 = vpop.permute.xlu0 %2788
      %2790 = vrot.lane.b32.xlu0 %v2729, 92
      %v2791 = vpop.permute.xlu0 %2790
      %2792 = vrot.lane.b32.xlu0 %v2730, 92
      %v2793 = vpop.permute.xlu0 %2792
      %v2794 = vsel %vm495, %v2787, %v2789
      %v2795 = vsel %vm495, %v2789, %v2791
      %v2796 = vsel %vm495, %v2791, %v2793
      %2797 = vrot.lane.b32.xlu0 %v2723, 91
      %v2798 = vpop.permute.xlu0 %2797
      %2799 = vrot.lane.b32.xlu0 %v2724, 91
      %v2800 = vpop.permute.xlu0 %2799
      %2801 = vrot.lane.b32.xlu0 %v2729, 91
      %v2802 = vpop.permute.xlu0 %2801
      %2803 = vrot.lane.b32.xlu0 %v2730, 91
      %v2804 = vpop.permute.xlu0 %2803
      %v2805 = vsel %vm504, %v2798, %v2800
      %v2806 = vsel %vm504, %v2800, %v2802
      %v2807 = vsel %vm504, %v2802, %v2804
      %2808 = vrot.lane.b32.xlu0 %v2723, 90
      %v2809 = vpop.permute.xlu0 %2808
      %2810 = vrot.lane.b32.xlu0 %v2724, 90
      %v2811 = vpop.permute.xlu0 %2810
      %2812 = vrot.lane.b32.xlu0 %v2729, 90
      %v2813 = vpop.permute.xlu0 %2812
      %2814 = vrot.lane.b32.xlu0 %v2730, 90
      %v2815 = vpop.permute.xlu0 %2814
      %v2816 = vsel %vm513, %v2809, %v2811
      %v2817 = vsel %vm513, %v2811, %v2813
      %v2818 = vsel %vm513, %v2813, %v2815
      %v2821 = vsel %vm430, %v2723, %v2739
      %v2825 = vsel %vm430, %v2724, %v2740
      %v2829 = vsel %vm430, %v2725, %v2741
      %v2833 = vsel %vm430, %v2750, %v2761
      %v2837 = vsel %vm430, %v2751, %v2762
      %v2841 = vsel %vm430, %v2752, %v2763
      %v2845 = vsel %vm430, %v2772, %v2783
      %v2849 = vsel %vm430, %v2773, %v2784
      %v2853 = vsel %vm430, %v2774, %v2785
      %v2857 = vsel %vm430, %v2794, %v2805
      %v2861 = vsel %vm430, %v2795, %v2806
      %v2865 = vsel %vm430, %v2796, %v2807
      %v2867 = vld [vmem:[%s1 + $0x18] sm:$0xff]
      %v2868 = vld [vmem:[%s2] sm:$0xff]
      %2870 = vset.pattern.permute.xlu0 9
      %2871 = vperm.xlu0 %2870, %v2868
      %v2872 = vpop.permute.xlu0 %2871
      %v2875 = vunpack.c.l.b16 %v2867
      %v2876 = vunpack.c.h.b16 %v2867
      %v2877 = vpack.c.b16 %v2875, %v2875
      %v2878 = vpack.c.b16 %v2876, %v2876
      %2879 = vrot.lane.b32.xlu0 %v2877, 32
      %v2880 = vpop.permute.xlu0 %2879
      %2881 = vrot.lane.b32.xlu0 %v2878, 32
      %v2882 = vpop.permute.xlu0 %2881
      %vm2883 = vcmask 261120
      %v2884 = vsel %vm2883, %v2880, %v2882
      %v2886 = vsel %vm571, %v2884, 0
      %v2889 = vsel %vm430, %v2816, 0
      %v2892 = vsel %vm430, %v2817, 0
      %v2895 = vsel %vm430, %v2818, 0
      %2897 = vmatprep.subr.bf16.mxu0 %v2825
      %2898 = vmatpush1.bf16.msra.mxu0 %v2821
      %2899 = vmatprep.subr.bf16.mxu0 %v2837
      %2900 = vmatpush1.bf16.msra.mxu0 %v2833
      %2901 = vmatprep.subr.bf16.mxu0 %v2849
      %2902 = vmatpush1.bf16.msra.mxu0 %v2845
      %2903 = vmatprep.subr.bf16.mxu0 %v2861
      %2904 = vmatpush1.bf16.msra.mxu0 %v2857
      %2905 = vmatprep.subr.bf16.mxu0 %v2892
      %2906 = vmatpush1.bf16.msra.mxu0 %v2889
      %2907 = vmatprep.subr.bf16.mxu0 0
      %2908 = vmatpush1.bf16.msra.mxu0 0
      %2909 = vmatprep.subr.bf16.mxu0 0
      %2910 = vmatpush1.bf16.msra.mxu0 0
      %2911 = vmatprep.subr.bf16.mxu0 0
      %2912 = vmatpush1.bf16.msra.mxu0 0
      %2913 = vmatprep.subr.bf16.mxu0 0
      %2914 = vmatpush1.bf16.msra.mxu0 0
      %2915 = vmatprep.subr.bf16.mxu0 0
      %2916 = vmatpush1.bf16.msra.mxu0 0
      %2917 = vmatprep.subr.bf16.mxu0 0
      %2918 = vmatpush1.bf16.msra.mxu0 0
      %2919 = vmatprep.subr.bf16.mxu0 0
      %2920 = vmatpush1.bf16.msra.mxu0 0
      %2921 = vmatprep.subr.bf16.mxu0 0
      %2922 = vmatpush1.bf16.msra.mxu0 0
      %2923 = vmatprep.subr.bf16.mxu0 0
      %2924 = vmatpush1.bf16.msra.mxu0 0
      %2925 = vmatprep.subr.bf16.mxu0 0
      %2926 = vmatpush1.bf16.msra.mxu0 0
      %2927 = vmatprep.subr.bf16.mxu0 0
      %2928 = vmatpush1.bf16.msra.mxu0 0
      %2929 = vmatprep.mubr.bf16.mxu0 0
      %2930 = vmatmul.mubr.bf16.gmra.mrb[0].mxu0 %v2886
      %v2931 = vpop.f32.mrb[0].mxu0
      %v2932 = vadd.f32 %v2872, %v2931
      %v2933 = vpop.f32.mrb[0].mxu0
      %v2934 = vadd.f32 %v2872, %v2933
      %v2935 = vpop.f32.mrb[0].mxu0
      %v2936 = vpop.f32.mrb[0].mxu0
      %2937 = vdwg.mxu0
      %2938 = vmatprep.subr.bf16.mxu0 0
      %2939 = vmatpush1.bf16.msra.mxu0 %v2829
      %2940 = vmatprep.subr.bf16.mxu0 0
      %2941 = vmatpush1.bf16.msra.mxu0 %v2841
      %2942 = vmatprep.subr.bf16.mxu0 0
      %2943 = vmatpush1.bf16.msra.mxu0 %v2853
      %2944 = vmatprep.subr.bf16.mxu0 0
      %2945 = vmatpush1.bf16.msra.mxu0 %v2865
      %2946 = vmatprep.subr.bf16.mxu0 0
      %2947 = vmatpush1.bf16.msra.mxu0 %v2895
      %2948 = vmatprep.subr.bf16.mxu0 0
      %2949 = vmatpush1.bf16.msra.mxu0 0
      %2950 = vmatprep.subr.bf16.mxu0 0
      %2951 = vmatpush1.bf16.msra.mxu0 0
      %2952 = vmatprep.subr.bf16.mxu0 0
      %2953 = vmatpush1.bf16.msra.mxu0 0
      %2954 = vmatprep.subr.bf16.mxu0 0
      %2955 = vmatpush1.bf16.msra.mxu0 0
      %2956 = vmatprep.subr.bf16.mxu0 0
      %2957 = vmatpush1.bf16.msra.mxu0 0
      %2958 = vmatprep.subr.bf16.mxu0 0
      %2959 = vmatpush1.bf16.msra.mxu0 0
      %2960 = vmatprep.subr.bf16.mxu0 0
      %2961 = vmatpush1.bf16.msra.mxu0 0
      %2962 = vmatprep.subr.bf16.mxu0 0
      %2963 = vmatpush1.bf16.msra.mxu0 0
      %2964 = vmatprep.subr.bf16.mxu0 0
      %2965 = vmatpush1.bf16.msra.mxu0 0
      %2966 = vmatprep.subr.bf16.mxu0 0
      %2967 = vmatpush1.bf16.msra.mxu0 0
      %2968 = vmatprep.subr.bf16.mxu0 0
      %2969 = vmatpush1.bf16.msra.mxu0 0
      %2970 = vmatprep.mubr.bf16.mxu0 0
      %2971 = vmatmul.mubr.bf16.gmra.mrb[0].mxu0 %v2886
      %v2972 = vpop.f32.mrb[0].mxu0
      %v2973 = vadd.f32 %v2872, %v2972
      %v2974 = vpop.f32.mrb[0].mxu0
      %v2975 = vpop.f32.mrb[0].mxu0
      %v2976 = vpop.f32.mrb[0].mxu0
      %2977 = vdwg.mxu0
      %v2978 = vmax.f32 %v2932, 0.0
      %v2979 = vmax.f32 %v2934, 0.0
      %v2980 = vmax.f32 %v2973, 0.0
      %2981 = vst [vmem:[%s413] sm:$0xff] %v2978
      %2982 = vst [vmem:[%s413 + $0x8] sm:$0xff] %v2979
      %2983 = vst [vmem:[%s413 + $0x10] sm:$0xff] %v2980
      %p2984 = scmp.lt.s32.totalorder %s23, 1
      %s2985 = scalar_select %p2984, %s23, 1
      %s2986 = smul.addr %s2985, 3
      %s2987 = smul.addr %s2986, 8
      %s2988 = scalar_lea.vmem %s12, %s2987
      // Predicated region
      $region69: #{_lambda_.1} parent=67 // pred_check
        %p2989 = pneg %p298
      $region70: #{_lambda_.1} parent=67 // pred_check_branch
        %2991 = sbr.rel (%p2989) target = $region72
      $region71: #{_lambda_.1} parent=67 // pred_region
        _
      $region72: #{_lambda_.1} parent=67 // pred_fallthru
        _
    $region68: #{_lambda_.1} parent=5 // pred_fallthru
      _
    %p2992 = scmp.le.s32.totalorder 2, %s18
    // Predicated region
    $region73: #{_lambda_.1} parent=5 // pred_check
      %p2993 = pneg %p2992
    $region74: #{_lambda_.1} parent=5 // pred_check_branch
      %2995 = sbr.rel (%p2993) target = $region76
    $region75: #{_lambda_.1} parent=5 // pred_region
      %s2996 = ssub.s32 %s18, 2
      // Predicated region
      $region77: #{_lambda_.1} parent=75 // pred_check
        %p2997 = pneg %p304
      $region78: #{_lambda_.1} parent=75 // pred_check_branch
        %2999 = sbr.rel (%p2997) target = $region80
      $region79: #{_lambda_.1} parent=75 // pred_region
        %p3000 = scmp.lt.s32.totalorder %s24, 1
        %s3001 = scalar_select %p3000, %s24, 1
        %s3002 = smul.addr %s3001, 3
        %s3003 = smul.addr %s3002, 8
        %s3004 = scalar_lea.vmem %s12, %s3003
      $region80: #{_lambda_.1} parent=75 // pred_fallthru
        _
    $region76: #{_lambda_.1} parent=5 // pred_fallthru
      _
  $region6: #{_lambda_.1} parent=0 // loop_footer
    %s22 = sadd.s32 1, %s18
  $region7: #{_lambda_.1} parent=0 // loop_footer_branch
    %17 = sbr.rel target = $region3
  $region8: #{_lambda_.1} parent=0 // loop_exit
    _

</llo_original>
